<compile_context>
chip_gen: v7x
topology: tpu7x:2x2x1
jax: 0.10.0
libtpu: 0.0.40
codegen_flags: <defaults>
</compile_context>

<pallas_src>
import functools

import jax
import jax.numpy as jnp
from jax.experimental import pallas as pl
from jax.experimental.pallas import tpu as pltpu

_W0 = 64      # input width
_C = 128      # channel count (lane width)
_NCLS = 2     # classes


def _round_up(x, m):
    return (x + m - 1) // m * m


# --------------------------------------------------------------------------
# Fused forward kernel: B samples per grid step, everything VMEM-resident.
# --------------------------------------------------------------------------
def _net_fwd_kernel(B,
                    x_ref, w1_ref, s1_ref, b1_ref,
                    w2_ref, s2_ref, b2_ref,
                    w3_ref, s3_ref, b3_ref,
                    wfc_ref, bfc_ref, o_ref):
    # x_ref : (B, 64)        dense input block (b on sublanes, w on lanes)
    # w1    : (64, 64*128)   banded conv1 weight (conv + channel broadcast)
    # w2,w3 : (3*128, 128)   im2col conv weights, row = kw*128 + cin
    # s*,b* : (1, 128)       folded BN scale/bias (conv bias + 1/4 pool folded in)
    # wfc   : (2, 128), bfc : (1, 2)
    # o_ref : (B, 2)
    f32 = jnp.float32

    # ---- layer 1: Conv2d(1->128) + BN + ReLU + AvgPool(1,4) -----------------
    # One MXU call: Y[b, w*128+c] = sum_win x[b, win] * w1[win, w*128+c]
    y = jnp.dot(x_ref[...], w1_ref[...], preferred_element_type=f32)  # (B, 8192)
    s1 = s1_ref[...]
    b1 = b1_ref[...]
    # BN + ReLU (1/4 pool scale already folded into s1/b1), then pool over the
    # 4 adjacent 128-lane chunks of each w' group.  Rows ordered w'-major:
    # row = w' * B + b  -> layer-2 im2col shifts are plain B-row shifts.
    chunks = []
    for wp in range(16):
        acc = None
        for j in range(4):
            col = (4 * wp + j) * _C
            z = jnp.maximum(y[:, col:col + _C] * s1 + b1, 0.0)
            acc = z if acc is None else acc + z
        chunks.append(acc)
    a = jnp.concatenate(chunks, axis=0)                         # (16B, 128)

    zB = jnp.zeros((B, _C), f32)

    # ---- layer 2: Conv2d(128->128) as three M=16B matmuls -------------------
    am = jnp.concatenate([zB, a[:-B]], axis=0)                  # a[w'-1], zero at w'==0
    ap = jnp.concatenate([a[B:], zB], axis=0)                   # a[w'+1], zero at w'==15
    y = (jnp.dot(am, w2_ref[0:_C], preferred_element_type=f32)
         + jnp.dot(a, w2_ref[_C:2 * _C], preferred_element_type=f32)
         + jnp.dot(ap, w2_ref[2 * _C:3 * _C], preferred_element_type=f32))
    y = jnp.maximum(y * s2_ref[...] + b2_ref[...], 0.0)         # (16B, 128)
    groups = []
    for wp in range(4):
        r = 4 * wp * B
        groups.append(y[r:r + B] + y[r + B:r + 2 * B]
                      + y[r + 2 * B:r + 3 * B] + y[r + 3 * B:r + 4 * B])
    a = jnp.concatenate(groups, axis=0)                         # (4B, 128)

    # ---- layer 3 -------------------------------------------------------------
    am = jnp.concatenate([zB, a[:-B]], axis=0)
    ap = jnp.concatenate([a[B:], zB], axis=0)
    y = (jnp.dot(am, w3_ref[0:_C], preferred_element_type=f32)
         + jnp.dot(a, w3_ref[_C:2 * _C], preferred_element_type=f32)
         + jnp.dot(ap, w3_ref[2 * _C:3 * _C], preferred_element_type=f32))
    y = jnp.maximum(y * s3_ref[...] + b3_ref[...], 0.0)         # (4B, 128)
    a = y[0:B] + y[B:2 * B] + y[2 * B:3 * B] + y[3 * B:4 * B]   # (B, 128)  (pooled)

    # ---- fc(128 -> 2) on VPU/XLU + softmax(dim=1) ----------------------------
    l0 = jnp.sum(a * wfc_ref[0:1, :], axis=1, keepdims=True)
    l1 = jnp.sum(a * wfc_ref[1:2, :], axis=1, keepdims=True)
    logits = jnp.concatenate([l0, l1], axis=1) + bfc_ref[...]   # (B, 2)
    m = jnp.max(logits, axis=1, keepdims=True)
    e = jnp.exp(logits - m)
    o_ref[...] = (e / jnp.sum(e, axis=1, keepdims=True)).astype(o_ref.dtype)


def _fused_forward(x, pp, block_b):
    """x: (Npad, 64) f32, Npad % block_b == 0; pp: prepared params dict."""
    npad = x.shape[0]
    kernel = functools.partial(_net_fwd_kernel, block_b)
    const = lambda n: (0, 0)
    return pl.pallas_call(
        kernel,
        out_shape=jax.ShapeDtypeStruct((npad, _NCLS), jnp.float32),
        grid=(npad // block_b,),
        in_specs=[
            pl.BlockSpec((block_b, _W0), lambda n: (n, 0)),     # x
            pl.BlockSpec((_W0, _W0 * _C), const),               # w1 (banded)
            pl.BlockSpec((1, _C), const),                       # s1
            pl.BlockSpec((1, _C), const),                       # b1
            pl.BlockSpec((3 * _C, _C), const),                  # w2
            pl.BlockSpec((1, _C), const),                       # s2
            pl.BlockSpec((1, _C), const),                       # b2
            pl.BlockSpec((3 * _C, _C), const),                  # w3
            pl.BlockSpec((1, _C), const),                       # s3
            pl.BlockSpec((1, _C), const),                       # b3
            pl.BlockSpec((_NCLS, _C), const),                   # wfc (2,128)
            pl.BlockSpec((1, _NCLS), const),                    # bfc
        ],
        out_specs=pl.BlockSpec((block_b, _NCLS), lambda n: (n, 0)),
        compiler_params=pltpu.CompilerParams(
            dimension_semantics=("parallel",),
            vmem_limit_bytes=48 * 1024 * 1024),
    )(x, pp["w1"], pp["s1"], pp["b1"],
      pp["w2"], pp["s2"], pp["b2"],
      pp["w3"], pp["s3"], pp["b3"],
      pp["wfc"], pp["bfc"])


# --------------------------------------------------------------------------
# Parameter construction (PyTorch layouts) + one-time weight preparation
# --------------------------------------------------------------------------
def init_params(key):
    ks = iter(jax.random.split(key, 32))
    p = {}
    cins = [1, _C, _C]
    for i, cin in enumerate(cins, start=1):
        p[f"conv{i}_w"] = 0.1 * jax.random.normal(next(ks), (_C, cin, 3, 3), jnp.float32)
        p[f"conv{i}_b"] = 0.1 * jax.random.normal(next(ks), (_C,), jnp.float32)
        p[f"bn{i}_g"] = 1.0 + 0.1 * jax.random.normal(next(ks), (_C,), jnp.float32)
        p[f"bn{i}_b"] = 0.1 * jax.random.normal(next(ks), (_C,), jnp.float32)
        p[f"bn{i}_m"] = 0.1 * jax.random.normal(next(ks), (_C,), jnp.float32)
        p[f"bn{i}_v"] = 0.5 + 0.5 * jnp.abs(jax.random.normal(next(ks), (_C,), jnp.float32))
    p["fc_w"] = 0.1 * jax.random.normal(next(ks), (_NCLS, _C), jnp.float32)   # (out, in)
    p["fc_b"] = 0.1 * jax.random.normal(next(ks), (_NCLS,), jnp.float32)
    return p


def prepare_params(p, eps=1e-5):
    """Fold BN (inference), conv bias and the 1/4 avg-pool scale; build weights."""
    def fold(i):
        s = p[f"bn{i}_g"] / jnp.sqrt(p[f"bn{i}_v"] + eps)
        b = p[f"bn{i}_b"] + s * (p[f"conv{i}_b"] - p[f"bn{i}_m"])
        # AvgPool2d((1,4)) 1/4 folded into the pre-ReLU affine (ReLU is
        # positively homogeneous, so relu(0.25*z) == 0.25*relu(z)).
        return (0.25 * s).reshape(1, _C).astype(jnp.float32), \
               (0.25 * b).reshape(1, _C).astype(jnp.float32)

    s1, b1 = fold(1)
    s2, b2 = fold(2)
    s3, b3 = fold(3)

    # Layer 1: banded (64, 64*128) weight doing conv + broadcast-to-128-channels,
    # with the W padding folded in (out-of-range taps are simply zero rows).
    w1row = jnp.transpose(p["conv1_w"][:, 0, 1, :], (1, 0))     # (3, 128): [kw, cout]
    win = jnp.arange(_W0)[:, None]
    w = jnp.arange(_W0)[None, :]
    k = win - w + 1                                             # tap index per (win, w)
    valid = (k >= 0) & (k <= 2)
    taps = jnp.take(w1row, jnp.clip(k, 0, 2), axis=0)           # (64, 64, 128)
    w1big = jnp.where(valid[:, :, None], taps, 0.0).reshape(_W0, _W0 * _C)

    # Layers 2/3: im2col weight (3*Cin, Cout), row index = kw*128 + cin, f32.
    def im2col_w(wconv):
        return jnp.transpose(wconv[:, :, 1, :], (2, 1, 0)).reshape(3 * _C, _C).astype(jnp.float32)

    return dict(w1=w1big.astype(jnp.float32), s1=s1, b1=b1,
                w2=im2col_w(p["conv2_w"]), s2=s2, b2=b2,
                w3=im2col_w(p["conv3_w"]), s3=s3, b3=b3,
                wfc=p["fc_w"].astype(jnp.float32),              # (2, 128), dense lanes
                bfc=p["fc_b"].reshape(1, _NCLS).astype(jnp.float32))


@jax.jit
def net_forward(x_nchw, pp):
    N, C, H, W = x_nchw.shape
    assert C == 1 and H == 1 and W == _W0
    x = x_nchw.reshape(N, _W0).astype(jnp.float32)              # dense (N, 64)
    block_b = min(128, _round_up(max(N, 1), 8))                 # B samples per grid step
    npad = _round_up(N, block_b)
    if npad != N:
        x = jnp.pad(x, ((0, npad - N), (0, 0)))                 # pad batch only
    return _fused_forward(x, pp, block_b)[:N]                   # (N, 2)


# --------------------------------------------------------------------------
# Pure-JAX reference (inference-mode BN), for correctness checking.
# --------------------------------------------------------------------------
def reference_forward(x_nchw, p, eps=1e-5):
    x = x_nchw.astype(jnp.float32)

    def layer(x, i):
        y = jax.lax.conv_general_dilated(
            x, p[f"conv{i}_w"], window_strides=(1, 1), padding=((1, 1), (1, 1)),
            dimension_numbers=("NCHW", "OIHW", "NCHW"))
        y = y + p[f"conv{i}_b"].reshape(1, -1, 1, 1)
        s = (p[f"bn{i}_g"] / jnp.sqrt(p[f"bn{i}_v"] + eps)).reshape(1, -1, 1, 1)
        y = (y - p[f"bn{i}_m"].reshape(1, -1, 1, 1)) * s + p[f"bn{i}_b"].reshape(1, -1, 1, 1)
        y = jnp.maximum(y, 0.0)
        n, c, h, w = y.shape
        return y.reshape(n, c, h, w // 4, 4).mean(axis=-1)      # AvgPool2d((1,4))

    y = layer(x, 1)
    y = layer(y, 2)
    y = layer(y, 3)
    y = y.reshape(-1, _C) @ p["fc_w"].T + p["fc_b"]
    return jax.nn.softmax(y, axis=1)


if __name__ == "__main__":
    key = jax.random.PRNGKey(0)
    kx, kp = jax.random.split(key)

    # PyTorch-convention input: NCHW = (batch=2, channels=1, H=1, W=64)
    x = jax.random.normal(kx, (2, 1, 1, _W0), jnp.float32)
    params = init_params(kp)
    prepped = prepare_params(params)

    y = net_forward(x, prepped)
    y = jax.block_until_ready(y)

    assert y.shape == (2, _NCLS)
    assert bool(jnp.all(jnp.isfinite(y)))
    assert bool(jnp.allclose(jnp.sum(y, axis=1), 1.0, atol=1e-5))

    # Compare against the plain-JAX reference (all-f32 pipeline).
    y_ref = reference_forward(x, params)
    assert bool(jnp.allclose(y, y_ref, atol=2e-2)), (y, y_ref)

    print("KERNEL_OK")
</pallas_src>

<mosaic_0001>
module attributes {stable_mosaic.version = 11 : i64} {
  func.func @_net_fwd_kernel(%arg0: i32, %arg1: memref<8x64xf32, #tpu.memory_space<vmem>>, %arg2: memref<64x8192xf32, #tpu.memory_space<vmem>>, %arg3: memref<1x128xf32, #tpu.memory_space<vmem>>, %arg4: memref<1x128xf32, #tpu.memory_space<vmem>>, %arg5: memref<384x128xf32, #tpu.memory_space<vmem>>, %arg6: memref<1x128xf32, #tpu.memory_space<vmem>>, %arg7: memref<1x128xf32, #tpu.memory_space<vmem>>, %arg8: memref<384x128xf32, #tpu.memory_space<vmem>>, %arg9: memref<1x128xf32, #tpu.memory_space<vmem>>, %arg10: memref<1x128xf32, #tpu.memory_space<vmem>>, %arg11: memref<2x128xf32, #tpu.memory_space<vmem>>, %arg12: memref<1x2xf32, #tpu.memory_space<vmem>>, %arg13: memref<8x2xf32, #tpu.memory_space<vmem>>) attributes {dimension_semantics = [#tpu.dimension_semantics<parallel>], iteration_bounds = array<i64: 1>, scalar_prefetch = 0 : i64, scratch_operands = 0 : i64, tpu.core_type = #tpu.core_type<tc>, window_params = [{transform_indices = @transform_0, window_bounds = array<i64: 8, 64>}, {pipeline_mode = #tpu.pipeline_mode<synchronous>, transform_indices = @transform_1, window_bounds = array<i64: 64, 8192>}, {pipeline_mode = #tpu.pipeline_mode<synchronous>, transform_indices = @transform_2, window_bounds = array<i64: 1, 128>}, {pipeline_mode = #tpu.pipeline_mode<synchronous>, transform_indices = @transform_3, window_bounds = array<i64: 1, 128>}, {pipeline_mode = #tpu.pipeline_mode<synchronous>, transform_indices = @transform_4, window_bounds = array<i64: 384, 128>}, {pipeline_mode = #tpu.pipeline_mode<synchronous>, transform_indices = @transform_5, window_bounds = array<i64: 1, 128>}, {pipeline_mode = #tpu.pipeline_mode<synchronous>, transform_indices = @transform_6, window_bounds = array<i64: 1, 128>}, {pipeline_mode = #tpu.pipeline_mode<synchronous>, transform_indices = @transform_7, window_bounds = array<i64: 384, 128>}, {pipeline_mode = #tpu.pipeline_mode<synchronous>, transform_indices = @transform_8, window_bounds = array<i64: 1, 128>}, {pipeline_mode = #tpu.pipeline_mode<synchronous>, transform_indices = @transform_9, window_bounds = array<i64: 1, 128>}, {pipeline_mode = #tpu.pipeline_mode<synchronous>, transform_indices = @transform_10, window_bounds = array<i64: 2, 128>}, {pipeline_mode = #tpu.pipeline_mode<synchronous>, transform_indices = @transform_11, window_bounds = array<i64: 1, 2>}, {transform_indices = @transform_12, window_bounds = array<i64: 8, 2>}]} {
    %c0 = arith.constant 0 : index
    %c0_0 = arith.constant 0 : index
    %0 = vector.load %arg1[%c0, %c0_0] : memref<8x64xf32, #tpu.memory_space<vmem>>, vector<8x64xf32>
    %c0_1 = arith.constant 0 : index
    %c0_2 = arith.constant 0 : index
    %1 = vector.load %arg2[%c0_1, %c0_2] : memref<64x8192xf32, #tpu.memory_space<vmem>>, vector<64x8192xf32>
    %cst = arith.constant dense<0.000000e+00> : vector<8x8192xf32>
    %2 = tpu.matmul %0, %1, %cst {dimension_numbers = #tpu.dot_dimension_numbers<[1], [0], [0], [1], [0, 0, 1, 1], [], []>} : vector<8x64xf32>, vector<64x8192xf32>, vector<8x8192xf32> -> vector<8x8192xf32>
    %c0_3 = arith.constant 0 : index
    %c0_4 = arith.constant 0 : index
    %3 = vector.load %arg3[%c0_3, %c0_4] : memref<1x128xf32, #tpu.memory_space<vmem>>, vector<1x128xf32>
    %c0_5 = arith.constant 0 : index
    %c0_6 = arith.constant 0 : index
    %4 = vector.load %arg4[%c0_5, %c0_6] : memref<1x128xf32, #tpu.memory_space<vmem>>, vector<1x128xf32>
    %5 = vector.extract_strided_slice %2 {offsets = [0, 0], sizes = [8, 128], strides = [1, 1]} : vector<8x8192xf32> to vector<8x128xf32>
    %6 = vector.broadcast %3 : vector<1x128xf32> to vector<8x128xf32>
    %7 = arith.mulf %5, %6 : vector<8x128xf32>
    %8 = vector.broadcast %4 : vector<1x128xf32> to vector<8x128xf32>
    %9 = arith.addf %7, %8 : vector<8x128xf32>
    %cst_7 = arith.constant 0.000000e+00 : f32
    %10 = vector.broadcast %cst_7 : f32 to vector<8x128xf32>
    %11 = arith.maximumf %9, %10 : vector<8x128xf32>
    %12 = vector.extract_strided_slice %2 {offsets = [0, 128], sizes = [8, 128], strides = [1, 1]} : vector<8x8192xf32> to vector<8x128xf32>
    %13 = vector.broadcast %3 : vector<1x128xf32> to vector<8x128xf32>
    %14 = arith.mulf %12, %13 : vector<8x128xf32>
    %15 = vector.broadcast %4 : vector<1x128xf32> to vector<8x128xf32>
    %16 = arith.addf %14, %15 : vector<8x128xf32>
    %cst_8 = arith.constant 0.000000e+00 : f32
    %17 = vector.broadcast %cst_8 : f32 to vector<8x128xf32>
    %18 = arith.maximumf %16, %17 : vector<8x128xf32>
    %19 = arith.addf %11, %18 : vector<8x128xf32>
    %20 = vector.extract_strided_slice %2 {offsets = [0, 256], sizes = [8, 128], strides = [1, 1]} : vector<8x8192xf32> to vector<8x128xf32>
    %21 = vector.broadcast %3 : vector<1x128xf32> to vector<8x128xf32>
    %22 = arith.mulf %20, %21 : vector<8x128xf32>
    %23 = vector.broadcast %4 : vector<1x128xf32> to vector<8x128xf32>
    %24 = arith.addf %22, %23 : vector<8x128xf32>
    %cst_9 = arith.constant 0.000000e+00 : f32
    %25 = vector.broadcast %cst_9 : f32 to vector<8x128xf32>
    %26 = arith.maximumf %24, %25 : vector<8x128xf32>
    %27 = arith.addf %19, %26 : vector<8x128xf32>
    %28 = vector.extract_strided_slice %2 {offsets = [0, 384], sizes = [8, 128], strides = [1, 1]} : vector<8x8192xf32> to vector<8x128xf32>
    %29 = vector.broadcast %3 : vector<1x128xf32> to vector<8x128xf32>
    %30 = arith.mulf %28, %29 : vector<8x128xf32>
    %31 = vector.broadcast %4 : vector<1x128xf32> to vector<8x128xf32>
    %32 = arith.addf %30, %31 : vector<8x128xf32>
    %cst_10 = arith.constant 0.000000e+00 : f32
    %33 = vector.broadcast %cst_10 : f32 to vector<8x128xf32>
    %34 = arith.maximumf %32, %33 : vector<8x128xf32>
    %35 = arith.addf %27, %34 : vector<8x128xf32>
    %36 = vector.extract_strided_slice %2 {offsets = [0, 512], sizes = [8, 128], strides = [1, 1]} : vector<8x8192xf32> to vector<8x128xf32>
    %37 = vector.broadcast %3 : vector<1x128xf32> to vector<8x128xf32>
    %38 = arith.mulf %36, %37 : vector<8x128xf32>
    %39 = vector.broadcast %4 : vector<1x128xf32> to vector<8x128xf32>
    %40 = arith.addf %38, %39 : vector<8x128xf32>
    %cst_11 = arith.constant 0.000000e+00 : f32
    %41 = vector.broadcast %cst_11 : f32 to vector<8x128xf32>
    %42 = arith.maximumf %40, %41 : vector<8x128xf32>
    %43 = vector.extract_strided_slice %2 {offsets = [0, 640], sizes = [8, 128], strides = [1, 1]} : vector<8x8192xf32> to vector<8x128xf32>
    %44 = vector.broadcast %3 : vector<1x128xf32> to vector<8x128xf32>
    %45 = arith.mulf %43, %44 : vector<8x128xf32>
    %46 = vector.broadcast %4 : vector<1x128xf32> to vector<8x128xf32>
    %47 = arith.addf %45, %46 : vector<8x128xf32>
    %cst_12 = arith.constant 0.000000e+00 : f32
    %48 = vector.broadcast %cst_12 : f32 to vector<8x128xf32>
    %49 = arith.maximumf %47, %48 : vector<8x128xf32>
    %50 = arith.addf %42, %49 : vector<8x128xf32>
    %51 = vector.extract_strided_slice %2 {offsets = [0, 768], sizes = [8, 128], strides = [1, 1]} : vector<8x8192xf32> to vector<8x128xf32>
    %52 = vector.broadcast %3 : vector<1x128xf32> to vector<8x128xf32>
    %53 = arith.mulf %51, %52 : vector<8x128xf32>
    %54 = vector.broadcast %4 : vector<1x128xf32> to vector<8x128xf32>
    %55 = arith.addf %53, %54 : vector<8x128xf32>
    %cst_13 = arith.constant 0.000000e+00 : f32
    %56 = vector.broadcast %cst_13 : f32 to vector<8x128xf32>
    %57 = arith.maximumf %55, %56 : vector<8x128xf32>
    %58 = arith.addf %50, %57 : vector<8x128xf32>
    %59 = vector.extract_strided_slice %2 {offsets = [0, 896], sizes = [8, 128], strides = [1, 1]} : vector<8x8192xf32> to vector<8x128xf32>
    %60 = vector.broadcast %3 : vector<1x128xf32> to vector<8x128xf32>
    %61 = arith.mulf %59, %60 : vector<8x128xf32>
    %62 = vector.broadcast %4 : vector<1x128xf32> to vector<8x128xf32>
    %63 = arith.addf %61, %62 : vector<8x128xf32>
    %cst_14 = arith.constant 0.000000e+00 : f32
    %64 = vector.broadcast %cst_14 : f32 to vector<8x128xf32>
    %65 = arith.maximumf %63, %64 : vector<8x128xf32>
    %66 = arith.addf %58, %65 : vector<8x128xf32>
    %67 = vector.extract_strided_slice %2 {offsets = [0, 1024], sizes = [8, 128], strides = [1, 1]} : vector<8x8192xf32> to vector<8x128xf32>
    %68 = vector.broadcast %3 : vector<1x128xf32> to vector<8x128xf32>
    %69 = arith.mulf %67, %68 : vector<8x128xf32>
    %70 = vector.broadcast %4 : vector<1x128xf32> to vector<8x128xf32>
    %71 = arith.addf %69, %70 : vector<8x128xf32>
    %cst_15 = arith.constant 0.000000e+00 : f32
    %72 = vector.broadcast %cst_15 : f32 to vector<8x128xf32>
    %73 = arith.maximumf %71, %72 : vector<8x128xf32>
    %74 = vector.extract_strided_slice %2 {offsets = [0, 1152], sizes = [8, 128], strides = [1, 1]} : vector<8x8192xf32> to vector<8x128xf32>
    %75 = vector.broadcast %3 : vector<1x128xf32> to vector<8x128xf32>
    %76 = arith.mulf %74, %75 : vector<8x128xf32>
    %77 = vector.broadcast %4 : vector<1x128xf32> to vector<8x128xf32>
    %78 = arith.addf %76, %77 : vector<8x128xf32>
    %cst_16 = arith.constant 0.000000e+00 : f32
    %79 = vector.broadcast %cst_16 : f32 to vector<8x128xf32>
    %80 = arith.maximumf %78, %79 : vector<8x128xf32>
    %81 = arith.addf %73, %80 : vector<8x128xf32>
    %82 = vector.extract_strided_slice %2 {offsets = [0, 1280], sizes = [8, 128], strides = [1, 1]} : vector<8x8192xf32> to vector<8x128xf32>
    %83 = vector.broadcast %3 : vector<1x128xf32> to vector<8x128xf32>
    %84 = arith.mulf %82, %83 : vector<8x128xf32>
    %85 = vector.broadcast %4 : vector<1x128xf32> to vector<8x128xf32>
    %86 = arith.addf %84, %85 : vector<8x128xf32>
    %cst_17 = arith.constant 0.000000e+00 : f32
    %87 = vector.broadcast %cst_17 : f32 to vector<8x128xf32>
    %88 = arith.maximumf %86, %87 : vector<8x128xf32>
    %89 = arith.addf %81, %88 : vector<8x128xf32>
    %90 = vector.extract_strided_slice %2 {offsets = [0, 1408], sizes = [8, 128], strides = [1, 1]} : vector<8x8192xf32> to vector<8x128xf32>
    %91 = vector.broadcast %3 : vector<1x128xf32> to vector<8x128xf32>
    %92 = arith.mulf %90, %91 : vector<8x128xf32>
    %93 = vector.broadcast %4 : vector<1x128xf32> to vector<8x128xf32>
    %94 = arith.addf %92, %93 : vector<8x128xf32>
    %cst_18 = arith.constant 0.000000e+00 : f32
    %95 = vector.broadcast %cst_18 : f32 to vector<8x128xf32>
    %96 = arith.maximumf %94, %95 : vector<8x128xf32>
    %97 = arith.addf %89, %96 : vector<8x128xf32>
    %98 = vector.extract_strided_slice %2 {offsets = [0, 1536], sizes = [8, 128], strides = [1, 1]} : vector<8x8192xf32> to vector<8x128xf32>
    %99 = vector.broadcast %3 : vector<1x128xf32> to vector<8x128xf32>
    %100 = arith.mulf %98, %99 : vector<8x128xf32>
    %101 = vector.broadcast %4 : vector<1x128xf32> to vector<8x128xf32>
    %102 = arith.addf %100, %101 : vector<8x128xf32>
    %cst_19 = arith.constant 0.000000e+00 : f32
    %103 = vector.broadcast %cst_19 : f32 to vector<8x128xf32>
    %104 = arith.maximumf %102, %103 : vector<8x128xf32>
    %105 = vector.extract_strided_slice %2 {offsets = [0, 1664], sizes = [8, 128], strides = [1, 1]} : vector<8x8192xf32> to vector<8x128xf32>
    %106 = vector.broadcast %3 : vector<1x128xf32> to vector<8x128xf32>
    %107 = arith.mulf %105, %106 : vector<8x128xf32>
    %108 = vector.broadcast %4 : vector<1x128xf32> to vector<8x128xf32>
    %109 = arith.addf %107, %108 : vector<8x128xf32>
    %cst_20 = arith.constant 0.000000e+00 : f32
    %110 = vector.broadcast %cst_20 : f32 to vector<8x128xf32>
    %111 = arith.maximumf %109, %110 : vector<8x128xf32>
    %112 = arith.addf %104, %111 : vector<8x128xf32>
    %113 = vector.extract_strided_slice %2 {offsets = [0, 1792], sizes = [8, 128], strides = [1, 1]} : vector<8x8192xf32> to vector<8x128xf32>
    %114 = vector.broadcast %3 : vector<1x128xf32> to vector<8x128xf32>
    %115 = arith.mulf %113, %114 : vector<8x128xf32>
    %116 = vector.broadcast %4 : vector<1x128xf32> to vector<8x128xf32>
    %117 = arith.addf %115, %116 : vector<8x128xf32>
    %cst_21 = arith.constant 0.000000e+00 : f32
    %118 = vector.broadcast %cst_21 : f32 to vector<8x128xf32>
    %119 = arith.maximumf %117, %118 : vector<8x128xf32>
    %120 = arith.addf %112, %119 : vector<8x128xf32>
    %121 = vector.extract_strided_slice %2 {offsets = [0, 1920], sizes = [8, 128], strides = [1, 1]} : vector<8x8192xf32> to vector<8x128xf32>
    %122 = vector.broadcast %3 : vector<1x128xf32> to vector<8x128xf32>
    %123 = arith.mulf %121, %122 : vector<8x128xf32>
    %124 = vector.broadcast %4 : vector<1x128xf32> to vector<8x128xf32>
    %125 = arith.addf %123, %124 : vector<8x128xf32>
    %cst_22 = arith.constant 0.000000e+00 : f32
    %126 = vector.broadcast %cst_22 : f32 to vector<8x128xf32>
    %127 = arith.maximumf %125, %126 : vector<8x128xf32>
    %128 = arith.addf %120, %127 : vector<8x128xf32>
    %129 = vector.extract_strided_slice %2 {offsets = [0, 2048], sizes = [8, 128], strides = [1, 1]} : vector<8x8192xf32> to vector<8x128xf32>
    %130 = vector.broadcast %3 : vector<1x128xf32> to vector<8x128xf32>
    %131 = arith.mulf %129, %130 : vector<8x128xf32>
    %132 = vector.broadcast %4 : vector<1x128xf32> to vector<8x128xf32>
    %133 = arith.addf %131, %132 : vector<8x128xf32>
    %cst_23 = arith.constant 0.000000e+00 : f32
    %134 = vector.broadcast %cst_23 : f32 to vector<8x128xf32>
    %135 = arith.maximumf %133, %134 : vector<8x128xf32>
    %136 = vector.extract_strided_slice %2 {offsets = [0, 2176], sizes = [8, 128], strides = [1, 1]} : vector<8x8192xf32> to vector<8x128xf32>
    %137 = vector.broadcast %3 : vector<1x128xf32> to vector<8x128xf32>
    %138 = arith.mulf %136, %137 : vector<8x128xf32>
    %139 = vector.broadcast %4 : vector<1x128xf32> to vector<8x128xf32>
    %140 = arith.addf %138, %139 : vector<8x128xf32>
    %cst_24 = arith.constant 0.000000e+00 : f32
    %141 = vector.broadcast %cst_24 : f32 to vector<8x128xf32>
    %142 = arith.maximumf %140, %141 : vector<8x128xf32>
    %143 = arith.addf %135, %142 : vector<8x128xf32>
    %144 = vector.extract_strided_slice %2 {offsets = [0, 2304], sizes = [8, 128], strides = [1, 1]} : vector<8x8192xf32> to vector<8x128xf32>
    %145 = vector.broadcast %3 : vector<1x128xf32> to vector<8x128xf32>
    %146 = arith.mulf %144, %145 : vector<8x128xf32>
    %147 = vector.broadcast %4 : vector<1x128xf32> to vector<8x128xf32>
    %148 = arith.addf %146, %147 : vector<8x128xf32>
    %cst_25 = arith.constant 0.000000e+00 : f32
    %149 = vector.broadcast %cst_25 : f32 to vector<8x128xf32>
    %150 = arith.maximumf %148, %149 : vector<8x128xf32>
    %151 = arith.addf %143, %150 : vector<8x128xf32>
    %152 = vector.extract_strided_slice %2 {offsets = [0, 2432], sizes = [8, 128], strides = [1, 1]} : vector<8x8192xf32> to vector<8x128xf32>
    %153 = vector.broadcast %3 : vector<1x128xf32> to vector<8x128xf32>
    %154 = arith.mulf %152, %153 : vector<8x128xf32>
    %155 = vector.broadcast %4 : vector<1x128xf32> to vector<8x128xf32>
    %156 = arith.addf %154, %155 : vector<8x128xf32>
    %cst_26 = arith.constant 0.000000e+00 : f32
    %157 = vector.broadcast %cst_26 : f32 to vector<8x128xf32>
    %158 = arith.maximumf %156, %157 : vector<8x128xf32>
    %159 = arith.addf %151, %158 : vector<8x128xf32>
    %160 = vector.extract_strided_slice %2 {offsets = [0, 2560], sizes = [8, 128], strides = [1, 1]} : vector<8x8192xf32> to vector<8x128xf32>
    %161 = vector.broadcast %3 : vector<1x128xf32> to vector<8x128xf32>
    %162 = arith.mulf %160, %161 : vector<8x128xf32>
    %163 = vector.broadcast %4 : vector<1x128xf32> to vector<8x128xf32>
    %164 = arith.addf %162, %163 : vector<8x128xf32>
    %cst_27 = arith.constant 0.000000e+00 : f32
    %165 = vector.broadcast %cst_27 : f32 to vector<8x128xf32>
    %166 = arith.maximumf %164, %165 : vector<8x128xf32>
    %167 = vector.extract_strided_slice %2 {offsets = [0, 2688], sizes = [8, 128], strides = [1, 1]} : vector<8x8192xf32> to vector<8x128xf32>
    %168 = vector.broadcast %3 : vector<1x128xf32> to vector<8x128xf32>
    %169 = arith.mulf %167, %168 : vector<8x128xf32>
    %170 = vector.broadcast %4 : vector<1x128xf32> to vector<8x128xf32>
    %171 = arith.addf %169, %170 : vector<8x128xf32>
    %cst_28 = arith.constant 0.000000e+00 : f32
    %172 = vector.broadcast %cst_28 : f32 to vector<8x128xf32>
    %173 = arith.maximumf %171, %172 : vector<8x128xf32>
    %174 = arith.addf %166, %173 : vector<8x128xf32>
    %175 = vector.extract_strided_slice %2 {offsets = [0, 2816], sizes = [8, 128], strides = [1, 1]} : vector<8x8192xf32> to vector<8x128xf32>
    %176 = vector.broadcast %3 : vector<1x128xf32> to vector<8x128xf32>
    %177 = arith.mulf %175, %176 : vector<8x128xf32>
    %178 = vector.broadcast %4 : vector<1x128xf32> to vector<8x128xf32>
    %179 = arith.addf %177, %178 : vector<8x128xf32>
    %cst_29 = arith.constant 0.000000e+00 : f32
    %180 = vector.broadcast %cst_29 : f32 to vector<8x128xf32>
    %181 = arith.maximumf %179, %180 : vector<8x128xf32>
    %182 = arith.addf %174, %181 : vector<8x128xf32>
    %183 = vector.extract_strided_slice %2 {offsets = [0, 2944], sizes = [8, 128], strides = [1, 1]} : vector<8x8192xf32> to vector<8x128xf32>
    %184 = vector.broadcast %3 : vector<1x128xf32> to vector<8x128xf32>
    %185 = arith.mulf %183, %184 : vector<8x128xf32>
    %186 = vector.broadcast %4 : vector<1x128xf32> to vector<8x128xf32>
    %187 = arith.addf %185, %186 : vector<8x128xf32>
    %cst_30 = arith.constant 0.000000e+00 : f32
    %188 = vector.broadcast %cst_30 : f32 to vector<8x128xf32>
    %189 = arith.maximumf %187, %188 : vector<8x128xf32>
    %190 = arith.addf %182, %189 : vector<8x128xf32>
    %191 = vector.extract_strided_slice %2 {offsets = [0, 3072], sizes = [8, 128], strides = [1, 1]} : vector<8x8192xf32> to vector<8x128xf32>
    %192 = vector.broadcast %3 : vector<1x128xf32> to vector<8x128xf32>
    %193 = arith.mulf %191, %192 : vector<8x128xf32>
    %194 = vector.broadcast %4 : vector<1x128xf32> to vector<8x128xf32>
    %195 = arith.addf %193, %194 : vector<8x128xf32>
    %cst_31 = arith.constant 0.000000e+00 : f32
    %196 = vector.broadcast %cst_31 : f32 to vector<8x128xf32>
    %197 = arith.maximumf %195, %196 : vector<8x128xf32>
    %198 = vector.extract_strided_slice %2 {offsets = [0, 3200], sizes = [8, 128], strides = [1, 1]} : vector<8x8192xf32> to vector<8x128xf32>
    %199 = vector.broadcast %3 : vector<1x128xf32> to vector<8x128xf32>
    %200 = arith.mulf %198, %199 : vector<8x128xf32>
    %201 = vector.broadcast %4 : vector<1x128xf32> to vector<8x128xf32>
    %202 = arith.addf %200, %201 : vector<8x128xf32>
    %cst_32 = arith.constant 0.000000e+00 : f32
    %203 = vector.broadcast %cst_32 : f32 to vector<8x128xf32>
    %204 = arith.maximumf %202, %203 : vector<8x128xf32>
    %205 = arith.addf %197, %204 : vector<8x128xf32>
    %206 = vector.extract_strided_slice %2 {offsets = [0, 3328], sizes = [8, 128], strides = [1, 1]} : vector<8x8192xf32> to vector<8x128xf32>
    %207 = vector.broadcast %3 : vector<1x128xf32> to vector<8x128xf32>
    %208 = arith.mulf %206, %207 : vector<8x128xf32>
    %209 = vector.broadcast %4 : vector<1x128xf32> to vector<8x128xf32>
    %210 = arith.addf %208, %209 : vector<8x128xf32>
    %cst_33 = arith.constant 0.000000e+00 : f32
    %211 = vector.broadcast %cst_33 : f32 to vector<8x128xf32>
    %212 = arith.maximumf %210, %211 : vector<8x128xf32>
    %213 = arith.addf %205, %212 : vector<8x128xf32>
    %214 = vector.extract_strided_slice %2 {offsets = [0, 3456], sizes = [8, 128], strides = [1, 1]} : vector<8x8192xf32> to vector<8x128xf32>
    %215 = vector.broadcast %3 : vector<1x128xf32> to vector<8x128xf32>
    %216 = arith.mulf %214, %215 : vector<8x128xf32>
    %217 = vector.broadcast %4 : vector<1x128xf32> to vector<8x128xf32>
    %218 = arith.addf %216, %217 : vector<8x128xf32>
    %cst_34 = arith.constant 0.000000e+00 : f32
    %219 = vector.broadcast %cst_34 : f32 to vector<8x128xf32>
    %220 = arith.maximumf %218, %219 : vector<8x128xf32>
    %221 = arith.addf %213, %220 : vector<8x128xf32>
    %222 = vector.extract_strided_slice %2 {offsets = [0, 3584], sizes = [8, 128], strides = [1, 1]} : vector<8x8192xf32> to vector<8x128xf32>
    %223 = vector.broadcast %3 : vector<1x128xf32> to vector<8x128xf32>
    %224 = arith.mulf %222, %223 : vector<8x128xf32>
    %225 = vector.broadcast %4 : vector<1x128xf32> to vector<8x128xf32>
    %226 = arith.addf %224, %225 : vector<8x128xf32>
    %cst_35 = arith.constant 0.000000e+00 : f32
    %227 = vector.broadcast %cst_35 : f32 to vector<8x128xf32>
    %228 = arith.maximumf %226, %227 : vector<8x128xf32>
    %229 = vector.extract_strided_slice %2 {offsets = [0, 3712], sizes = [8, 128], strides = [1, 1]} : vector<8x8192xf32> to vector<8x128xf32>
    %230 = vector.broadcast %3 : vector<1x128xf32> to vector<8x128xf32>
    %231 = arith.mulf %229, %230 : vector<8x128xf32>
    %232 = vector.broadcast %4 : vector<1x128xf32> to vector<8x128xf32>
    %233 = arith.addf %231, %232 : vector<8x128xf32>
    %cst_36 = arith.constant 0.000000e+00 : f32
    %234 = vector.broadcast %cst_36 : f32 to vector<8x128xf32>
    %235 = arith.maximumf %233, %234 : vector<8x128xf32>
    %236 = arith.addf %228, %235 : vector<8x128xf32>
    %237 = vector.extract_strided_slice %2 {offsets = [0, 3840], sizes = [8, 128], strides = [1, 1]} : vector<8x8192xf32> to vector<8x128xf32>
    %238 = vector.broadcast %3 : vector<1x128xf32> to vector<8x128xf32>
    %239 = arith.mulf %237, %238 : vector<8x128xf32>
    %240 = vector.broadcast %4 : vector<1x128xf32> to vector<8x128xf32>
    %241 = arith.addf %239, %240 : vector<8x128xf32>
    %cst_37 = arith.constant 0.000000e+00 : f32
    %242 = vector.broadcast %cst_37 : f32 to vector<8x128xf32>
    %243 = arith.maximumf %241, %242 : vector<8x128xf32>
    %244 = arith.addf %236, %243 : vector<8x128xf32>
    %245 = vector.extract_strided_slice %2 {offsets = [0, 3968], sizes = [8, 128], strides = [1, 1]} : vector<8x8192xf32> to vector<8x128xf32>
    %246 = vector.broadcast %3 : vector<1x128xf32> to vector<8x128xf32>
    %247 = arith.mulf %245, %246 : vector<8x128xf32>
    %248 = vector.broadcast %4 : vector<1x128xf32> to vector<8x128xf32>
    %249 = arith.addf %247, %248 : vector<8x128xf32>
    %cst_38 = arith.constant 0.000000e+00 : f32
    %250 = vector.broadcast %cst_38 : f32 to vector<8x128xf32>
    %251 = arith.maximumf %249, %250 : vector<8x128xf32>
    %252 = arith.addf %244, %251 : vector<8x128xf32>
    %253 = vector.extract_strided_slice %2 {offsets = [0, 4096], sizes = [8, 128], strides = [1, 1]} : vector<8x8192xf32> to vector<8x128xf32>
    %254 = vector.broadcast %3 : vector<1x128xf32> to vector<8x128xf32>
    %255 = arith.mulf %253, %254 : vector<8x128xf32>
    %256 = vector.broadcast %4 : vector<1x128xf32> to vector<8x128xf32>
    %257 = arith.addf %255, %256 : vector<8x128xf32>
    %cst_39 = arith.constant 0.000000e+00 : f32
    %258 = vector.broadcast %cst_39 : f32 to vector<8x128xf32>
    %259 = arith.maximumf %257, %258 : vector<8x128xf32>
    %260 = vector.extract_strided_slice %2 {offsets = [0, 4224], sizes = [8, 128], strides = [1, 1]} : vector<8x8192xf32> to vector<8x128xf32>
    %261 = vector.broadcast %3 : vector<1x128xf32> to vector<8x128xf32>
    %262 = arith.mulf %260, %261 : vector<8x128xf32>
    %263 = vector.broadcast %4 : vector<1x128xf32> to vector<8x128xf32>
    %264 = arith.addf %262, %263 : vector<8x128xf32>
    %cst_40 = arith.constant 0.000000e+00 : f32
    %265 = vector.broadcast %cst_40 : f32 to vector<8x128xf32>
    %266 = arith.maximumf %264, %265 : vector<8x128xf32>
    %267 = arith.addf %259, %266 : vector<8x128xf32>
    %268 = vector.extract_strided_slice %2 {offsets = [0, 4352], sizes = [8, 128], strides = [1, 1]} : vector<8x8192xf32> to vector<8x128xf32>
    %269 = vector.broadcast %3 : vector<1x128xf32> to vector<8x128xf32>
    %270 = arith.mulf %268, %269 : vector<8x128xf32>
    %271 = vector.broadcast %4 : vector<1x128xf32> to vector<8x128xf32>
    %272 = arith.addf %270, %271 : vector<8x128xf32>
    %cst_41 = arith.constant 0.000000e+00 : f32
    %273 = vector.broadcast %cst_41 : f32 to vector<8x128xf32>
    %274 = arith.maximumf %272, %273 : vector<8x128xf32>
    %275 = arith.addf %267, %274 : vector<8x128xf32>
    %276 = vector.extract_strided_slice %2 {offsets = [0, 4480], sizes = [8, 128], strides = [1, 1]} : vector<8x8192xf32> to vector<8x128xf32>
    %277 = vector.broadcast %3 : vector<1x128xf32> to vector<8x128xf32>
    %278 = arith.mulf %276, %277 : vector<8x128xf32>
    %279 = vector.broadcast %4 : vector<1x128xf32> to vector<8x128xf32>
    %280 = arith.addf %278, %279 : vector<8x128xf32>
    %cst_42 = arith.constant 0.000000e+00 : f32
    %281 = vector.broadcast %cst_42 : f32 to vector<8x128xf32>
    %282 = arith.maximumf %280, %281 : vector<8x128xf32>
    %283 = arith.addf %275, %282 : vector<8x128xf32>
    %284 = vector.extract_strided_slice %2 {offsets = [0, 4608], sizes = [8, 128], strides = [1, 1]} : vector<8x8192xf32> to vector<8x128xf32>
    %285 = vector.broadcast %3 : vector<1x128xf32> to vector<8x128xf32>
    %286 = arith.mulf %284, %285 : vector<8x128xf32>
    %287 = vector.broadcast %4 : vector<1x128xf32> to vector<8x128xf32>
    %288 = arith.addf %286, %287 : vector<8x128xf32>
    %cst_43 = arith.constant 0.000000e+00 : f32
    %289 = vector.broadcast %cst_43 : f32 to vector<8x128xf32>
    %290 = arith.maximumf %288, %289 : vector<8x128xf32>
    %291 = vector.extract_strided_slice %2 {offsets = [0, 4736], sizes = [8, 128], strides = [1, 1]} : vector<8x8192xf32> to vector<8x128xf32>
    %292 = vector.broadcast %3 : vector<1x128xf32> to vector<8x128xf32>
    %293 = arith.mulf %291, %292 : vector<8x128xf32>
    %294 = vector.broadcast %4 : vector<1x128xf32> to vector<8x128xf32>
    %295 = arith.addf %293, %294 : vector<8x128xf32>
    %cst_44 = arith.constant 0.000000e+00 : f32
    %296 = vector.broadcast %cst_44 : f32 to vector<8x128xf32>
    %297 = arith.maximumf %295, %296 : vector<8x128xf32>
    %298 = arith.addf %290, %297 : vector<8x128xf32>
    %299 = vector.extract_strided_slice %2 {offsets = [0, 4864], sizes = [8, 128], strides = [1, 1]} : vector<8x8192xf32> to vector<8x128xf32>
    %300 = vector.broadcast %3 : vector<1x128xf32> to vector<8x128xf32>
    %301 = arith.mulf %299, %300 : vector<8x128xf32>
    %302 = vector.broadcast %4 : vector<1x128xf32> to vector<8x128xf32>
    %303 = arith.addf %301, %302 : vector<8x128xf32>
    %cst_45 = arith.constant 0.000000e+00 : f32
    %304 = vector.broadcast %cst_45 : f32 to vector<8x128xf32>
    %305 = arith.maximumf %303, %304 : vector<8x128xf32>
    %306 = arith.addf %298, %305 : vector<8x128xf32>
    %307 = vector.extract_strided_slice %2 {offsets = [0, 4992], sizes = [8, 128], strides = [1, 1]} : vector<8x8192xf32> to vector<8x128xf32>
    %308 = vector.broadcast %3 : vector<1x128xf32> to vector<8x128xf32>
    %309 = arith.mulf %307, %308 : vector<8x128xf32>
    %310 = vector.broadcast %4 : vector<1x128xf32> to vector<8x128xf32>
    %311 = arith.addf %309, %310 : vector<8x128xf32>
    %cst_46 = arith.constant 0.000000e+00 : f32
    %312 = vector.broadcast %cst_46 : f32 to vector<8x128xf32>
    %313 = arith.maximumf %311, %312 : vector<8x128xf32>
    %314 = arith.addf %306, %313 : vector<8x128xf32>
    %315 = vector.extract_strided_slice %2 {offsets = [0, 5120], sizes = [8, 128], strides = [1, 1]} : vector<8x8192xf32> to vector<8x128xf32>
    %316 = vector.broadcast %3 : vector<1x128xf32> to vector<8x128xf32>
    %317 = arith.mulf %315, %316 : vector<8x128xf32>
    %318 = vector.broadcast %4 : vector<1x128xf32> to vector<8x128xf32>
    %319 = arith.addf %317, %318 : vector<8x128xf32>
    %cst_47 = arith.constant 0.000000e+00 : f32
    %320 = vector.broadcast %cst_47 : f32 to vector<8x128xf32>
    %321 = arith.maximumf %319, %320 : vector<8x128xf32>
    %322 = vector.extract_strided_slice %2 {offsets = [0, 5248], sizes = [8, 128], strides = [1, 1]} : vector<8x8192xf32> to vector<8x128xf32>
    %323 = vector.broadcast %3 : vector<1x128xf32> to vector<8x128xf32>
    %324 = arith.mulf %322, %323 : vector<8x128xf32>
    %325 = vector.broadcast %4 : vector<1x128xf32> to vector<8x128xf32>
    %326 = arith.addf %324, %325 : vector<8x128xf32>
    %cst_48 = arith.constant 0.000000e+00 : f32
    %327 = vector.broadcast %cst_48 : f32 to vector<8x128xf32>
    %328 = arith.maximumf %326, %327 : vector<8x128xf32>
    %329 = arith.addf %321, %328 : vector<8x128xf32>
    %330 = vector.extract_strided_slice %2 {offsets = [0, 5376], sizes = [8, 128], strides = [1, 1]} : vector<8x8192xf32> to vector<8x128xf32>
    %331 = vector.broadcast %3 : vector<1x128xf32> to vector<8x128xf32>
    %332 = arith.mulf %330, %331 : vector<8x128xf32>
    %333 = vector.broadcast %4 : vector<1x128xf32> to vector<8x128xf32>
    %334 = arith.addf %332, %333 : vector<8x128xf32>
    %cst_49 = arith.constant 0.000000e+00 : f32
    %335 = vector.broadcast %cst_49 : f32 to vector<8x128xf32>
    %336 = arith.maximumf %334, %335 : vector<8x128xf32>
    %337 = arith.addf %329, %336 : vector<8x128xf32>
    %338 = vector.extract_strided_slice %2 {offsets = [0, 5504], sizes = [8, 128], strides = [1, 1]} : vector<8x8192xf32> to vector<8x128xf32>
    %339 = vector.broadcast %3 : vector<1x128xf32> to vector<8x128xf32>
    %340 = arith.mulf %338, %339 : vector<8x128xf32>
    %341 = vector.broadcast %4 : vector<1x128xf32> to vector<8x128xf32>
    %342 = arith.addf %340, %341 : vector<8x128xf32>
    %cst_50 = arith.constant 0.000000e+00 : f32
    %343 = vector.broadcast %cst_50 : f32 to vector<8x128xf32>
    %344 = arith.maximumf %342, %343 : vector<8x128xf32>
    %345 = arith.addf %337, %344 : vector<8x128xf32>
    %346 = vector.extract_strided_slice %2 {offsets = [0, 5632], sizes = [8, 128], strides = [1, 1]} : vector<8x8192xf32> to vector<8x128xf32>
    %347 = vector.broadcast %3 : vector<1x128xf32> to vector<8x128xf32>
    %348 = arith.mulf %346, %347 : vector<8x128xf32>
    %349 = vector.broadcast %4 : vector<1x128xf32> to vector<8x128xf32>
    %350 = arith.addf %348, %349 : vector<8x128xf32>
    %cst_51 = arith.constant 0.000000e+00 : f32
    %351 = vector.broadcast %cst_51 : f32 to vector<8x128xf32>
    %352 = arith.maximumf %350, %351 : vector<8x128xf32>
    %353 = vector.extract_strided_slice %2 {offsets = [0, 5760], sizes = [8, 128], strides = [1, 1]} : vector<8x8192xf32> to vector<8x128xf32>
    %354 = vector.broadcast %3 : vector<1x128xf32> to vector<8x128xf32>
    %355 = arith.mulf %353, %354 : vector<8x128xf32>
    %356 = vector.broadcast %4 : vector<1x128xf32> to vector<8x128xf32>
    %357 = arith.addf %355, %356 : vector<8x128xf32>
    %cst_52 = arith.constant 0.000000e+00 : f32
    %358 = vector.broadcast %cst_52 : f32 to vector<8x128xf32>
    %359 = arith.maximumf %357, %358 : vector<8x128xf32>
    %360 = arith.addf %352, %359 : vector<8x128xf32>
    %361 = vector.extract_strided_slice %2 {offsets = [0, 5888], sizes = [8, 128], strides = [1, 1]} : vector<8x8192xf32> to vector<8x128xf32>
    %362 = vector.broadcast %3 : vector<1x128xf32> to vector<8x128xf32>
    %363 = arith.mulf %361, %362 : vector<8x128xf32>
    %364 = vector.broadcast %4 : vector<1x128xf32> to vector<8x128xf32>
    %365 = arith.addf %363, %364 : vector<8x128xf32>
    %cst_53 = arith.constant 0.000000e+00 : f32
    %366 = vector.broadcast %cst_53 : f32 to vector<8x128xf32>
    %367 = arith.maximumf %365, %366 : vector<8x128xf32>
    %368 = arith.addf %360, %367 : vector<8x128xf32>
    %369 = vector.extract_strided_slice %2 {offsets = [0, 6016], sizes = [8, 128], strides = [1, 1]} : vector<8x8192xf32> to vector<8x128xf32>
    %370 = vector.broadcast %3 : vector<1x128xf32> to vector<8x128xf32>
    %371 = arith.mulf %369, %370 : vector<8x128xf32>
    %372 = vector.broadcast %4 : vector<1x128xf32> to vector<8x128xf32>
    %373 = arith.addf %371, %372 : vector<8x128xf32>
    %cst_54 = arith.constant 0.000000e+00 : f32
    %374 = vector.broadcast %cst_54 : f32 to vector<8x128xf32>
    %375 = arith.maximumf %373, %374 : vector<8x128xf32>
    %376 = arith.addf %368, %375 : vector<8x128xf32>
    %377 = vector.extract_strided_slice %2 {offsets = [0, 6144], sizes = [8, 128], strides = [1, 1]} : vector<8x8192xf32> to vector<8x128xf32>
    %378 = vector.broadcast %3 : vector<1x128xf32> to vector<8x128xf32>
    %379 = arith.mulf %377, %378 : vector<8x128xf32>
    %380 = vector.broadcast %4 : vector<1x128xf32> to vector<8x128xf32>
    %381 = arith.addf %379, %380 : vector<8x128xf32>
    %cst_55 = arith.constant 0.000000e+00 : f32
    %382 = vector.broadcast %cst_55 : f32 to vector<8x128xf32>
    %383 = arith.maximumf %381, %382 : vector<8x128xf32>
    %384 = vector.extract_strided_slice %2 {offsets = [0, 6272], sizes = [8, 128], strides = [1, 1]} : vector<8x8192xf32> to vector<8x128xf32>
    %385 = vector.broadcast %3 : vector<1x128xf32> to vector<8x128xf32>
    %386 = arith.mulf %384, %385 : vector<8x128xf32>
    %387 = vector.broadcast %4 : vector<1x128xf32> to vector<8x128xf32>
    %388 = arith.addf %386, %387 : vector<8x128xf32>
    %cst_56 = arith.constant 0.000000e+00 : f32
    %389 = vector.broadcast %cst_56 : f32 to vector<8x128xf32>
    %390 = arith.maximumf %388, %389 : vector<8x128xf32>
    %391 = arith.addf %383, %390 : vector<8x128xf32>
    %392 = vector.extract_strided_slice %2 {offsets = [0, 6400], sizes = [8, 128], strides = [1, 1]} : vector<8x8192xf32> to vector<8x128xf32>
    %393 = vector.broadcast %3 : vector<1x128xf32> to vector<8x128xf32>
    %394 = arith.mulf %392, %393 : vector<8x128xf32>
    %395 = vector.broadcast %4 : vector<1x128xf32> to vector<8x128xf32>
    %396 = arith.addf %394, %395 : vector<8x128xf32>
    %cst_57 = arith.constant 0.000000e+00 : f32
    %397 = vector.broadcast %cst_57 : f32 to vector<8x128xf32>
    %398 = arith.maximumf %396, %397 : vector<8x128xf32>
    %399 = arith.addf %391, %398 : vector<8x128xf32>
    %400 = vector.extract_strided_slice %2 {offsets = [0, 6528], sizes = [8, 128], strides = [1, 1]} : vector<8x8192xf32> to vector<8x128xf32>
    %401 = vector.broadcast %3 : vector<1x128xf32> to vector<8x128xf32>
    %402 = arith.mulf %400, %401 : vector<8x128xf32>
    %403 = vector.broadcast %4 : vector<1x128xf32> to vector<8x128xf32>
    %404 = arith.addf %402, %403 : vector<8x128xf32>
    %cst_58 = arith.constant 0.000000e+00 : f32
    %405 = vector.broadcast %cst_58 : f32 to vector<8x128xf32>
    %406 = arith.maximumf %404, %405 : vector<8x128xf32>
    %407 = arith.addf %399, %406 : vector<8x128xf32>
    %408 = vector.extract_strided_slice %2 {offsets = [0, 6656], sizes = [8, 128], strides = [1, 1]} : vector<8x8192xf32> to vector<8x128xf32>
    %409 = vector.broadcast %3 : vector<1x128xf32> to vector<8x128xf32>
    %410 = arith.mulf %408, %409 : vector<8x128xf32>
    %411 = vector.broadcast %4 : vector<1x128xf32> to vector<8x128xf32>
    %412 = arith.addf %410, %411 : vector<8x128xf32>
    %cst_59 = arith.constant 0.000000e+00 : f32
    %413 = vector.broadcast %cst_59 : f32 to vector<8x128xf32>
    %414 = arith.maximumf %412, %413 : vector<8x128xf32>
    %415 = vector.extract_strided_slice %2 {offsets = [0, 6784], sizes = [8, 128], strides = [1, 1]} : vector<8x8192xf32> to vector<8x128xf32>
    %416 = vector.broadcast %3 : vector<1x128xf32> to vector<8x128xf32>
    %417 = arith.mulf %415, %416 : vector<8x128xf32>
    %418 = vector.broadcast %4 : vector<1x128xf32> to vector<8x128xf32>
    %419 = arith.addf %417, %418 : vector<8x128xf32>
    %cst_60 = arith.constant 0.000000e+00 : f32
    %420 = vector.broadcast %cst_60 : f32 to vector<8x128xf32>
    %421 = arith.maximumf %419, %420 : vector<8x128xf32>
    %422 = arith.addf %414, %421 : vector<8x128xf32>
    %423 = vector.extract_strided_slice %2 {offsets = [0, 6912], sizes = [8, 128], strides = [1, 1]} : vector<8x8192xf32> to vector<8x128xf32>
    %424 = vector.broadcast %3 : vector<1x128xf32> to vector<8x128xf32>
    %425 = arith.mulf %423, %424 : vector<8x128xf32>
    %426 = vector.broadcast %4 : vector<1x128xf32> to vector<8x128xf32>
    %427 = arith.addf %425, %426 : vector<8x128xf32>
    %cst_61 = arith.constant 0.000000e+00 : f32
    %428 = vector.broadcast %cst_61 : f32 to vector<8x128xf32>
    %429 = arith.maximumf %427, %428 : vector<8x128xf32>
    %430 = arith.addf %422, %429 : vector<8x128xf32>
    %431 = vector.extract_strided_slice %2 {offsets = [0, 7040], sizes = [8, 128], strides = [1, 1]} : vector<8x8192xf32> to vector<8x128xf32>
    %432 = vector.broadcast %3 : vector<1x128xf32> to vector<8x128xf32>
    %433 = arith.mulf %431, %432 : vector<8x128xf32>
    %434 = vector.broadcast %4 : vector<1x128xf32> to vector<8x128xf32>
    %435 = arith.addf %433, %434 : vector<8x128xf32>
    %cst_62 = arith.constant 0.000000e+00 : f32
    %436 = vector.broadcast %cst_62 : f32 to vector<8x128xf32>
    %437 = arith.maximumf %435, %436 : vector<8x128xf32>
    %438 = arith.addf %430, %437 : vector<8x128xf32>
    %439 = vector.extract_strided_slice %2 {offsets = [0, 7168], sizes = [8, 128], strides = [1, 1]} : vector<8x8192xf32> to vector<8x128xf32>
    %440 = vector.broadcast %3 : vector<1x128xf32> to vector<8x128xf32>
    %441 = arith.mulf %439, %440 : vector<8x128xf32>
    %442 = vector.broadcast %4 : vector<1x128xf32> to vector<8x128xf32>
    %443 = arith.addf %441, %442 : vector<8x128xf32>
    %cst_63 = arith.constant 0.000000e+00 : f32
    %444 = vector.broadcast %cst_63 : f32 to vector<8x128xf32>
    %445 = arith.maximumf %443, %444 : vector<8x128xf32>
    %446 = vector.extract_strided_slice %2 {offsets = [0, 7296], sizes = [8, 128], strides = [1, 1]} : vector<8x8192xf32> to vector<8x128xf32>
    %447 = vector.broadcast %3 : vector<1x128xf32> to vector<8x128xf32>
    %448 = arith.mulf %446, %447 : vector<8x128xf32>
    %449 = vector.broadcast %4 : vector<1x128xf32> to vector<8x128xf32>
    %450 = arith.addf %448, %449 : vector<8x128xf32>
    %cst_64 = arith.constant 0.000000e+00 : f32
    %451 = vector.broadcast %cst_64 : f32 to vector<8x128xf32>
    %452 = arith.maximumf %450, %451 : vector<8x128xf32>
    %453 = arith.addf %445, %452 : vector<8x128xf32>
    %454 = vector.extract_strided_slice %2 {offsets = [0, 7424], sizes = [8, 128], strides = [1, 1]} : vector<8x8192xf32> to vector<8x128xf32>
    %455 = vector.broadcast %3 : vector<1x128xf32> to vector<8x128xf32>
    %456 = arith.mulf %454, %455 : vector<8x128xf32>
    %457 = vector.broadcast %4 : vector<1x128xf32> to vector<8x128xf32>
    %458 = arith.addf %456, %457 : vector<8x128xf32>
    %cst_65 = arith.constant 0.000000e+00 : f32
    %459 = vector.broadcast %cst_65 : f32 to vector<8x128xf32>
    %460 = arith.maximumf %458, %459 : vector<8x128xf32>
    %461 = arith.addf %453, %460 : vector<8x128xf32>
    %462 = vector.extract_strided_slice %2 {offsets = [0, 7552], sizes = [8, 128], strides = [1, 1]} : vector<8x8192xf32> to vector<8x128xf32>
    %463 = vector.broadcast %3 : vector<1x128xf32> to vector<8x128xf32>
    %464 = arith.mulf %462, %463 : vector<8x128xf32>
    %465 = vector.broadcast %4 : vector<1x128xf32> to vector<8x128xf32>
    %466 = arith.addf %464, %465 : vector<8x128xf32>
    %cst_66 = arith.constant 0.000000e+00 : f32
    %467 = vector.broadcast %cst_66 : f32 to vector<8x128xf32>
    %468 = arith.maximumf %466, %467 : vector<8x128xf32>
    %469 = arith.addf %461, %468 : vector<8x128xf32>
    %470 = vector.extract_strided_slice %2 {offsets = [0, 7680], sizes = [8, 128], strides = [1, 1]} : vector<8x8192xf32> to vector<8x128xf32>
    %471 = vector.broadcast %3 : vector<1x128xf32> to vector<8x128xf32>
    %472 = arith.mulf %470, %471 : vector<8x128xf32>
    %473 = vector.broadcast %4 : vector<1x128xf32> to vector<8x128xf32>
    %474 = arith.addf %472, %473 : vector<8x128xf32>
    %cst_67 = arith.constant 0.000000e+00 : f32
    %475 = vector.broadcast %cst_67 : f32 to vector<8x128xf32>
    %476 = arith.maximumf %474, %475 : vector<8x128xf32>
    %477 = vector.extract_strided_slice %2 {offsets = [0, 7808], sizes = [8, 128], strides = [1, 1]} : vector<8x8192xf32> to vector<8x128xf32>
    %478 = vector.broadcast %3 : vector<1x128xf32> to vector<8x128xf32>
    %479 = arith.mulf %477, %478 : vector<8x128xf32>
    %480 = vector.broadcast %4 : vector<1x128xf32> to vector<8x128xf32>
    %481 = arith.addf %479, %480 : vector<8x128xf32>
    %cst_68 = arith.constant 0.000000e+00 : f32
    %482 = vector.broadcast %cst_68 : f32 to vector<8x128xf32>
    %483 = arith.maximumf %481, %482 : vector<8x128xf32>
    %484 = arith.addf %476, %483 : vector<8x128xf32>
    %485 = vector.extract_strided_slice %2 {offsets = [0, 7936], sizes = [8, 128], strides = [1, 1]} : vector<8x8192xf32> to vector<8x128xf32>
    %486 = vector.broadcast %3 : vector<1x128xf32> to vector<8x128xf32>
    %487 = arith.mulf %485, %486 : vector<8x128xf32>
    %488 = vector.broadcast %4 : vector<1x128xf32> to vector<8x128xf32>
    %489 = arith.addf %487, %488 : vector<8x128xf32>
    %cst_69 = arith.constant 0.000000e+00 : f32
    %490 = vector.broadcast %cst_69 : f32 to vector<8x128xf32>
    %491 = arith.maximumf %489, %490 : vector<8x128xf32>
    %492 = arith.addf %484, %491 : vector<8x128xf32>
    %493 = vector.extract_strided_slice %2 {offsets = [0, 8064], sizes = [8, 128], strides = [1, 1]} : vector<8x8192xf32> to vector<8x128xf32>
    %494 = vector.broadcast %3 : vector<1x128xf32> to vector<8x128xf32>
    %495 = arith.mulf %493, %494 : vector<8x128xf32>
    %496 = vector.broadcast %4 : vector<1x128xf32> to vector<8x128xf32>
    %497 = arith.addf %495, %496 : vector<8x128xf32>
    %cst_70 = arith.constant 0.000000e+00 : f32
    %498 = vector.broadcast %cst_70 : f32 to vector<8x128xf32>
    %499 = arith.maximumf %497, %498 : vector<8x128xf32>
    %500 = arith.addf %492, %499 : vector<8x128xf32>
    %501 = tpu.concatenate %35, %66, %97, %128, %159, %190, %221, %252, %283, %314, %345, %376, %407, %438, %469, %500 in 0 : vector<8x128xf32>, vector<8x128xf32>, vector<8x128xf32>, vector<8x128xf32>, vector<8x128xf32>, vector<8x128xf32>, vector<8x128xf32>, vector<8x128xf32>, vector<8x128xf32>, vector<8x128xf32>, vector<8x128xf32>, vector<8x128xf32>, vector<8x128xf32>, vector<8x128xf32>, vector<8x128xf32>, vector<8x128xf32> -> vector<128x128xf32>
    %cst_71 = arith.constant 0.000000e+00 : f32
    %502 = vector.broadcast %cst_71 : f32 to vector<8x128xf32>
    %503 = vector.extract_strided_slice %501 {offsets = [0, 0], sizes = [120, 128], strides = [1, 1]} : vector<128x128xf32> to vector<120x128xf32>
    %504 = tpu.concatenate %502, %503 in 0 : vector<8x128xf32>, vector<120x128xf32> -> vector<128x128xf32>
    %505 = vector.extract_strided_slice %501 {offsets = [8, 0], sizes = [120, 128], strides = [1, 1]} : vector<128x128xf32> to vector<120x128xf32>
    %506 = tpu.concatenate %505, %502 in 0 : vector<120x128xf32>, vector<8x128xf32> -> vector<128x128xf32>
    %c0_72 = arith.constant 0 : index
    %c0_73 = arith.constant 0 : index
    %507 = vector.load %arg5[%c0_72, %c0_73] : memref<384x128xf32, #tpu.memory_space<vmem>>, vector<128x128xf32>
    %cst_74 = arith.constant dense<0.000000e+00> : vector<128x128xf32>
    %508 = tpu.matmul %504, %507, %cst_74 {dimension_numbers = #tpu.dot_dimension_numbers<[1], [0], [0], [1], [0, 0, 1, 1], [], []>} : vector<128x128xf32>, vector<128x128xf32>, vector<128x128xf32> -> vector<128x128xf32>
    %c128 = arith.constant 128 : index
    %c0_75 = arith.constant 0 : index
    %509 = vector.load %arg5[%c128, %c0_75] : memref<384x128xf32, #tpu.memory_space<vmem>>, vector<128x128xf32>
    %cst_76 = arith.constant dense<0.000000e+00> : vector<128x128xf32>
    %510 = tpu.matmul %501, %509, %cst_76 {dimension_numbers = #tpu.dot_dimension_numbers<[1], [0], [0], [1], [0, 0, 1, 1], [], []>} : vector<128x128xf32>, vector<128x128xf32>, vector<128x128xf32> -> vector<128x128xf32>
    %511 = arith.addf %508, %510 : vector<128x128xf32>
    %c256 = arith.constant 256 : index
    %c0_77 = arith.constant 0 : index
    %512 = vector.load %arg5[%c256, %c0_77] : memref<384x128xf32, #tpu.memory_space<vmem>>, vector<128x128xf32>
    %cst_78 = arith.constant dense<0.000000e+00> : vector<128x128xf32>
    %513 = tpu.matmul %506, %512, %cst_78 {dimension_numbers = #tpu.dot_dimension_numbers<[1], [0], [0], [1], [0, 0, 1, 1], [], []>} : vector<128x128xf32>, vector<128x128xf32>, vector<128x128xf32> -> vector<128x128xf32>
    %514 = arith.addf %511, %513 : vector<128x128xf32>
    %c0_79 = arith.constant 0 : index
    %c0_80 = arith.constant 0 : index
    %515 = vector.load %arg6[%c0_79, %c0_80] : memref<1x128xf32, #tpu.memory_space<vmem>>, vector<1x128xf32>
    %516 = vector.broadcast %515 : vector<1x128xf32> to vector<128x128xf32>
    %517 = arith.mulf %514, %516 : vector<128x128xf32>
    %c0_81 = arith.constant 0 : index
    %c0_82 = arith.constant 0 : index
    %518 = vector.load %arg7[%c0_81, %c0_82] : memref<1x128xf32, #tpu.memory_space<vmem>>, vector<1x128xf32>
    %519 = vector.broadcast %518 : vector<1x128xf32> to vector<128x128xf32>
    %520 = arith.addf %517, %519 : vector<128x128xf32>
    %cst_83 = arith.constant 0.000000e+00 : f32
    %521 = vector.broadcast %cst_83 : f32 to vector<128x128xf32>
    %522 = arith.maximumf %520, %521 : vector<128x128xf32>
    %523 = vector.extract_strided_slice %522 {offsets = [0, 0], sizes = [8, 128], strides = [1, 1]} : vector<128x128xf32> to vector<8x128xf32>
    %524 = vector.extract_strided_slice %522 {offsets = [8, 0], sizes = [8, 128], strides = [1, 1]} : vector<128x128xf32> to vector<8x128xf32>
    %525 = arith.addf %523, %524 : vector<8x128xf32>
    %526 = vector.extract_strided_slice %522 {offsets = [16, 0], sizes = [8, 128], strides = [1, 1]} : vector<128x128xf32> to vector<8x128xf32>
    %527 = arith.addf %525, %526 : vector<8x128xf32>
    %528 = vector.extract_strided_slice %522 {offsets = [24, 0], sizes = [8, 128], strides = [1, 1]} : vector<128x128xf32> to vector<8x128xf32>
    %529 = arith.addf %527, %528 : vector<8x128xf32>
    %530 = vector.extract_strided_slice %522 {offsets = [32, 0], sizes = [8, 128], strides = [1, 1]} : vector<128x128xf32> to vector<8x128xf32>
    %531 = vector.extract_strided_slice %522 {offsets = [40, 0], sizes = [8, 128], strides = [1, 1]} : vector<128x128xf32> to vector<8x128xf32>
    %532 = arith.addf %530, %531 : vector<8x128xf32>
    %533 = vector.extract_strided_slice %522 {offsets = [48, 0], sizes = [8, 128], strides = [1, 1]} : vector<128x128xf32> to vector<8x128xf32>
    %534 = arith.addf %532, %533 : vector<8x128xf32>
    %535 = vector.extract_strided_slice %522 {offsets = [56, 0], sizes = [8, 128], strides = [1, 1]} : vector<128x128xf32> to vector<8x128xf32>
    %536 = arith.addf %534, %535 : vector<8x128xf32>
    %537 = vector.extract_strided_slice %522 {offsets = [64, 0], sizes = [8, 128], strides = [1, 1]} : vector<128x128xf32> to vector<8x128xf32>
    %538 = vector.extract_strided_slice %522 {offsets = [72, 0], sizes = [8, 128], strides = [1, 1]} : vector<128x128xf32> to vector<8x128xf32>
    %539 = arith.addf %537, %538 : vector<8x128xf32>
    %540 = vector.extract_strided_slice %522 {offsets = [80, 0], sizes = [8, 128], strides = [1, 1]} : vector<128x128xf32> to vector<8x128xf32>
    %541 = arith.addf %539, %540 : vector<8x128xf32>
    %542 = vector.extract_strided_slice %522 {offsets = [88, 0], sizes = [8, 128], strides = [1, 1]} : vector<128x128xf32> to vector<8x128xf32>
    %543 = arith.addf %541, %542 : vector<8x128xf32>
    %544 = vector.extract_strided_slice %522 {offsets = [96, 0], sizes = [8, 128], strides = [1, 1]} : vector<128x128xf32> to vector<8x128xf32>
    %545 = vector.extract_strided_slice %522 {offsets = [104, 0], sizes = [8, 128], strides = [1, 1]} : vector<128x128xf32> to vector<8x128xf32>
    %546 = arith.addf %544, %545 : vector<8x128xf32>
    %547 = vector.extract_strided_slice %522 {offsets = [112, 0], sizes = [8, 128], strides = [1, 1]} : vector<128x128xf32> to vector<8x128xf32>
    %548 = arith.addf %546, %547 : vector<8x128xf32>
    %549 = vector.extract_strided_slice %522 {offsets = [120, 0], sizes = [8, 128], strides = [1, 1]} : vector<128x128xf32> to vector<8x128xf32>
    %550 = arith.addf %548, %549 : vector<8x128xf32>
    %551 = tpu.concatenate %529, %536, %543, %550 in 0 : vector<8x128xf32>, vector<8x128xf32>, vector<8x128xf32>, vector<8x128xf32> -> vector<32x128xf32>
    %552 = vector.extract_strided_slice %551 {offsets = [0, 0], sizes = [24, 128], strides = [1, 1]} : vector<32x128xf32> to vector<24x128xf32>
    %553 = tpu.concatenate %502, %552 in 0 : vector<8x128xf32>, vector<24x128xf32> -> vector<32x128xf32>
    %554 = vector.extract_strided_slice %551 {offsets = [8, 0], sizes = [24, 128], strides = [1, 1]} : vector<32x128xf32> to vector<24x128xf32>
    %555 = tpu.concatenate %554, %502 in 0 : vector<24x128xf32>, vector<8x128xf32> -> vector<32x128xf32>
    %c0_84 = arith.constant 0 : index
    %c0_85 = arith.constant 0 : index
    %556 = vector.load %arg8[%c0_84, %c0_85] : memref<384x128xf32, #tpu.memory_space<vmem>>, vector<128x128xf32>
    %cst_86 = arith.constant dense<0.000000e+00> : vector<32x128xf32>
    %557 = tpu.matmul %553, %556, %cst_86 {dimension_numbers = #tpu.dot_dimension_numbers<[1], [0], [0], [1], [0, 0, 1, 1], [], []>} : vector<32x128xf32>, vector<128x128xf32>, vector<32x128xf32> -> vector<32x128xf32>
    %c128_87 = arith.constant 128 : index
    %c0_88 = arith.constant 0 : index
    %558 = vector.load %arg8[%c128_87, %c0_88] : memref<384x128xf32, #tpu.memory_space<vmem>>, vector<128x128xf32>
    %cst_89 = arith.constant dense<0.000000e+00> : vector<32x128xf32>
    %559 = tpu.matmul %551, %558, %cst_89 {dimension_numbers = #tpu.dot_dimension_numbers<[1], [0], [0], [1], [0, 0, 1, 1], [], []>} : vector<32x128xf32>, vector<128x128xf32>, vector<32x128xf32> -> vector<32x128xf32>
    %560 = arith.addf %557, %559 : vector<32x128xf32>
    %c256_90 = arith.constant 256 : index
    %c0_91 = arith.constant 0 : index
    %561 = vector.load %arg8[%c256_90, %c0_91] : memref<384x128xf32, #tpu.memory_space<vmem>>, vector<128x128xf32>
    %cst_92 = arith.constant dense<0.000000e+00> : vector<32x128xf32>
    %562 = tpu.matmul %555, %561, %cst_92 {dimension_numbers = #tpu.dot_dimension_numbers<[1], [0], [0], [1], [0, 0, 1, 1], [], []>} : vector<32x128xf32>, vector<128x128xf32>, vector<32x128xf32> -> vector<32x128xf32>
    %563 = arith.addf %560, %562 : vector<32x128xf32>
    %c0_93 = arith.constant 0 : index
    %c0_94 = arith.constant 0 : index
    %564 = vector.load %arg9[%c0_93, %c0_94] : memref<1x128xf32, #tpu.memory_space<vmem>>, vector<1x128xf32>
    %565 = vector.broadcast %564 : vector<1x128xf32> to vector<32x128xf32>
    %566 = arith.mulf %563, %565 : vector<32x128xf32>
    %c0_95 = arith.constant 0 : index
    %c0_96 = arith.constant 0 : index
    %567 = vector.load %arg10[%c0_95, %c0_96] : memref<1x128xf32, #tpu.memory_space<vmem>>, vector<1x128xf32>
    %568 = vector.broadcast %567 : vector<1x128xf32> to vector<32x128xf32>
    %569 = arith.addf %566, %568 : vector<32x128xf32>
    %cst_97 = arith.constant 0.000000e+00 : f32
    %570 = vector.broadcast %cst_97 : f32 to vector<32x128xf32>
    %571 = arith.maximumf %569, %570 : vector<32x128xf32>
    %572 = vector.extract_strided_slice %571 {offsets = [0, 0], sizes = [8, 128], strides = [1, 1]} : vector<32x128xf32> to vector<8x128xf32>
    %573 = vector.extract_strided_slice %571 {offsets = [8, 0], sizes = [8, 128], strides = [1, 1]} : vector<32x128xf32> to vector<8x128xf32>
    %574 = arith.addf %572, %573 : vector<8x128xf32>
    %575 = vector.extract_strided_slice %571 {offsets = [16, 0], sizes = [8, 128], strides = [1, 1]} : vector<32x128xf32> to vector<8x128xf32>
    %576 = arith.addf %574, %575 : vector<8x128xf32>
    %577 = vector.extract_strided_slice %571 {offsets = [24, 0], sizes = [8, 128], strides = [1, 1]} : vector<32x128xf32> to vector<8x128xf32>
    %578 = arith.addf %576, %577 : vector<8x128xf32>
    %c0_98 = arith.constant 0 : index
    %c0_99 = arith.constant 0 : index
    %579 = vector.load %arg11[%c0_98, %c0_99] : memref<2x128xf32, #tpu.memory_space<vmem>>, vector<1x128xf32>
    %580 = vector.broadcast %579 : vector<1x128xf32> to vector<8x128xf32>
    %581 = arith.mulf %578, %580 : vector<8x128xf32>
    %cst_100 = arith.constant dense<0.000000e+00> : vector<8xf32>
    %582 = vector.multi_reduction <add>, %581, %cst_100 [1] : vector<8x128xf32> to vector<8xf32>
    %583 = vector.shape_cast %582 : vector<8xf32> to vector<8x1xf32>
    %c1 = arith.constant 1 : index
    %c0_101 = arith.constant 0 : index
    %584 = vector.load %arg11[%c1, %c0_101] : memref<2x128xf32, #tpu.memory_space<vmem>>, vector<1x128xf32>
    %585 = vector.broadcast %584 : vector<1x128xf32> to vector<8x128xf32>
    %586 = arith.mulf %578, %585 : vector<8x128xf32>
    %cst_102 = arith.constant dense<0.000000e+00> : vector<8xf32>
    %587 = vector.multi_reduction <add>, %586, %cst_102 [1] : vector<8x128xf32> to vector<8xf32>
    %588 = vector.shape_cast %587 : vector<8xf32> to vector<8x1xf32>
    %589 = tpu.concatenate %583, %588 in 1 : vector<8x1xf32>, vector<8x1xf32> -> vector<8x2xf32>
    %c0_103 = arith.constant 0 : index
    %c0_104 = arith.constant 0 : index
    %590 = vector.load %arg12[%c0_103, %c0_104] : memref<1x2xf32, #tpu.memory_space<vmem>>, vector<1x2xf32>
    %591 = vector.broadcast %590 : vector<1x2xf32> to vector<8x2xf32>
    %592 = arith.addf %589, %591 : vector<8x2xf32>
    %cst_105 = arith.constant dense<0xFF800000> : vector<8xf32>
    %593 = vector.multi_reduction <maximumf>, %592, %cst_105 [1] : vector<8x2xf32> to vector<8xf32>
    %594 = vector.shape_cast %593 : vector<8xf32> to vector<8x1xf32>
    %595 = vector.broadcast %594 : vector<8x1xf32> to vector<8x2xf32>
    %596 = arith.subf %592, %595 : vector<8x2xf32>
    %597 = math.exp %596 : vector<8x2xf32>
    %cst_106 = arith.constant dense<0.000000e+00> : vector<8xf32>
    %598 = vector.multi_reduction <add>, %597, %cst_106 [1] : vector<8x2xf32> to vector<8xf32>
    %599 = vector.shape_cast %598 : vector<8xf32> to vector<8x1xf32>
    %600 = vector.broadcast %599 : vector<8x1xf32> to vector<8x2xf32>
    %601 = arith.divf %597, %600 : vector<8x2xf32>
    %c0_107 = arith.constant 0 : index
    %c0_108 = arith.constant 0 : index
    %602 = vector.load %arg13[%c0_107, %c0_108] : memref<8x2xf32, #tpu.memory_space<vmem>>, vector<8x2xf32>
    tpu.vector_store %arg13[%c0_107, %c0_108], %601 {strides = array<i32>} : memref<8x2xf32, #tpu.memory_space<vmem>>, vector<8x2xf32>,
    return
  }
  func.func @transform_0(%arg0: i32) -> (i32, i32) {
    %c0_i32 = arith.constant 0 : i32
    %c0_i32_0 = arith.constant 0 : i32
    return %arg0, %c0_i32 : i32, i32
  }
  func.func @transform_1(%arg0: i32) -> (i32, i32) {
    %c0_i32 = arith.constant 0 : i32
    %c0_i32_0 = arith.constant 0 : i32
    %c0_i32_1 = arith.constant 0 : i32
    return %c0_i32, %c0_i32_0 : i32, i32
  }
  func.func @transform_2(%arg0: i32) -> (i32, i32) {
    %c0_i32 = arith.constant 0 : i32
    %c0_i32_0 = arith.constant 0 : i32
    %c0_i32_1 = arith.constant 0 : i32
    return %c0_i32, %c0_i32_0 : i32, i32
  }
  func.func @transform_3(%arg0: i32) -> (i32, i32) {
    %c0_i32 = arith.constant 0 : i32
    %c0_i32_0 = arith.constant 0 : i32
    %c0_i32_1 = arith.constant 0 : i32
    return %c0_i32, %c0_i32_0 : i32, i32
  }
  func.func @transform_4(%arg0: i32) -> (i32, i32) {
    %c0_i32 = arith.constant 0 : i32
    %c0_i32_0 = arith.constant 0 : i32
    %c0_i32_1 = arith.constant 0 : i32
    return %c0_i32, %c0_i32_0 : i32, i32
  }
  func.func @transform_5(%arg0: i32) -> (i32, i32) {
    %c0_i32 = arith.constant 0 : i32
    %c0_i32_0 = arith.constant 0 : i32
    %c0_i32_1 = arith.constant 0 : i32
    return %c0_i32, %c0_i32_0 : i32, i32
  }
  func.func @transform_6(%arg0: i32) -> (i32, i32) {
    %c0_i32 = arith.constant 0 : i32
    %c0_i32_0 = arith.constant 0 : i32
    %c0_i32_1 = arith.constant 0 : i32
    return %c0_i32, %c0_i32_0 : i32, i32
  }
  func.func @transform_7(%arg0: i32) -> (i32, i32) {
    %c0_i32 = arith.constant 0 : i32
    %c0_i32_0 = arith.constant 0 : i32
    %c0_i32_1 = arith.constant 0 : i32
    return %c0_i32, %c0_i32_0 : i32, i32
  }
  func.func @transform_8(%arg0: i32) -> (i32, i32) {
    %c0_i32 = arith.constant 0 : i32
    %c0_i32_0 = arith.constant 0 : i32
    %c0_i32_1 = arith.constant 0 : i32
    return %c0_i32, %c0_i32_0 : i32, i32
  }
  func.func @transform_9(%arg0: i32) -> (i32, i32) {
    %c0_i32 = arith.constant 0 : i32
    %c0_i32_0 = arith.constant 0 : i32
    %c0_i32_1 = arith.constant 0 : i32
    return %c0_i32, %c0_i32_0 : i32, i32
  }
  func.func @transform_10(%arg0: i32) -> (i32, i32) {
    %c0_i32 = arith.constant 0 : i32
    %c0_i32_0 = arith.constant 0 : i32
    %c0_i32_1 = arith.constant 0 : i32
    return %c0_i32, %c0_i32_0 : i32, i32
  }
  func.func @transform_11(%arg0: i32) -> (i32, i32) {
    %c0_i32 = arith.constant 0 : i32
    %c0_i32_0 = arith.constant 0 : i32
    %c0_i32_1 = arith.constant 0 : i32
    return %c0_i32, %c0_i32_0 : i32, i32
  }
  func.func @transform_12(%arg0: i32) -> (i32, i32) {
    %c0_i32 = arith.constant 0 : i32
    %c0_i32_0 = arith.constant 0 : i32
    return %arg0, %c0_i32 : i32, i32
  }
}

</mosaic_0001>

<llo_original>
// kernel: net_forward.1
$region0: #{net_forward.1}
  #allocation0 [shape = 'u32[]', space=smem, size = 0x4, offset = 0x4, fixed_abs, tag = 'smem constant byte address 0x4 - core index']
  #allocation1 [shape = 'u32[144,128]{1,0:T(1,128)}', space=vmem, size = 0x12000, scoped, tag = 'internal scratch']
  %s0 = inlined_call_operand.vmem [shape: f32[8,64], index: 0, kind: input, shape index: {}]
  %s1 = inlined_call_operand.hbm [shape: f32[64,8192], index: 1, kind: input, shape index: {}]
  %s2 = inlined_call_operand.hbm [shape: f32[1,128], index: 2, kind: input, shape index: {}]
  %s3 = inlined_call_operand.hbm [shape: f32[1,128], index: 3, kind: input, shape index: {}]
  %s4 = inlined_call_operand.hbm [shape: f32[384,128], index: 4, kind: input, shape index: {}]
  %s5 = inlined_call_operand.hbm [shape: f32[1,128], index: 5, kind: input, shape index: {}]
  %s6 = inlined_call_operand.hbm [shape: f32[1,128], index: 6, kind: input, shape index: {}]
  %s7 = inlined_call_operand.hbm [shape: f32[384,128], index: 7, kind: input, shape index: {}]
  %s8 = inlined_call_operand.hbm [shape: f32[1,128], index: 8, kind: input, shape index: {}]
  %s9 = inlined_call_operand.hbm [shape: f32[1,128], index: 9, kind: input, shape index: {}]
  %s10 = inlined_call_operand.hbm [shape: f32[2,128], index: 10, kind: input, shape index: {}]
  %s11 = inlined_call_operand.hbm [shape: f32[1,2], index: 11, kind: input, shape index: {}]
  %s12 = inlined_call_operand.vmem [shape: f32[8,2], index: 12, kind: output, shape index: {}]
  %s13 = sld [smem:[#allocation0]]
  $region102: #{net_forward.1} parent=0
    _
  %s15 = ssub.s32 1, %s13
  %s16 = scalar_select 0, %s15, %s13
  $region1: #{net_forward.1} parent=0
    #allocation2 [shape = 'u8[2097152]{0}', space=vmem, size = 0x200000, scoped, tag = 'input window, operand 1, single buffered']
    #allocation3 [shape = 's32[1]{0}', space=sflag, size = 0x4, scoped, tag = 'scoped memory for net_forward.1']
    #allocation4 [shape = 'u8[512]{0}', space=vmem, size = 0x400, scoped, tag = 'input window, operand 2, single buffered']
    #allocation5 [shape = 's32[1]{0}', space=sflag, size = 0x4, scoped, tag = 'scoped memory for net_forward.1']
    #allocation6 [shape = 'u8[512]{0}', space=vmem, size = 0x400, scoped, tag = 'input window, operand 3, single buffered']
    #allocation7 [shape = 'u8[196608]{0}', space=vmem, size = 0x30000, scoped, tag = 'input window, operand 4, single buffered']
    #allocation8 [shape = 's32[1]{0}', space=sflag, size = 0x4, scoped, tag = 'scoped memory for net_forward.1']
    #allocation9 [shape = 'u8[512]{0}', space=vmem, size = 0x400, scoped, tag = 'input window, operand 5, single buffered']
    #allocation10 [shape = 'u8[512]{0}', space=vmem, size = 0x400, scoped, tag = 'input window, operand 6, single buffered']
    #allocation11 [shape = 's32[1]{0}', space=sflag, size = 0x4, scoped, tag = 'scoped memory for net_forward.1']
    #allocation12 [shape = 'u8[196608]{0}', space=vmem, size = 0x30000, scoped, tag = 'input window, operand 7, single buffered']
    #allocation13 [shape = 'u8[512]{0}', space=vmem, size = 0x400, scoped, tag = 'input window, operand 8, single buffered']
    #allocation14 [shape = 's32[1]{0}', space=sflag, size = 0x4, scoped, tag = 'scoped memory for net_forward.1']
    #allocation15 [shape = 'u8[512]{0}', space=vmem, size = 0x400, scoped, tag = 'input window, operand 9, single buffered']
    #allocation16 [shape = 'u8[1024]{0}', space=vmem, size = 0x400, scoped, tag = 'input window, operand 10, single buffered']
    #allocation17 [shape = 's32[1]{0}', space=sflag, size = 0x4, scoped, tag = 'scoped memory for net_forward.1']
    #allocation18 [shape = 'u8[512]{0}', space=vmem, size = 0x400, scoped, tag = 'input window, operand 11, single buffered']
    %17 = vsyncpa [#allocation3], 0
    %18 = vsyncpa [#allocation5], 0
    %19 = vsyncpa [#allocation8], 0
    %20 = vsyncpa [#allocation11], 0
    %21 = vsyncpa [#allocation14], 0
    %22 = vsyncpa [#allocation17], 0
    // Predicated region
    $region2: #{net_forward.1} parent=1 // pred_check
      _
    $region3: #{net_forward.1} parent=1 // pred_check_branch
      %24 = sbr.rel (0) target = $region5
    $region4: #{net_forward.1} parent=1 // pred_region
      _
    $region5: #{net_forward.1} parent=1 // pred_fallthru
      _
    // Predicated region
    $region6: #{net_forward.1} parent=1 // pred_check
      _
    $region7: #{net_forward.1} parent=1 // pred_check_branch
      %26 = sbr.rel (0) target = $region9
    $region8: #{net_forward.1} parent=1 // pred_region
      %s28 = ssub.s32 65536, 65536
      %29 = vsyncadd [#allocation3], %s28
      %s30 = sshll.u32 [#allocation2], 4
      %s31 = int_to_ptr.vmem [resolvable:$true] %s30
      %36 = dma.hbm_to_vmem [thread:$0]  %s1, 65536, %s31, [#allocation3], 8192, 8192, 512
    $region9: #{net_forward.1} parent=1 // pred_fallthru
      _
    // Predicated region
    $region10: #{net_forward.1} parent=1 // pred_check
      _
    $region11: #{net_forward.1} parent=1 // pred_check_branch
      %38 = sbr.rel (0) target = $region13
    $region12: #{net_forward.1} parent=1 // pred_region
      %s40 = ssub.s32 16, 16
      %41 = vsyncadd [#allocation5], %s40
      %s43 = sshll.u32 [#allocation4], 4
      %s44 = int_to_ptr.vmem [resolvable:$true] %s43
      %46 = dma.hbm_to_vmem [thread:$0]  %s2, 16, %s44, [#allocation5]
    $region13: #{net_forward.1} parent=1 // pred_fallthru
      _
    // Predicated region
    $region14: #{net_forward.1} parent=1 // pred_check
      _
    $region15: #{net_forward.1} parent=1 // pred_check_branch
      %48 = sbr.rel (0) target = $region17
    $region16: #{net_forward.1} parent=1 // pred_region
      %s50 = ssub.s32 16, 16
      %51 = vsyncadd [#allocation5], %s50
      %s53 = sshll.u32 [#allocation6], 4
      %s54 = int_to_ptr.vmem [resolvable:$true] %s53
      %56 = dma.hbm_to_vmem [thread:$0]  %s3, 16, %s54, [#allocation5]
    $region17: #{net_forward.1} parent=1 // pred_fallthru
      _
    // Predicated region
    $region18: #{net_forward.1} parent=1 // pred_check
      _
    $region19: #{net_forward.1} parent=1 // pred_check_branch
      %58 = sbr.rel (0) target = $region21
    $region20: #{net_forward.1} parent=1 // pred_region
      %s60 = ssub.s32 6144, 6144
      %61 = vsyncadd [#allocation8], %s60
      %s62 = sshll.u32 [#allocation7], 4
      %s63 = int_to_ptr.vmem [resolvable:$true] %s62
      %68 = dma.hbm_to_vmem [thread:$0]  %s4, 6144, %s63, [#allocation8], 128, 128, 8
    $region21: #{net_forward.1} parent=1 // pred_fallthru
      _
    // Predicated region
    $region22: #{net_forward.1} parent=1 // pred_check
      _
    $region23: #{net_forward.1} parent=1 // pred_check_branch
      %70 = sbr.rel (0) target = $region25
    $region24: #{net_forward.1} parent=1 // pred_region
      %s72 = ssub.s32 16, 16
      %73 = vsyncadd [#allocation8], %s72
      %s75 = sshll.u32 [#allocation9], 4
      %s76 = int_to_ptr.vmem [resolvable:$true] %s75
      %78 = dma.hbm_to_vmem [thread:$0]  %s5, 16, %s76, [#allocation8]
    $region25: #{net_forward.1} parent=1 // pred_fallthru
      _
    // Predicated region
    $region26: #{net_forward.1} parent=1 // pred_check
      _
    $region27: #{net_forward.1} parent=1 // pred_check_branch
      %80 = sbr.rel (0) target = $region29
    $region28: #{net_forward.1} parent=1 // pred_region
      %s82 = ssub.s32 16, 16
      %83 = vsyncadd [#allocation11], %s82
      %s85 = sshll.u32 [#allocation10], 4
      %s86 = int_to_ptr.vmem [resolvable:$true] %s85
      %88 = dma.hbm_to_vmem [thread:$0]  %s6, 16, %s86, [#allocation11]
    $region29: #{net_forward.1} parent=1 // pred_fallthru
      _
    // Predicated region
    $region30: #{net_forward.1} parent=1 // pred_check
      _
    $region31: #{net_forward.1} parent=1 // pred_check_branch
      %90 = sbr.rel (0) target = $region33
    $region32: #{net_forward.1} parent=1 // pred_region
      %s92 = ssub.s32 6144, 6144
      %93 = vsyncadd [#allocation11], %s92
      %s94 = sshll.u32 [#allocation12], 4
      %s95 = int_to_ptr.vmem [resolvable:$true] %s94
      %100 = dma.hbm_to_vmem [thread:$0]  %s7, 6144, %s95, [#allocation11], 128, 128, 8
    $region33: #{net_forward.1} parent=1 // pred_fallthru
      _
    // Predicated region
    $region34: #{net_forward.1} parent=1 // pred_check
      _
    $region35: #{net_forward.1} parent=1 // pred_check_branch
      %102 = sbr.rel (0) target = $region37
    $region36: #{net_forward.1} parent=1 // pred_region
      %s104 = ssub.s32 16, 16
      %105 = vsyncadd [#allocation14], %s104
      %s107 = sshll.u32 [#allocation13], 4
      %s108 = int_to_ptr.vmem [resolvable:$true] %s107
      %110 = dma.hbm_to_vmem [thread:$0]  %s8, 16, %s108, [#allocation14]
    $region37: #{net_forward.1} parent=1 // pred_fallthru
      _
    // Predicated region
    $region38: #{net_forward.1} parent=1 // pred_check
      _
    $region39: #{net_forward.1} parent=1 // pred_check_branch
      %112 = sbr.rel (0) target = $region41
    $region40: #{net_forward.1} parent=1 // pred_region
      %s114 = ssub.s32 16, 16
      %115 = vsyncadd [#allocation14], %s114
      %s117 = sshll.u32 [#allocation15], 4
      %s118 = int_to_ptr.vmem [resolvable:$true] %s117
      %120 = dma.hbm_to_vmem [thread:$0]  %s9, 16, %s118, [#allocation14]
    $region41: #{net_forward.1} parent=1 // pred_fallthru
      _
    // Predicated region
    $region42: #{net_forward.1} parent=1 // pred_check
      _
    $region43: #{net_forward.1} parent=1 // pred_check_branch
      %122 = sbr.rel (0) target = $region45
    $region44: #{net_forward.1} parent=1 // pred_region
      %s124 = ssub.s32 32, 32
      %125 = vsyncadd [#allocation17], %s124
      %s127 = sshll.u32 [#allocation16], 4
      %s128 = int_to_ptr.vmem [resolvable:$true] %s127
      %130 = dma.hbm_to_vmem [thread:$0]  %s10, 32, %s128, [#allocation17]
    $region45: #{net_forward.1} parent=1 // pred_fallthru
      _
    // Predicated region
    $region46: #{net_forward.1} parent=1 // pred_check
      _
    $region47: #{net_forward.1} parent=1 // pred_check_branch
      %132 = sbr.rel (0) target = $region49
    $region48: #{net_forward.1} parent=1 // pred_region
      %s134 = ssub.s32 16, 16
      %135 = vsyncadd [#allocation17], %s134
      %s137 = sshll.u32 [#allocation18], 4
      %s138 = int_to_ptr.vmem [resolvable:$true] %s137
      %140 = dma.hbm_to_vmem [thread:$0]  %s11, 16, %s138, [#allocation17]
    $region49: #{net_forward.1} parent=1 // pred_fallthru
      _
    // Predicated region
    $region50: #{net_forward.1} parent=1 // pred_check
      _
    $region51: #{net_forward.1} parent=1 // pred_check_branch
      %142 = sbr.rel (0) target = $region53
    $region52: #{net_forward.1} parent=1 // pred_region
      %143 = dma.done [#allocation3], 65536
    $region53: #{net_forward.1} parent=1 // pred_fallthru
      _
    // Predicated region
    $region54: #{net_forward.1} parent=1 // pred_check
      _
    $region55: #{net_forward.1} parent=1 // pred_check_branch
      %145 = sbr.rel (0) target = $region57
    $region56: #{net_forward.1} parent=1 // pred_region
      %146 = dma.done [#allocation5], 16
    $region57: #{net_forward.1} parent=1 // pred_fallthru
      _
    // Predicated region
    $region58: #{net_forward.1} parent=1 // pred_check
      _
    $region59: #{net_forward.1} parent=1 // pred_check_branch
      %148 = sbr.rel (0) target = $region61
    $region60: #{net_forward.1} parent=1 // pred_region
      %149 = dma.done [#allocation5], 16
    $region61: #{net_forward.1} parent=1 // pred_fallthru
      _
    // Predicated region
    $region62: #{net_forward.1} parent=1 // pred_check
      _
    $region63: #{net_forward.1} parent=1 // pred_check_branch
      %151 = sbr.rel (0) target = $region65
    $region64: #{net_forward.1} parent=1 // pred_region
      %152 = dma.done [#allocation8], 6144
    $region65: #{net_forward.1} parent=1 // pred_fallthru
      _
    // Predicated region
    $region66: #{net_forward.1} parent=1 // pred_check
      _
    $region67: #{net_forward.1} parent=1 // pred_check_branch
      %154 = sbr.rel (0) target = $region69
    $region68: #{net_forward.1} parent=1 // pred_region
      %155 = dma.done [#allocation8], 16
    $region69: #{net_forward.1} parent=1 // pred_fallthru
      _
    // Predicated region
    $region70: #{net_forward.1} parent=1 // pred_check
      _
    $region71: #{net_forward.1} parent=1 // pred_check_branch
      %157 = sbr.rel (0) target = $region73
    $region72: #{net_forward.1} parent=1 // pred_region
      %158 = dma.done [#allocation11], 16
    $region73: #{net_forward.1} parent=1 // pred_fallthru
      _
    // Predicated region
    $region74: #{net_forward.1} parent=1 // pred_check
      _
    $region75: #{net_forward.1} parent=1 // pred_check_branch
      %160 = sbr.rel (0) target = $region77
    $region76: #{net_forward.1} parent=1 // pred_region
      %161 = dma.done [#allocation11], 6144
    $region77: #{net_forward.1} parent=1 // pred_fallthru
      _
    // Predicated region
    $region78: #{net_forward.1} parent=1 // pred_check
      _
    $region79: #{net_forward.1} parent=1 // pred_check_branch
      %163 = sbr.rel (0) target = $region81
    $region80: #{net_forward.1} parent=1 // pred_region
      %164 = dma.done [#allocation14], 16
    $region81: #{net_forward.1} parent=1 // pred_fallthru
      _
    // Predicated region
    $region82: #{net_forward.1} parent=1 // pred_check
      _
    $region83: #{net_forward.1} parent=1 // pred_check_branch
      %166 = sbr.rel (0) target = $region85
    $region84: #{net_forward.1} parent=1 // pred_region
      %167 = dma.done [#allocation14], 16
    $region85: #{net_forward.1} parent=1 // pred_fallthru
      _
    // Predicated region
    $region86: #{net_forward.1} parent=1 // pred_check
      _
    $region87: #{net_forward.1} parent=1 // pred_check_branch
      %169 = sbr.rel (0) target = $region89
    $region88: #{net_forward.1} parent=1 // pred_region
      %170 = dma.done [#allocation17], 32
    $region89: #{net_forward.1} parent=1 // pred_fallthru
      _
    // Predicated region
    $region90: #{net_forward.1} parent=1 // pred_check
      _
    $region91: #{net_forward.1} parent=1 // pred_check_branch
      %172 = sbr.rel (0) target = $region93
    $region92: #{net_forward.1} parent=1 // pred_region
      %173 = dma.done [#allocation17], 16
    $region93: #{net_forward.1} parent=1 // pred_fallthru
      _
    %v174 = vld [vmem:[%s0] sm:$0xff]
    %v175 = vld [vmem:[#allocation2] sm:$0xff]
    %v176 = vld [vmem:[#allocation2 + $0x8] sm:$0xff]
    %v177 = vld [vmem:[#allocation2 + $0x10] sm:$0xff]
    %v178 = vld [vmem:[#allocation2 + $0x18] sm:$0xff]
    %v179 = vld [vmem:[#allocation2 + $0x20] sm:$0xff]
    %v180 = vld [vmem:[#allocation2 + $0x28] sm:$0xff]
    %v181 = vld [vmem:[#allocation2 + $0x30] sm:$0xff]
    %v182 = vld [vmem:[#allocation2 + $0x38] sm:$0xff]
    %v183 = vld [vmem:[#allocation2 + $0x40] sm:$0xff]
    %v184 = vld [vmem:[#allocation2 + $0x48] sm:$0xff]
    %v185 = vld [vmem:[#allocation2 + $0x50] sm:$0xff]
    %v186 = vld [vmem:[#allocation2 + $0x58] sm:$0xff]
    %v187 = vld [vmem:[#allocation2 + $0x60] sm:$0xff]
    %v188 = vld [vmem:[#allocation2 + $0x68] sm:$0xff]
    %v189 = vld [vmem:[#allocation2 + $0x70] sm:$0xff]
    %v190 = vld [vmem:[#allocation2 + $0x78] sm:$0xff]
    %v191 = vld [vmem:[#allocation2 + $0x80] sm:$0xff]
    %v192 = vld [vmem:[#allocation2 + $0x88] sm:$0xff]
    %v193 = vld [vmem:[#allocation2 + $0x90] sm:$0xff]
    %v194 = vld [vmem:[#allocation2 + $0x98] sm:$0xff]
    %v195 = vld [vmem:[#allocation2 + $0xa0] sm:$0xff]
    %v196 = vld [vmem:[#allocation2 + $0xa8] sm:$0xff]
    %v197 = vld [vmem:[#allocation2 + $0xb0] sm:$0xff]
    %v198 = vld [vmem:[#allocation2 + $0xb8] sm:$0xff]
    %v199 = vld [vmem:[#allocation2 + $0xc0] sm:$0xff]
    %v200 = vld [vmem:[#allocation2 + $0xc8] sm:$0xff]
    %v201 = vld [vmem:[#allocation2 + $0xd0] sm:$0xff]
    %v202 = vld [vmem:[#allocation2 + $0xd8] sm:$0xff]
    %v203 = vld [vmem:[#allocation2 + $0xe0] sm:$0xff]
    %v204 = vld [vmem:[#allocation2 + $0xe8] sm:$0xff]
    %v205 = vld [vmem:[#allocation2 + $0xf0] sm:$0xff]
    %v206 = vld [vmem:[#allocation2 + $0xf8] sm:$0xff]
    %v207 = vld [vmem:[#allocation2 + $0x100] sm:$0xff]
    %v208 = vld [vmem:[#allocation2 + $0x108] sm:$0xff]
    %v209 = vld [vmem:[#allocation2 + $0x110] sm:$0xff]
    %v210 = vld [vmem:[#allocation2 + $0x118] sm:$0xff]
    %v211 = vld [vmem:[#allocation2 + $0x120] sm:$0xff]
    %v212 = vld [vmem:[#allocation2 + $0x128] sm:$0xff]
    %v213 = vld [vmem:[#allocation2 + $0x130] sm:$0xff]
    %v214 = vld [vmem:[#allocation2 + $0x138] sm:$0xff]
    %v215 = vld [vmem:[#allocation2 + $0x140] sm:$0xff]
    %v216 = vld [vmem:[#allocation2 + $0x148] sm:$0xff]
    %v217 = vld [vmem:[#allocation2 + $0x150] sm:$0xff]
    %v218 = vld [vmem:[#allocation2 + $0x158] sm:$0xff]
    %v219 = vld [vmem:[#allocation2 + $0x160] sm:$0xff]
    %v220 = vld [vmem:[#allocation2 + $0x168] sm:$0xff]
    %v221 = vld [vmem:[#allocation2 + $0x170] sm:$0xff]
    %v222 = vld [vmem:[#allocation2 + $0x178] sm:$0xff]
    %v223 = vld [vmem:[#allocation2 + $0x180] sm:$0xff]
    %v224 = vld [vmem:[#allocation2 + $0x188] sm:$0xff]
    %v225 = vld [vmem:[#allocation2 + $0x190] sm:$0xff]
    %v226 = vld [vmem:[#allocation2 + $0x198] sm:$0xff]
    %v227 = vld [vmem:[#allocation2 + $0x1a0] sm:$0xff]
    %v228 = vld [vmem:[#allocation2 + $0x1a8] sm:$0xff]
    %v229 = vld [vmem:[#allocation2 + $0x1b0] sm:$0xff]
    %v230 = vld [vmem:[#allocation2 + $0x1b8] sm:$0xff]
    %v231 = vld [vmem:[#allocation2 + $0x1c0] sm:$0xff]
    %v232 = vld [vmem:[#allocation2 + $0x1c8] sm:$0xff]
    %v233 = vld [vmem:[#allocation2 + $0x1d0] sm:$0xff]
    %v234 = vld [vmem:[#allocation2 + $0x1d8] sm:$0xff]
    %v235 = vld [vmem:[#allocation2 + $0x1e0] sm:$0xff]
    %v236 = vld [vmem:[#allocation2 + $0x1e8] sm:$0xff]
    %v237 = vld [vmem:[#allocation2 + $0x1f0] sm:$0xff]
    %v238 = vld [vmem:[#allocation2 + $0x1f8] sm:$0xff]
    %v239 = vld [vmem:[#allocation2 + $0x200] sm:$0xff]
    %v240 = vld [vmem:[#allocation2 + $0x208] sm:$0xff]
    %v241 = vld [vmem:[#allocation2 + $0x210] sm:$0xff]
    %v242 = vld [vmem:[#allocation2 + $0x218] sm:$0xff]
    %v243 = vld [vmem:[#allocation2 + $0x220] sm:$0xff]
    %v244 = vld [vmem:[#allocation2 + $0x228] sm:$0xff]
    %v245 = vld [vmem:[#allocation2 + $0x230] sm:$0xff]
    %v246 = vld [vmem:[#allocation2 + $0x238] sm:$0xff]
    %v247 = vld [vmem:[#allocation2 + $0x240] sm:$0xff]
    %v248 = vld [vmem:[#allocation2 + $0x248] sm:$0xff]
    %v249 = vld [vmem:[#allocation2 + $0x250] sm:$0xff]
    %v250 = vld [vmem:[#allocation2 + $0x258] sm:$0xff]
    %v251 = vld [vmem:[#allocation2 + $0x260] sm:$0xff]
    %v252 = vld [vmem:[#allocation2 + $0x268] sm:$0xff]
    %v253 = vld [vmem:[#allocation2 + $0x270] sm:$0xff]
    %v254 = vld [vmem:[#allocation2 + $0x278] sm:$0xff]
    %v255 = vld [vmem:[#allocation2 + $0x280] sm:$0xff]
    %v256 = vld [vmem:[#allocation2 + $0x288] sm:$0xff]
    %v257 = vld [vmem:[#allocation2 + $0x290] sm:$0xff]
    %v258 = vld [vmem:[#allocation2 + $0x298] sm:$0xff]
    %v259 = vld [vmem:[#allocation2 + $0x2a0] sm:$0xff]
    %v260 = vld [vmem:[#allocation2 + $0x2a8] sm:$0xff]
    %v261 = vld [vmem:[#allocation2 + $0x2b0] sm:$0xff]
    %v262 = vld [vmem:[#allocation2 + $0x2b8] sm:$0xff]
    %v263 = vld [vmem:[#allocation2 + $0x2c0] sm:$0xff]
    %v264 = vld [vmem:[#allocation2 + $0x2c8] sm:$0xff]
    %v265 = vld [vmem:[#allocation2 + $0x2d0] sm:$0xff]
    %v266 = vld [vmem:[#allocation2 + $0x2d8] sm:$0xff]
    %v267 = vld [vmem:[#allocation2 + $0x2e0] sm:$0xff]
    %v268 = vld [vmem:[#allocation2 + $0x2e8] sm:$0xff]
    %v269 = vld [vmem:[#allocation2 + $0x2f0] sm:$0xff]
    %v270 = vld [vmem:[#allocation2 + $0x2f8] sm:$0xff]
    %v271 = vld [vmem:[#allocation2 + $0x300] sm:$0xff]
    %v272 = vld [vmem:[#allocation2 + $0x308] sm:$0xff]
    %v273 = vld [vmem:[#allocation2 + $0x310] sm:$0xff]
    %v274 = vld [vmem:[#allocation2 + $0x318] sm:$0xff]
    %v275 = vld [vmem:[#allocation2 + $0x320] sm:$0xff]
    %v276 = vld [vmem:[#allocation2 + $0x328] sm:$0xff]
    %v277 = vld [vmem:[#allocation2 + $0x330] sm:$0xff]
    %v278 = vld [vmem:[#allocation2 + $0x338] sm:$0xff]
    %v279 = vld [vmem:[#allocation2 + $0x340] sm:$0xff]
    %v280 = vld [vmem:[#allocation2 + $0x348] sm:$0xff]
    %v281 = vld [vmem:[#allocation2 + $0x350] sm:$0xff]
    %v282 = vld [vmem:[#allocation2 + $0x358] sm:$0xff]
    %v283 = vld [vmem:[#allocation2 + $0x360] sm:$0xff]
    %v284 = vld [vmem:[#allocation2 + $0x368] sm:$0xff]
    %v285 = vld [vmem:[#allocation2 + $0x370] sm:$0xff]
    %v286 = vld [vmem:[#allocation2 + $0x378] sm:$0xff]
    %v287 = vld [vmem:[#allocation2 + $0x380] sm:$0xff]
    %v288 = vld [vmem:[#allocation2 + $0x388] sm:$0xff]
    %v289 = vld [vmem:[#allocation2 + $0x390] sm:$0xff]
    %v290 = vld [vmem:[#allocation2 + $0x398] sm:$0xff]
    %v291 = vld [vmem:[#allocation2 + $0x3a0] sm:$0xff]
    %v292 = vld [vmem:[#allocation2 + $0x3a8] sm:$0xff]
    %v293 = vld [vmem:[#allocation2 + $0x3b0] sm:$0xff]
    %v294 = vld [vmem:[#allocation2 + $0x3b8] sm:$0xff]
    %v295 = vld [vmem:[#allocation2 + $0x3c0] sm:$0xff]
    %v296 = vld [vmem:[#allocation2 + $0x3c8] sm:$0xff]
    %v297 = vld [vmem:[#allocation2 + $0x3d0] sm:$0xff]
    %v298 = vld [vmem:[#allocation2 + $0x3d8] sm:$0xff]
    %v299 = vld [vmem:[#allocation2 + $0x3e0] sm:$0xff]
    %v300 = vld [vmem:[#allocation2 + $0x3e8] sm:$0xff]
    %v301 = vld [vmem:[#allocation2 + $0x3f0] sm:$0xff]
    %v302 = vld [vmem:[#allocation2 + $0x3f8] sm:$0xff]
    %v303 = vld [vmem:[#allocation2 + $0x400] sm:$0xff]
    %v304 = vld [vmem:[#allocation2 + $0x408] sm:$0xff]
    %v305 = vld [vmem:[#allocation2 + $0x410] sm:$0xff]
    %v306 = vld [vmem:[#allocation2 + $0x418] sm:$0xff]
    %v307 = vld [vmem:[#allocation2 + $0x420] sm:$0xff]
    %v308 = vld [vmem:[#allocation2 + $0x428] sm:$0xff]
    %v309 = vld [vmem:[#allocation2 + $0x430] sm:$0xff]
    %v310 = vld [vmem:[#allocation2 + $0x438] sm:$0xff]
    %v311 = vld [vmem:[#allocation2 + $0x440] sm:$0xff]
    %v312 = vld [vmem:[#allocation2 + $0x448] sm:$0xff]
    %v313 = vld [vmem:[#allocation2 + $0x450] sm:$0xff]
    %v314 = vld [vmem:[#allocation2 + $0x458] sm:$0xff]
    %v315 = vld [vmem:[#allocation2 + $0x460] sm:$0xff]
    %v316 = vld [vmem:[#allocation2 + $0x468] sm:$0xff]
    %v317 = vld [vmem:[#allocation2 + $0x470] sm:$0xff]
    %v318 = vld [vmem:[#allocation2 + $0x478] sm:$0xff]
    %v319 = vld [vmem:[#allocation2 + $0x480] sm:$0xff]
    %v320 = vld [vmem:[#allocation2 + $0x488] sm:$0xff]
    %v321 = vld [vmem:[#allocation2 + $0x490] sm:$0xff]
    %v322 = vld [vmem:[#allocation2 + $0x498] sm:$0xff]
    %v323 = vld [vmem:[#allocation2 + $0x4a0] sm:$0xff]
    %v324 = vld [vmem:[#allocation2 + $0x4a8] sm:$0xff]
    %v325 = vld [vmem:[#allocation2 + $0x4b0] sm:$0xff]
    %v326 = vld [vmem:[#allocation2 + $0x4b8] sm:$0xff]
    %v327 = vld [vmem:[#allocation2 + $0x4c0] sm:$0xff]
    %v328 = vld [vmem:[#allocation2 + $0x4c8] sm:$0xff]
    %v329 = vld [vmem:[#allocation2 + $0x4d0] sm:$0xff]
    %v330 = vld [vmem:[#allocation2 + $0x4d8] sm:$0xff]
    %v331 = vld [vmem:[#allocation2 + $0x4e0] sm:$0xff]
    %v332 = vld [vmem:[#allocation2 + $0x4e8] sm:$0xff]
    %v333 = vld [vmem:[#allocation2 + $0x4f0] sm:$0xff]
    %v334 = vld [vmem:[#allocation2 + $0x4f8] sm:$0xff]
    %v335 = vld [vmem:[#allocation2 + $0x500] sm:$0xff]
    %v336 = vld [vmem:[#allocation2 + $0x508] sm:$0xff]
    %v337 = vld [vmem:[#allocation2 + $0x510] sm:$0xff]
    %v338 = vld [vmem:[#allocation2 + $0x518] sm:$0xff]
    %v339 = vld [vmem:[#allocation2 + $0x520] sm:$0xff]
    %v340 = vld [vmem:[#allocation2 + $0x528] sm:$0xff]
    %v341 = vld [vmem:[#allocation2 + $0x530] sm:$0xff]
    %v342 = vld [vmem:[#allocation2 + $0x538] sm:$0xff]
    %v343 = vld [vmem:[#allocation2 + $0x540] sm:$0xff]
    %v344 = vld [vmem:[#allocation2 + $0x548] sm:$0xff]
    %v345 = vld [vmem:[#allocation2 + $0x550] sm:$0xff]
    %v346 = vld [vmem:[#allocation2 + $0x558] sm:$0xff]
    %v347 = vld [vmem:[#allocation2 + $0x560] sm:$0xff]
    %v348 = vld [vmem:[#allocation2 + $0x568] sm:$0xff]
    %v349 = vld [vmem:[#allocation2 + $0x570] sm:$0xff]
    %v350 = vld [vmem:[#allocation2 + $0x578] sm:$0xff]
    %v351 = vld [vmem:[#allocation2 + $0x580] sm:$0xff]
    %v352 = vld [vmem:[#allocation2 + $0x588] sm:$0xff]
    %v353 = vld [vmem:[#allocation2 + $0x590] sm:$0xff]
    %v354 = vld [vmem:[#allocation2 + $0x598] sm:$0xff]
    %v355 = vld [vmem:[#allocation2 + $0x5a0] sm:$0xff]
    %v356 = vld [vmem:[#allocation2 + $0x5a8] sm:$0xff]
    %v357 = vld [vmem:[#allocation2 + $0x5b0] sm:$0xff]
    %v358 = vld [vmem:[#allocation2 + $0x5b8] sm:$0xff]
    %v359 = vld [vmem:[#allocation2 + $0x5c0] sm:$0xff]
    %v360 = vld [vmem:[#allocation2 + $0x5c8] sm:$0xff]
    %v361 = vld [vmem:[#allocation2 + $0x5d0] sm:$0xff]
    %v362 = vld [vmem:[#allocation2 + $0x5d8] sm:$0xff]
    %v363 = vld [vmem:[#allocation2 + $0x5e0] sm:$0xff]
    %v364 = vld [vmem:[#allocation2 + $0x5e8] sm:$0xff]
    %v365 = vld [vmem:[#allocation2 + $0x5f0] sm:$0xff]
    %v366 = vld [vmem:[#allocation2 + $0x5f8] sm:$0xff]
    %v367 = vld [vmem:[#allocation2 + $0x600] sm:$0xff]
    %v368 = vld [vmem:[#allocation2 + $0x608] sm:$0xff]
    %v369 = vld [vmem:[#allocation2 + $0x610] sm:$0xff]
    %v370 = vld [vmem:[#allocation2 + $0x618] sm:$0xff]
    %v371 = vld [vmem:[#allocation2 + $0x620] sm:$0xff]
    %v372 = vld [vmem:[#allocation2 + $0x628] sm:$0xff]
    %v373 = vld [vmem:[#allocation2 + $0x630] sm:$0xff]
    %v374 = vld [vmem:[#allocation2 + $0x638] sm:$0xff]
    %v375 = vld [vmem:[#allocation2 + $0x640] sm:$0xff]
    %v376 = vld [vmem:[#allocation2 + $0x648] sm:$0xff]
    %v377 = vld [vmem:[#allocation2 + $0x650] sm:$0xff]
    %v378 = vld [vmem:[#allocation2 + $0x658] sm:$0xff]
    %v379 = vld [vmem:[#allocation2 + $0x660] sm:$0xff]
    %v380 = vld [vmem:[#allocation2 + $0x668] sm:$0xff]
    %v381 = vld [vmem:[#allocation2 + $0x670] sm:$0xff]
    %v382 = vld [vmem:[#allocation2 + $0x678] sm:$0xff]
    %v383 = vld [vmem:[#allocation2 + $0x680] sm:$0xff]
    %v384 = vld [vmem:[#allocation2 + $0x688] sm:$0xff]
    %v385 = vld [vmem:[#allocation2 + $0x690] sm:$0xff]
    %v386 = vld [vmem:[#allocation2 + $0x698] sm:$0xff]
    %v387 = vld [vmem:[#allocation2 + $0x6a0] sm:$0xff]
    %v388 = vld [vmem:[#allocation2 + $0x6a8] sm:$0xff]
    %v389 = vld [vmem:[#allocation2 + $0x6b0] sm:$0xff]
    %v390 = vld [vmem:[#allocation2 + $0x6b8] sm:$0xff]
    %v391 = vld [vmem:[#allocation2 + $0x6c0] sm:$0xff]
    %v392 = vld [vmem:[#allocation2 + $0x6c8] sm:$0xff]
    %v393 = vld [vmem:[#allocation2 + $0x6d0] sm:$0xff]
    %v394 = vld [vmem:[#allocation2 + $0x6d8] sm:$0xff]
    %v395 = vld [vmem:[#allocation2 + $0x6e0] sm:$0xff]
    %v396 = vld [vmem:[#allocation2 + $0x6e8] sm:$0xff]
    %v397 = vld [vmem:[#allocation2 + $0x6f0] sm:$0xff]
    %v398 = vld [vmem:[#allocation2 + $0x6f8] sm:$0xff]
    %v399 = vld [vmem:[#allocation2 + $0x700] sm:$0xff]
    %v400 = vld [vmem:[#allocation2 + $0x708] sm:$0xff]
    %v401 = vld [vmem:[#allocation2 + $0x710] sm:$0xff]
    %v402 = vld [vmem:[#allocation2 + $0x718] sm:$0xff]
    %v403 = vld [vmem:[#allocation2 + $0x720] sm:$0xff]
    %v404 = vld [vmem:[#allocation2 + $0x728] sm:$0xff]
    %v405 = vld [vmem:[#allocation2 + $0x730] sm:$0xff]
    %v406 = vld [vmem:[#allocation2 + $0x738] sm:$0xff]
    %v407 = vld [vmem:[#allocation2 + $0x740] sm:$0xff]
    %v408 = vld [vmem:[#allocation2 + $0x748] sm:$0xff]
    %v409 = vld [vmem:[#allocation2 + $0x750] sm:$0xff]
    %v410 = vld [vmem:[#allocation2 + $0x758] sm:$0xff]
    %v411 = vld [vmem:[#allocation2 + $0x760] sm:$0xff]
    %v412 = vld [vmem:[#allocation2 + $0x768] sm:$0xff]
    %v413 = vld [vmem:[#allocation2 + $0x770] sm:$0xff]
    %v414 = vld [vmem:[#allocation2 + $0x778] sm:$0xff]
    %v415 = vld [vmem:[#allocation2 + $0x780] sm:$0xff]
    %v416 = vld [vmem:[#allocation2 + $0x788] sm:$0xff]
    %v417 = vld [vmem:[#allocation2 + $0x790] sm:$0xff]
    %v418 = vld [vmem:[#allocation2 + $0x798] sm:$0xff]
    %v419 = vld [vmem:[#allocation2 + $0x7a0] sm:$0xff]
    %v420 = vld [vmem:[#allocation2 + $0x7a8] sm:$0xff]
    %v421 = vld [vmem:[#allocation2 + $0x7b0] sm:$0xff]
    %v422 = vld [vmem:[#allocation2 + $0x7b8] sm:$0xff]
    %v423 = vld [vmem:[#allocation2 + $0x7c0] sm:$0xff]
    %v424 = vld [vmem:[#allocation2 + $0x7c8] sm:$0xff]
    %v425 = vld [vmem:[#allocation2 + $0x7d0] sm:$0xff]
    %v426 = vld [vmem:[#allocation2 + $0x7d8] sm:$0xff]
    %v427 = vld [vmem:[#allocation2 + $0x7e0] sm:$0xff]
    %v428 = vld [vmem:[#allocation2 + $0x7e8] sm:$0xff]
    %v429 = vld [vmem:[#allocation2 + $0x7f0] sm:$0xff]
    %v430 = vld [vmem:[#allocation2 + $0x7f8] sm:$0xff]
    %v431 = vld [vmem:[#allocation2 + $0x800] sm:$0xff]
    %v432 = vld [vmem:[#allocation2 + $0x808] sm:$0xff]
    %v433 = vld [vmem:[#allocation2 + $0x810] sm:$0xff]
    %v434 = vld [vmem:[#allocation2 + $0x818] sm:$0xff]
    %v435 = vld [vmem:[#allocation2 + $0x820] sm:$0xff]
    %v436 = vld [vmem:[#allocation2 + $0x828] sm:$0xff]
    %v437 = vld [vmem:[#allocation2 + $0x830] sm:$0xff]
    %v438 = vld [vmem:[#allocation2 + $0x838] sm:$0xff]
    %v439 = vld [vmem:[#allocation2 + $0x840] sm:$0xff]
    %v440 = vld [vmem:[#allocation2 + $0x848] sm:$0xff]
    %v441 = vld [vmem:[#allocation2 + $0x850] sm:$0xff]
    %v442 = vld [vmem:[#allocation2 + $0x858] sm:$0xff]
    %v443 = vld [vmem:[#allocation2 + $0x860] sm:$0xff]
    %v444 = vld [vmem:[#allocation2 + $0x868] sm:$0xff]
    %v445 = vld [vmem:[#allocation2 + $0x870] sm:$0xff]
    %v446 = vld [vmem:[#allocation2 + $0x878] sm:$0xff]
    %v447 = vld [vmem:[#allocation2 + $0x880] sm:$0xff]
    %v448 = vld [vmem:[#allocation2 + $0x888] sm:$0xff]
    %v449 = vld [vmem:[#allocation2 + $0x890] sm:$0xff]
    %v450 = vld [vmem:[#allocation2 + $0x898] sm:$0xff]
    %v451 = vld [vmem:[#allocation2 + $0x8a0] sm:$0xff]
    %v452 = vld [vmem:[#allocation2 + $0x8a8] sm:$0xff]
    %v453 = vld [vmem:[#allocation2 + $0x8b0] sm:$0xff]
    %v454 = vld [vmem:[#allocation2 + $0x8b8] sm:$0xff]
    %v455 = vld [vmem:[#allocation2 + $0x8c0] sm:$0xff]
    %v456 = vld [vmem:[#allocation2 + $0x8c8] sm:$0xff]
    %v457 = vld [vmem:[#allocation2 + $0x8d0] sm:$0xff]
    %v458 = vld [vmem:[#allocation2 + $0x8d8] sm:$0xff]
    %v459 = vld [vmem:[#allocation2 + $0x8e0] sm:$0xff]
    %v460 = vld [vmem:[#allocation2 + $0x8e8] sm:$0xff]
    %v461 = vld [vmem:[#allocation2 + $0x8f0] sm:$0xff]
    %v462 = vld [vmem:[#allocation2 + $0x8f8] sm:$0xff]
    %v463 = vld [vmem:[#allocation2 + $0x900] sm:$0xff]
    %v464 = vld [vmem:[#allocation2 + $0x908] sm:$0xff]
    %v465 = vld [vmem:[#allocation2 + $0x910] sm:$0xff]
    %v466 = vld [vmem:[#allocation2 + $0x918] sm:$0xff]
    %v467 = vld [vmem:[#allocation2 + $0x920] sm:$0xff]
    %v468 = vld [vmem:[#allocation2 + $0x928] sm:$0xff]
    %v469 = vld [vmem:[#allocation2 + $0x930] sm:$0xff]
    %v470 = vld [vmem:[#allocation2 + $0x938] sm:$0xff]
    %v471 = vld [vmem:[#allocation2 + $0x940] sm:$0xff]
    %v472 = vld [vmem:[#allocation2 + $0x948] sm:$0xff]
    %v473 = vld [vmem:[#allocation2 + $0x950] sm:$0xff]
    %v474 = vld [vmem:[#allocation2 + $0x958] sm:$0xff]
    %v475 = vld [vmem:[#allocation2 + $0x960] sm:$0xff]
    %v476 = vld [vmem:[#allocation2 + $0x968] sm:$0xff]
    %v477 = vld [vmem:[#allocation2 + $0x970] sm:$0xff]
    %v478 = vld [vmem:[#allocation2 + $0x978] sm:$0xff]
    %v479 = vld [vmem:[#allocation2 + $0x980] sm:$0xff]
    %v480 = vld [vmem:[#allocation2 + $0x988] sm:$0xff]
    %v481 = vld [vmem:[#allocation2 + $0x990] sm:$0xff]
    %v482 = vld [vmem:[#allocation2 + $0x998] sm:$0xff]
    %v483 = vld [vmem:[#allocation2 + $0x9a0] sm:$0xff]
    %v484 = vld [vmem:[#allocation2 + $0x9a8] sm:$0xff]
    %v485 = vld [vmem:[#allocation2 + $0x9b0] sm:$0xff]
    %v486 = vld [vmem:[#allocation2 + $0x9b8] sm:$0xff]
    %v487 = vld [vmem:[#allocation2 + $0x9c0] sm:$0xff]
    %v488 = vld [vmem:[#allocation2 + $0x9c8] sm:$0xff]
    %v489 = vld [vmem:[#allocation2 + $0x9d0] sm:$0xff]
    %v490 = vld [vmem:[#allocation2 + $0x9d8] sm:$0xff]
    %v491 = vld [vmem:[#allocation2 + $0x9e0] sm:$0xff]
    %v492 = vld [vmem:[#allocation2 + $0x9e8] sm:$0xff]
    %v493 = vld [vmem:[#allocation2 + $0x9f0] sm:$0xff]
    %v494 = vld [vmem:[#allocation2 + $0x9f8] sm:$0xff]
    %v495 = vld [vmem:[#allocation2 + $0xa00] sm:$0xff]
    %v496 = vld [vmem:[#allocation2 + $0xa08] sm:$0xff]
    %v497 = vld [vmem:[#allocation2 + $0xa10] sm:$0xff]
    %v498 = vld [vmem:[#allocation2 + $0xa18] sm:$0xff]
    %v499 = vld [vmem:[#allocation2 + $0xa20] sm:$0xff]
    %v500 = vld [vmem:[#allocation2 + $0xa28] sm:$0xff]
    %v501 = vld [vmem:[#allocation2 + $0xa30] sm:$0xff]
    %v502 = vld [vmem:[#allocation2 + $0xa38] sm:$0xff]
    %v503 = vld [vmem:[#allocation2 + $0xa40] sm:$0xff]
    %v504 = vld [vmem:[#allocation2 + $0xa48] sm:$0xff]
    %v505 = vld [vmem:[#allocation2 + $0xa50] sm:$0xff]
    %v506 = vld [vmem:[#allocation2 + $0xa58] sm:$0xff]
    %v507 = vld [vmem:[#allocation2 + $0xa60] sm:$0xff]
    %v508 = vld [vmem:[#allocation2 + $0xa68] sm:$0xff]
    %v509 = vld [vmem:[#allocation2 + $0xa70] sm:$0xff]
    %v510 = vld [vmem:[#allocation2 + $0xa78] sm:$0xff]
    %v511 = vld [vmem:[#allocation2 + $0xa80] sm:$0xff]
    %v512 = vld [vmem:[#allocation2 + $0xa88] sm:$0xff]
    %v513 = vld [vmem:[#allocation2 + $0xa90] sm:$0xff]
    %v514 = vld [vmem:[#allocation2 + $0xa98] sm:$0xff]
    %v515 = vld [vmem:[#allocation2 + $0xaa0] sm:$0xff]
    %v516 = vld [vmem:[#allocation2 + $0xaa8] sm:$0xff]
    %v517 = vld [vmem:[#allocation2 + $0xab0] sm:$0xff]
    %v518 = vld [vmem:[#allocation2 + $0xab8] sm:$0xff]
    %v519 = vld [vmem:[#allocation2 + $0xac0] sm:$0xff]
    %v520 = vld [vmem:[#allocation2 + $0xac8] sm:$0xff]
    %v521 = vld [vmem:[#allocation2 + $0xad0] sm:$0xff]
    %v522 = vld [vmem:[#allocation2 + $0xad8] sm:$0xff]
    %v523 = vld [vmem:[#allocation2 + $0xae0] sm:$0xff]
    %v524 = vld [vmem:[#allocation2 + $0xae8] sm:$0xff]
    %v525 = vld [vmem:[#allocation2 + $0xaf0] sm:$0xff]
    %v526 = vld [vmem:[#allocation2 + $0xaf8] sm:$0xff]
    %v527 = vld [vmem:[#allocation2 + $0xb00] sm:$0xff]
    %v528 = vld [vmem:[#allocation2 + $0xb08] sm:$0xff]
    %v529 = vld [vmem:[#allocation2 + $0xb10] sm:$0xff]
    %v530 = vld [vmem:[#allocation2 + $0xb18] sm:$0xff]
    %v531 = vld [vmem:[#allocation2 + $0xb20] sm:$0xff]
    %v532 = vld [vmem:[#allocation2 + $0xb28] sm:$0xff]
    %v533 = vld [vmem:[#allocation2 + $0xb30] sm:$0xff]
    %v534 = vld [vmem:[#allocation2 + $0xb38] sm:$0xff]
    %v535 = vld [vmem:[#allocation2 + $0xb40] sm:$0xff]
    %v536 = vld [vmem:[#allocation2 + $0xb48] sm:$0xff]
    %v537 = vld [vmem:[#allocation2 + $0xb50] sm:$0xff]
    %v538 = vld [vmem:[#allocation2 + $0xb58] sm:$0xff]
    %v539 = vld [vmem:[#allocation2 + $0xb60] sm:$0xff]
    %v540 = vld [vmem:[#allocation2 + $0xb68] sm:$0xff]
    %v541 = vld [vmem:[#allocation2 + $0xb70] sm:$0xff]
    %v542 = vld [vmem:[#allocation2 + $0xb78] sm:$0xff]
    %v543 = vld [vmem:[#allocation2 + $0xb80] sm:$0xff]
    %v544 = vld [vmem:[#allocation2 + $0xb88] sm:$0xff]
    %v545 = vld [vmem:[#allocation2 + $0xb90] sm:$0xff]
    %v546 = vld [vmem:[#allocation2 + $0xb98] sm:$0xff]
    %v547 = vld [vmem:[#allocation2 + $0xba0] sm:$0xff]
    %v548 = vld [vmem:[#allocation2 + $0xba8] sm:$0xff]
    %v549 = vld [vmem:[#allocation2 + $0xbb0] sm:$0xff]
    %v550 = vld [vmem:[#allocation2 + $0xbb8] sm:$0xff]
    %v551 = vld [vmem:[#allocation2 + $0xbc0] sm:$0xff]
    %v552 = vld [vmem:[#allocation2 + $0xbc8] sm:$0xff]
    %v553 = vld [vmem:[#allocation2 + $0xbd0] sm:$0xff]
    %v554 = vld [vmem:[#allocation2 + $0xbd8] sm:$0xff]
    %v555 = vld [vmem:[#allocation2 + $0xbe0] sm:$0xff]
    %v556 = vld [vmem:[#allocation2 + $0xbe8] sm:$0xff]
    %v557 = vld [vmem:[#allocation2 + $0xbf0] sm:$0xff]
    %v558 = vld [vmem:[#allocation2 + $0xbf8] sm:$0xff]
    %v559 = vld [vmem:[#allocation2 + $0xc00] sm:$0xff]
    %v560 = vld [vmem:[#allocation2 + $0xc08] sm:$0xff]
    %v561 = vld [vmem:[#allocation2 + $0xc10] sm:$0xff]
    %v562 = vld [vmem:[#allocation2 + $0xc18] sm:$0xff]
    %v563 = vld [vmem:[#allocation2 + $0xc20] sm:$0xff]
    %v564 = vld [vmem:[#allocation2 + $0xc28] sm:$0xff]
    %v565 = vld [vmem:[#allocation2 + $0xc30] sm:$0xff]
    %v566 = vld [vmem:[#allocation2 + $0xc38] sm:$0xff]
    %v567 = vld [vmem:[#allocation2 + $0xc40] sm:$0xff]
    %v568 = vld [vmem:[#allocation2 + $0xc48] sm:$0xff]
    %v569 = vld [vmem:[#allocation2 + $0xc50] sm:$0xff]
    %v570 = vld [vmem:[#allocation2 + $0xc58] sm:$0xff]
    %v571 = vld [vmem:[#allocation2 + $0xc60] sm:$0xff]
    %v572 = vld [vmem:[#allocation2 + $0xc68] sm:$0xff]
    %v573 = vld [vmem:[#allocation2 + $0xc70] sm:$0xff]
    %v574 = vld [vmem:[#allocation2 + $0xc78] sm:$0xff]
    %v575 = vld [vmem:[#allocation2 + $0xc80] sm:$0xff]
    %v576 = vld [vmem:[#allocation2 + $0xc88] sm:$0xff]
    %v577 = vld [vmem:[#allocation2 + $0xc90] sm:$0xff]
    %v578 = vld [vmem:[#allocation2 + $0xc98] sm:$0xff]
    %v579 = vld [vmem:[#allocation2 + $0xca0] sm:$0xff]
    %v580 = vld [vmem:[#allocation2 + $0xca8] sm:$0xff]
    %v581 = vld [vmem:[#allocation2 + $0xcb0] sm:$0xff]
    %v582 = vld [vmem:[#allocation2 + $0xcb8] sm:$0xff]
    %v583 = vld [vmem:[#allocation2 + $0xcc0] sm:$0xff]
    %v584 = vld [vmem:[#allocation2 + $0xcc8] sm:$0xff]
    %v585 = vld [vmem:[#allocation2 + $0xcd0] sm:$0xff]
    %v586 = vld [vmem:[#allocation2 + $0xcd8] sm:$0xff]
    %v587 = vld [vmem:[#allocation2 + $0xce0] sm:$0xff]
    %v588 = vld [vmem:[#allocation2 + $0xce8] sm:$0xff]
    %v589 = vld [vmem:[#allocation2 + $0xcf0] sm:$0xff]
    %v590 = vld [vmem:[#allocation2 + $0xcf8] sm:$0xff]
    %v591 = vld [vmem:[#allocation2 + $0xd00] sm:$0xff]
    %v592 = vld [vmem:[#allocation2 + $0xd08] sm:$0xff]
    %v593 = vld [vmem:[#allocation2 + $0xd10] sm:$0xff]
    %v594 = vld [vmem:[#allocation2 + $0xd18] sm:$0xff]
    %v595 = vld [vmem:[#allocation2 + $0xd20] sm:$0xff]
    %v596 = vld [vmem:[#allocation2 + $0xd28] sm:$0xff]
    %v597 = vld [vmem:[#allocation2 + $0xd30] sm:$0xff]
    %v598 = vld [vmem:[#allocation2 + $0xd38] sm:$0xff]
    %v599 = vld [vmem:[#allocation2 + $0xd40] sm:$0xff]
    %v600 = vld [vmem:[#allocation2 + $0xd48] sm:$0xff]
    %v601 = vld [vmem:[#allocation2 + $0xd50] sm:$0xff]
    %v602 = vld [vmem:[#allocation2 + $0xd58] sm:$0xff]
    %v603 = vld [vmem:[#allocation2 + $0xd60] sm:$0xff]
    %v604 = vld [vmem:[#allocation2 + $0xd68] sm:$0xff]
    %v605 = vld [vmem:[#allocation2 + $0xd70] sm:$0xff]
    %v606 = vld [vmem:[#allocation2 + $0xd78] sm:$0xff]
    %v607 = vld [vmem:[#allocation2 + $0xd80] sm:$0xff]
    %v608 = vld [vmem:[#allocation2 + $0xd88] sm:$0xff]
    %v609 = vld [vmem:[#allocation2 + $0xd90] sm:$0xff]
    %v610 = vld [vmem:[#allocation2 + $0xd98] sm:$0xff]
    %v611 = vld [vmem:[#allocation2 + $0xda0] sm:$0xff]
    %v612 = vld [vmem:[#allocation2 + $0xda8] sm:$0xff]
    %v613 = vld [vmem:[#allocation2 + $0xdb0] sm:$0xff]
    %v614 = vld [vmem:[#allocation2 + $0xdb8] sm:$0xff]
    %v615 = vld [vmem:[#allocation2 + $0xdc0] sm:$0xff]
    %v616 = vld [vmem:[#allocation2 + $0xdc8] sm:$0xff]
    %v617 = vld [vmem:[#allocation2 + $0xdd0] sm:$0xff]
    %v618 = vld [vmem:[#allocation2 + $0xdd8] sm:$0xff]
    %v619 = vld [vmem:[#allocation2 + $0xde0] sm:$0xff]
    %v620 = vld [vmem:[#allocation2 + $0xde8] sm:$0xff]
    %v621 = vld [vmem:[#allocation2 + $0xdf0] sm:$0xff]
    %v622 = vld [vmem:[#allocation2 + $0xdf8] sm:$0xff]
    %v623 = vld [vmem:[#allocation2 + $0xe00] sm:$0xff]
    %v624 = vld [vmem:[#allocation2 + $0xe08] sm:$0xff]
    %v625 = vld [vmem:[#allocation2 + $0xe10] sm:$0xff]
    %v626 = vld [vmem:[#allocation2 + $0xe18] sm:$0xff]
    %v627 = vld [vmem:[#allocation2 + $0xe20] sm:$0xff]
    %v628 = vld [vmem:[#allocation2 + $0xe28] sm:$0xff]
    %v629 = vld [vmem:[#allocation2 + $0xe30] sm:$0xff]
    %v630 = vld [vmem:[#allocation2 + $0xe38] sm:$0xff]
    %v631 = vld [vmem:[#allocation2 + $0xe40] sm:$0xff]
    %v632 = vld [vmem:[#allocation2 + $0xe48] sm:$0xff]
    %v633 = vld [vmem:[#allocation2 + $0xe50] sm:$0xff]
    %v634 = vld [vmem:[#allocation2 + $0xe58] sm:$0xff]
    %v635 = vld [vmem:[#allocation2 + $0xe60] sm:$0xff]
    %v636 = vld [vmem:[#allocation2 + $0xe68] sm:$0xff]
    %v637 = vld [vmem:[#allocation2 + $0xe70] sm:$0xff]
    %v638 = vld [vmem:[#allocation2 + $0xe78] sm:$0xff]
    %v639 = vld [vmem:[#allocation2 + $0xe80] sm:$0xff]
    %v640 = vld [vmem:[#allocation2 + $0xe88] sm:$0xff]
    %v641 = vld [vmem:[#allocation2 + $0xe90] sm:$0xff]
    %v642 = vld [vmem:[#allocation2 + $0xe98] sm:$0xff]
    %v643 = vld [vmem:[#allocation2 + $0xea0] sm:$0xff]
    %v644 = vld [vmem:[#allocation2 + $0xea8] sm:$0xff]
    %v645 = vld [vmem:[#allocation2 + $0xeb0] sm:$0xff]
    %v646 = vld [vmem:[#allocation2 + $0xeb8] sm:$0xff]
    %v647 = vld [vmem:[#allocation2 + $0xec0] sm:$0xff]
    %v648 = vld [vmem:[#allocation2 + $0xec8] sm:$0xff]
    %v649 = vld [vmem:[#allocation2 + $0xed0] sm:$0xff]
    %v650 = vld [vmem:[#allocation2 + $0xed8] sm:$0xff]
    %v651 = vld [vmem:[#allocation2 + $0xee0] sm:$0xff]
    %v652 = vld [vmem:[#allocation2 + $0xee8] sm:$0xff]
    %v653 = vld [vmem:[#allocation2 + $0xef0] sm:$0xff]
    %v654 = vld [vmem:[#allocation2 + $0xef8] sm:$0xff]
    %v655 = vld [vmem:[#allocation2 + $0xf00] sm:$0xff]
    %v656 = vld [vmem:[#allocation2 + $0xf08] sm:$0xff]
    %v657 = vld [vmem:[#allocation2 + $0xf10] sm:$0xff]
    %v658 = vld [vmem:[#allocation2 + $0xf18] sm:$0xff]
    %v659 = vld [vmem:[#allocation2 + $0xf20] sm:$0xff]
    %v660 = vld [vmem:[#allocation2 + $0xf28] sm:$0xff]
    %v661 = vld [vmem:[#allocation2 + $0xf30] sm:$0xff]
    %v662 = vld [vmem:[#allocation2 + $0xf38] sm:$0xff]
    %v663 = vld [vmem:[#allocation2 + $0xf40] sm:$0xff]
    %v664 = vld [vmem:[#allocation2 + $0xf48] sm:$0xff]
    %v665 = vld [vmem:[#allocation2 + $0xf50] sm:$0xff]
    %v666 = vld [vmem:[#allocation2 + $0xf58] sm:$0xff]
    %v667 = vld [vmem:[#allocation2 + $0xf60] sm:$0xff]
    %v668 = vld [vmem:[#allocation2 + $0xf68] sm:$0xff]
    %v669 = vld [vmem:[#allocation2 + $0xf70] sm:$0xff]
    %v670 = vld [vmem:[#allocation2 + $0xf78] sm:$0xff]
    %v671 = vld [vmem:[#allocation2 + $0xf80] sm:$0xff]
    %v672 = vld [vmem:[#allocation2 + $0xf88] sm:$0xff]
    %v673 = vld [vmem:[#allocation2 + $0xf90] sm:$0xff]
    %v674 = vld [vmem:[#allocation2 + $0xf98] sm:$0xff]
    %v675 = vld [vmem:[#allocation2 + $0xfa0] sm:$0xff]
    %v676 = vld [vmem:[#allocation2 + $0xfa8] sm:$0xff]
    %v677 = vld [vmem:[#allocation2 + $0xfb0] sm:$0xff]
    %v678 = vld [vmem:[#allocation2 + $0xfb8] sm:$0xff]
    %v679 = vld [vmem:[#allocation2 + $0xfc0] sm:$0xff]
    %v680 = vld [vmem:[#allocation2 + $0xfc8] sm:$0xff]
    %v681 = vld [vmem:[#allocation2 + $0xfd0] sm:$0xff]
    %v682 = vld [vmem:[#allocation2 + $0xfd8] sm:$0xff]
    %v683 = vld [vmem:[#allocation2 + $0xfe0] sm:$0xff]
    %v684 = vld [vmem:[#allocation2 + $0xfe8] sm:$0xff]
    %v685 = vld [vmem:[#allocation2 + $0xff0] sm:$0xff]
    %v686 = vld [vmem:[#allocation2 + $0xff8] sm:$0xff]
    %vm687 = vcmask 523264
    %v689 = vsel %vm687, %v174, 0
    %691 = vmatprep.subr.mxu0 %v176
    %692 = vmatpush1.msra.mxu0 %v175
    %693 = vmatprep.subr.mxu0 %v240
    %694 = vmatpush1.msra.mxu0 %v239
    %695 = vmatprep.subr.mxu0 %v304
    %696 = vmatpush1.msra.mxu0 %v303
    %697 = vmatprep.subr.mxu0 %v368
    %698 = vmatpush1.msra.mxu0 %v367
    %699 = vmatprep.subr.mxu0 %v432
    %700 = vmatpush1.msra.mxu0 %v431
    %701 = vmatprep.subr.mxu0 %v496
    %702 = vmatpush1.msra.mxu0 %v495
    %703 = vmatprep.subr.mxu0 %v560
    %704 = vmatpush1.msra.mxu0 %v559
    %705 = vmatprep.subr.mxu0 %v624
    %706 = vmatpush1.msra.mxu0 %v623
    %707 = vmatprep.subr.mxu0 0.0
    %708 = vmatpush1.msra.mxu0 0.0
    %709 = vmatprep.subr.mxu0 0.0
    %710 = vmatpush1.msra.mxu0 0.0
    %711 = vmatprep.subr.mxu0 0.0
    %712 = vmatpush1.msra.mxu0 0.0
    %713 = vmatprep.subr.mxu0 0.0
    %714 = vmatpush1.msra.mxu0 0.0
    %715 = vmatprep.subr.mxu0 0.0
    %716 = vmatpush1.msra.mxu0 0.0
    %717 = vmatprep.subr.mxu0 0.0
    %718 = vmatpush1.msra.mxu0 0.0
    %719 = vmatprep.subr.mxu0 0.0
    %720 = vmatpush1.msra.mxu0 0.0
    %721 = vmatprep.subr.mxu0 0.0
    %722 = vmatpush1.msra.mxu0 0.0
    %723 = vmatprep.subr.mxu0 0.0
    %724 = vmatpush1.msra.mxu0 0.0
    %725 = vmatprep.subr.mxu0 0.0
    %726 = vmatpush1.msra.mxu0 0.0
    %727 = vmatprep.subr.mxu0 0.0
    %728 = vmatpush1.msra.mxu0 0.0
    %729 = vmatprep.subr.mxu0 0.0
    %730 = vmatpush1.msra.mxu0 0.0
    %731 = vmatprep.subr.mxu0 0.0
    %732 = vmatpush1.msra.mxu0 0.0
    %733 = vmatprep.subr.mxu0 0.0
    %734 = vmatpush1.msra.mxu0 0.0
    %735 = vmatprep.subr.mxu0 0.0
    %736 = vmatpush1.msra.mxu0 0.0
    %737 = vmatprep.subr.mxu0 0.0
    %738 = vmatpush1.msra.mxu0 0.0
    %739 = vmatprep.subr.mxu0 0.0
    %740 = vmatpush1.msra.mxu0 0.0
    %741 = vmatprep.subr.mxu0 0.0
    %742 = vmatpush1.msra.mxu0 0.0
    %743 = vmatprep.subr.mxu0 0.0
    %744 = vmatpush1.msra.mxu0 0.0
    %745 = vmatprep.subr.mxu0 0.0
    %746 = vmatpush1.msra.mxu0 0.0
    %747 = vmatprep.subr.mxu0 0.0
    %748 = vmatpush1.msra.mxu0 0.0
    %749 = vmatprep.subr.mxu0 0.0
    %750 = vmatpush1.msra.mxu0 0.0
    %751 = vmatprep.subr.mxu0 0.0
    %752 = vmatpush1.msra.mxu0 0.0
    %753 = vmatprep.subr.mxu0 0.0
    %754 = vmatpush1.msra.mxu0 0.0
    %755 = vmatprep.mubr.f32.mxu0 0.0
    %756 = vmatmul.mubr.f32.gmra.mrb[0].mxu0 %v689
    %v757 = vpop.f32.mrb[0].mxu0
    %v758 = vadd.f32 0.0, %v757
    %v759 = vpop.f32.mrb[0].mxu0
    %v760 = vadd.f32 0.0, %v759
    %761 = vdwg.mxu0
    %762 = vmatprep.subr.mxu0 %v178
    %763 = vmatpush1.msra.mxu0 %v177
    %764 = vmatprep.subr.mxu0 %v242
    %765 = vmatpush1.msra.mxu0 %v241
    %766 = vmatprep.subr.mxu0 %v306
    %767 = vmatpush1.msra.mxu0 %v305
    %768 = vmatprep.subr.mxu0 %v370
    %769 = vmatpush1.msra.mxu0 %v369
    %770 = vmatprep.subr.mxu0 %v434
    %771 = vmatpush1.msra.mxu0 %v433
    %772 = vmatprep.subr.mxu0 %v498
    %773 = vmatpush1.msra.mxu0 %v497
    %774 = vmatprep.subr.mxu0 %v562
    %775 = vmatpush1.msra.mxu0 %v561
    %776 = vmatprep.subr.mxu0 %v626
    %777 = vmatpush1.msra.mxu0 %v625
    %778 = vmatprep.subr.mxu0 0.0
    %779 = vmatpush1.msra.mxu0 0.0
    %780 = vmatprep.subr.mxu0 0.0
    %781 = vmatpush1.msra.mxu0 0.0
    %782 = vmatprep.subr.mxu0 0.0
    %783 = vmatpush1.msra.mxu0 0.0
    %784 = vmatprep.subr.mxu0 0.0
    %785 = vmatpush1.msra.mxu0 0.0
    %786 = vmatprep.subr.mxu0 0.0
    %787 = vmatpush1.msra.mxu0 0.0
    %788 = vmatprep.subr.mxu0 0.0
    %789 = vmatpush1.msra.mxu0 0.0
    %790 = vmatprep.subr.mxu0 0.0
    %791 = vmatpush1.msra.mxu0 0.0
    %792 = vmatprep.subr.mxu0 0.0
    %793 = vmatpush1.msra.mxu0 0.0
    %794 = vmatprep.subr.mxu0 0.0
    %795 = vmatpush1.msra.mxu0 0.0
    %796 = vmatprep.subr.mxu0 0.0
    %797 = vmatpush1.msra.mxu0 0.0
    %798 = vmatprep.subr.mxu0 0.0
    %799 = vmatpush1.msra.mxu0 0.0
    %800 = vmatprep.subr.mxu0 0.0
    %801 = vmatpush1.msra.mxu0 0.0
    %802 = vmatprep.subr.mxu0 0.0
    %803 = vmatpush1.msra.mxu0 0.0
    %804 = vmatprep.subr.mxu0 0.0
    %805 = vmatpush1.msra.mxu0 0.0
    %806 = vmatprep.subr.mxu0 0.0
    %807 = vmatpush1.msra.mxu0 0.0
    %808 = vmatprep.subr.mxu0 0.0
    %809 = vmatpush1.msra.mxu0 0.0
    %810 = vmatprep.subr.mxu0 0.0
    %811 = vmatpush1.msra.mxu0 0.0
    %812 = vmatprep.subr.mxu0 0.0
    %813 = vmatpush1.msra.mxu0 0.0
    %814 = vmatprep.subr.mxu0 0.0
    %815 = vmatpush1.msra.mxu0 0.0
    %816 = vmatprep.subr.mxu0 0.0
    %817 = vmatpush1.msra.mxu0 0.0
    %818 = vmatprep.subr.mxu0 0.0
    %819 = vmatpush1.msra.mxu0 0.0
    %820 = vmatprep.subr.mxu0 0.0
    %821 = vmatpush1.msra.mxu0 0.0
    %822 = vmatprep.subr.mxu0 0.0
    %823 = vmatpush1.msra.mxu0 0.0
    %824 = vmatprep.subr.mxu0 0.0
    %825 = vmatpush1.msra.mxu0 0.0
    %826 = vmatprep.mubr.f32.mxu0 0.0
    %827 = vmatmul.mubr.f32.gmra.mrb[0].mxu0 %v689
    %v828 = vpop.f32.mrb[0].mxu0
    %v829 = vadd.f32 0.0, %v828
    %v830 = vpop.f32.mrb[0].mxu0
    %v831 = vadd.f32 0.0, %v830
    %832 = vdwg.mxu0
    %833 = vmatprep.subr.mxu0 %v180
    %834 = vmatpush1.msra.mxu0 %v179
    %835 = vmatprep.subr.mxu0 %v244
    %836 = vmatpush1.msra.mxu0 %v243
    %837 = vmatprep.subr.mxu0 %v308
    %838 = vmatpush1.msra.mxu0 %v307
    %839 = vmatprep.subr.mxu0 %v372
    %840 = vmatpush1.msra.mxu0 %v371
    %841 = vmatprep.subr.mxu0 %v436
    %842 = vmatpush1.msra.mxu0 %v435
    %843 = vmatprep.subr.mxu0 %v500
    %844 = vmatpush1.msra.mxu0 %v499
    %845 = vmatprep.subr.mxu0 %v564
    %846 = vmatpush1.msra.mxu0 %v563
    %847 = vmatprep.subr.mxu0 %v628
    %848 = vmatpush1.msra.mxu0 %v627
    %849 = vmatprep.subr.mxu0 0.0
    %850 = vmatpush1.msra.mxu0 0.0
    %851 = vmatprep.subr.mxu0 0.0
    %852 = vmatpush1.msra.mxu0 0.0
    %853 = vmatprep.subr.mxu0 0.0
    %854 = vmatpush1.msra.mxu0 0.0
    %855 = vmatprep.subr.mxu0 0.0
    %856 = vmatpush1.msra.mxu0 0.0
    %857 = vmatprep.subr.mxu0 0.0
    %858 = vmatpush1.msra.mxu0 0.0
    %859 = vmatprep.subr.mxu0 0.0
    %860 = vmatpush1.msra.mxu0 0.0
    %861 = vmatprep.subr.mxu0 0.0
    %862 = vmatpush1.msra.mxu0 0.0
    %863 = vmatprep.subr.mxu0 0.0
    %864 = vmatpush1.msra.mxu0 0.0
    %865 = vmatprep.subr.mxu0 0.0
    %866 = vmatpush1.msra.mxu0 0.0
    %867 = vmatprep.subr.mxu0 0.0
    %868 = vmatpush1.msra.mxu0 0.0
    %869 = vmatprep.subr.mxu0 0.0
    %870 = vmatpush1.msra.mxu0 0.0
    %871 = vmatprep.subr.mxu0 0.0
    %872 = vmatpush1.msra.mxu0 0.0
    %873 = vmatprep.subr.mxu0 0.0
    %874 = vmatpush1.msra.mxu0 0.0
    %875 = vmatprep.subr.mxu0 0.0
    %876 = vmatpush1.msra.mxu0 0.0
    %877 = vmatprep.subr.mxu0 0.0
    %878 = vmatpush1.msra.mxu0 0.0
    %879 = vmatprep.subr.mxu0 0.0
    %880 = vmatpush1.msra.mxu0 0.0
    %881 = vmatprep.subr.mxu0 0.0
    %882 = vmatpush1.msra.mxu0 0.0
    %883 = vmatprep.subr.mxu0 0.0
    %884 = vmatpush1.msra.mxu0 0.0
    %885 = vmatprep.subr.mxu0 0.0
    %886 = vmatpush1.msra.mxu0 0.0
    %887 = vmatprep.subr.mxu0 0.0
    %888 = vmatpush1.msra.mxu0 0.0
    %889 = vmatprep.subr.mxu0 0.0
    %890 = vmatpush1.msra.mxu0 0.0
    %891 = vmatprep.subr.mxu0 0.0
    %892 = vmatpush1.msra.mxu0 0.0
    %893 = vmatprep.subr.mxu0 0.0
    %894 = vmatpush1.msra.mxu0 0.0
    %895 = vmatprep.subr.mxu0 0.0
    %896 = vmatpush1.msra.mxu0 0.0
    %897 = vmatprep.mubr.f32.mxu0 0.0
    %898 = vmatmul.mubr.f32.gmra.mrb[0].mxu0 %v689
    %v899 = vpop.f32.mrb[0].mxu0
    %v900 = vadd.f32 0.0, %v899
    %v901 = vpop.f32.mrb[0].mxu0
    %v902 = vadd.f32 0.0, %v901
    %903 = vdwg.mxu0
    %904 = vmatprep.subr.mxu0 %v182
    %905 = vmatpush1.msra.mxu0 %v181
    %906 = vmatprep.subr.mxu0 %v246
    %907 = vmatpush1.msra.mxu0 %v245
    %908 = vmatprep.subr.mxu0 %v310
    %909 = vmatpush1.msra.mxu0 %v309
    %910 = vmatprep.subr.mxu0 %v374
    %911 = vmatpush1.msra.mxu0 %v373
    %912 = vmatprep.subr.mxu0 %v438
    %913 = vmatpush1.msra.mxu0 %v437
    %914 = vmatprep.subr.mxu0 %v502
    %915 = vmatpush1.msra.mxu0 %v501
    %916 = vmatprep.subr.mxu0 %v566
    %917 = vmatpush1.msra.mxu0 %v565
    %918 = vmatprep.subr.mxu0 %v630
    %919 = vmatpush1.msra.mxu0 %v629
    %920 = vmatprep.subr.mxu0 0.0
    %921 = vmatpush1.msra.mxu0 0.0
    %922 = vmatprep.subr.mxu0 0.0
    %923 = vmatpush1.msra.mxu0 0.0
    %924 = vmatprep.subr.mxu0 0.0
    %925 = vmatpush1.msra.mxu0 0.0
    %926 = vmatprep.subr.mxu0 0.0
    %927 = vmatpush1.msra.mxu0 0.0
    %928 = vmatprep.subr.mxu0 0.0
    %929 = vmatpush1.msra.mxu0 0.0
    %930 = vmatprep.subr.mxu0 0.0
    %931 = vmatpush1.msra.mxu0 0.0
    %932 = vmatprep.subr.mxu0 0.0
    %933 = vmatpush1.msra.mxu0 0.0
    %934 = vmatprep.subr.mxu0 0.0
    %935 = vmatpush1.msra.mxu0 0.0
    %936 = vmatprep.subr.mxu0 0.0
    %937 = vmatpush1.msra.mxu0 0.0
    %938 = vmatprep.subr.mxu0 0.0
    %939 = vmatpush1.msra.mxu0 0.0
    %940 = vmatprep.subr.mxu0 0.0
    %941 = vmatpush1.msra.mxu0 0.0
    %942 = vmatprep.subr.mxu0 0.0
    %943 = vmatpush1.msra.mxu0 0.0
    %944 = vmatprep.subr.mxu0 0.0
    %945 = vmatpush1.msra.mxu0 0.0
    %946 = vmatprep.subr.mxu0 0.0
    %947 = vmatpush1.msra.mxu0 0.0
    %948 = vmatprep.subr.mxu0 0.0
    %949 = vmatpush1.msra.mxu0 0.0
    %950 = vmatprep.subr.mxu0 0.0
    %951 = vmatpush1.msra.mxu0 0.0
    %952 = vmatprep.subr.mxu0 0.0
    %953 = vmatpush1.msra.mxu0 0.0
    %954 = vmatprep.subr.mxu0 0.0
    %955 = vmatpush1.msra.mxu0 0.0
    %956 = vmatprep.subr.mxu0 0.0
    %957 = vmatpush1.msra.mxu0 0.0
    %958 = vmatprep.subr.mxu0 0.0
    %959 = vmatpush1.msra.mxu0 0.0
    %960 = vmatprep.subr.mxu0 0.0
    %961 = vmatpush1.msra.mxu0 0.0
    %962 = vmatprep.subr.mxu0 0.0
    %963 = vmatpush1.msra.mxu0 0.0
    %964 = vmatprep.subr.mxu0 0.0
    %965 = vmatpush1.msra.mxu0 0.0
    %966 = vmatprep.subr.mxu0 0.0
    %967 = vmatpush1.msra.mxu0 0.0
    %968 = vmatprep.mubr.f32.mxu0 0.0
    %969 = vmatmul.mubr.f32.gmra.mrb[0].mxu0 %v689
    %v970 = vpop.f32.mrb[0].mxu0
    %v971 = vadd.f32 0.0, %v970
    %v972 = vpop.f32.mrb[0].mxu0
    %v973 = vadd.f32 0.0, %v972
    %974 = vdwg.mxu0
    %975 = vmatprep.subr.mxu0 %v184
    %976 = vmatpush1.msra.mxu0 %v183
    %977 = vmatprep.subr.mxu0 %v248
    %978 = vmatpush1.msra.mxu0 %v247
    %979 = vmatprep.subr.mxu0 %v312
    %980 = vmatpush1.msra.mxu0 %v311
    %981 = vmatprep.subr.mxu0 %v376
    %982 = vmatpush1.msra.mxu0 %v375
    %983 = vmatprep.subr.mxu0 %v440
    %984 = vmatpush1.msra.mxu0 %v439
    %985 = vmatprep.subr.mxu0 %v504
    %986 = vmatpush1.msra.mxu0 %v503
    %987 = vmatprep.subr.mxu0 %v568
    %988 = vmatpush1.msra.mxu0 %v567
    %989 = vmatprep.subr.mxu0 %v632
    %990 = vmatpush1.msra.mxu0 %v631
    %991 = vmatprep.subr.mxu0 0.0
    %992 = vmatpush1.msra.mxu0 0.0
    %993 = vmatprep.subr.mxu0 0.0
    %994 = vmatpush1.msra.mxu0 0.0
    %995 = vmatprep.subr.mxu0 0.0
    %996 = vmatpush1.msra.mxu0 0.0
    %997 = vmatprep.subr.mxu0 0.0
    %998 = vmatpush1.msra.mxu0 0.0
    %999 = vmatprep.subr.mxu0 0.0
    %1000 = vmatpush1.msra.mxu0 0.0
    %1001 = vmatprep.subr.mxu0 0.0
    %1002 = vmatpush1.msra.mxu0 0.0
    %1003 = vmatprep.subr.mxu0 0.0
    %1004 = vmatpush1.msra.mxu0 0.0
    %1005 = vmatprep.subr.mxu0 0.0
    %1006 = vmatpush1.msra.mxu0 0.0
    %1007 = vmatprep.subr.mxu0 0.0
    %1008 = vmatpush1.msra.mxu0 0.0
    %1009 = vmatprep.subr.mxu0 0.0
    %1010 = vmatpush1.msra.mxu0 0.0
    %1011 = vmatprep.subr.mxu0 0.0
    %1012 = vmatpush1.msra.mxu0 0.0
    %1013 = vmatprep.subr.mxu0 0.0
    %1014 = vmatpush1.msra.mxu0 0.0
    %1015 = vmatprep.subr.mxu0 0.0
    %1016 = vmatpush1.msra.mxu0 0.0
    %1017 = vmatprep.subr.mxu0 0.0
    %1018 = vmatpush1.msra.mxu0 0.0
    %1019 = vmatprep.subr.mxu0 0.0
    %1020 = vmatpush1.msra.mxu0 0.0
    %1021 = vmatprep.subr.mxu0 0.0
    %1022 = vmatpush1.msra.mxu0 0.0
    %1023 = vmatprep.subr.mxu0 0.0
    %1024 = vmatpush1.msra.mxu0 0.0
    %1025 = vmatprep.subr.mxu0 0.0
    %1026 = vmatpush1.msra.mxu0 0.0
    %1027 = vmatprep.subr.mxu0 0.0
    %1028 = vmatpush1.msra.mxu0 0.0
    %1029 = vmatprep.subr.mxu0 0.0
    %1030 = vmatpush1.msra.mxu0 0.0
    %1031 = vmatprep.subr.mxu0 0.0
    %1032 = vmatpush1.msra.mxu0 0.0
    %1033 = vmatprep.subr.mxu0 0.0
    %1034 = vmatpush1.msra.mxu0 0.0
    %1035 = vmatprep.subr.mxu0 0.0
    %1036 = vmatpush1.msra.mxu0 0.0
    %1037 = vmatprep.subr.mxu0 0.0
    %1038 = vmatpush1.msra.mxu0 0.0
    %1039 = vmatprep.mubr.f32.mxu0 0.0
    %1040 = vmatmul.mubr.f32.gmra.mrb[0].mxu0 %v689
    %v1041 = vpop.f32.mrb[0].mxu0
    %v1042 = vadd.f32 0.0, %v1041
    %v1043 = vpop.f32.mrb[0].mxu0
    %v1044 = vadd.f32 0.0, %v1043
    %1045 = vdwg.mxu0
    %1046 = vmatprep.subr.mxu0 %v186
    %1047 = vmatpush1.msra.mxu0 %v185
    %1048 = vmatprep.subr.mxu0 %v250
    %1049 = vmatpush1.msra.mxu0 %v249
    %1050 = vmatprep.subr.mxu0 %v314
    %1051 = vmatpush1.msra.mxu0 %v313
    %1052 = vmatprep.subr.mxu0 %v378
    %1053 = vmatpush1.msra.mxu0 %v377
    %1054 = vmatprep.subr.mxu0 %v442
    %1055 = vmatpush1.msra.mxu0 %v441
    %1056 = vmatprep.subr.mxu0 %v506
    %1057 = vmatpush1.msra.mxu0 %v505
    %1058 = vmatprep.subr.mxu0 %v570
    %1059 = vmatpush1.msra.mxu0 %v569
    %1060 = vmatprep.subr.mxu0 %v634
    %1061 = vmatpush1.msra.mxu0 %v633
    %1062 = vmatprep.subr.mxu0 0.0
    %1063 = vmatpush1.msra.mxu0 0.0
    %1064 = vmatprep.subr.mxu0 0.0
    %1065 = vmatpush1.msra.mxu0 0.0
    %1066 = vmatprep.subr.mxu0 0.0
    %1067 = vmatpush1.msra.mxu0 0.0
    %1068 = vmatprep.subr.mxu0 0.0
    %1069 = vmatpush1.msra.mxu0 0.0
    %1070 = vmatprep.subr.mxu0 0.0
    %1071 = vmatpush1.msra.mxu0 0.0
    %1072 = vmatprep.subr.mxu0 0.0
    %1073 = vmatpush1.msra.mxu0 0.0
    %1074 = vmatprep.subr.mxu0 0.0
    %1075 = vmatpush1.msra.mxu0 0.0
    %1076 = vmatprep.subr.mxu0 0.0
    %1077 = vmatpush1.msra.mxu0 0.0
    %1078 = vmatprep.subr.mxu0 0.0
    %1079 = vmatpush1.msra.mxu0 0.0
    %1080 = vmatprep.subr.mxu0 0.0
    %1081 = vmatpush1.msra.mxu0 0.0
    %1082 = vmatprep.subr.mxu0 0.0
    %1083 = vmatpush1.msra.mxu0 0.0
    %1084 = vmatprep.subr.mxu0 0.0
    %1085 = vmatpush1.msra.mxu0 0.0
    %1086 = vmatprep.subr.mxu0 0.0
    %1087 = vmatpush1.msra.mxu0 0.0
    %1088 = vmatprep.subr.mxu0 0.0
    %1089 = vmatpush1.msra.mxu0 0.0
    %1090 = vmatprep.subr.mxu0 0.0
    %1091 = vmatpush1.msra.mxu0 0.0
    %1092 = vmatprep.subr.mxu0 0.0
    %1093 = vmatpush1.msra.mxu0 0.0
    %1094 = vmatprep.subr.mxu0 0.0
    %1095 = vmatpush1.msra.mxu0 0.0
    %1096 = vmatprep.subr.mxu0 0.0
    %1097 = vmatpush1.msra.mxu0 0.0
    %1098 = vmatprep.subr.mxu0 0.0
    %1099 = vmatpush1.msra.mxu0 0.0
    %1100 = vmatprep.subr.mxu0 0.0
    %1101 = vmatpush1.msra.mxu0 0.0
    %1102 = vmatprep.subr.mxu0 0.0
    %1103 = vmatpush1.msra.mxu0 0.0
    %1104 = vmatprep.subr.mxu0 0.0
    %1105 = vmatpush1.msra.mxu0 0.0
    %1106 = vmatprep.subr.mxu0 0.0
    %1107 = vmatpush1.msra.mxu0 0.0
    %1108 = vmatprep.subr.mxu0 0.0
    %1109 = vmatpush1.msra.mxu0 0.0
    %1110 = vmatprep.mubr.f32.mxu0 0.0
    %1111 = vmatmul.mubr.f32.gmra.mrb[0].mxu0 %v689
    %v1112 = vpop.f32.mrb[0].mxu0
    %v1113 = vadd.f32 0.0, %v1112
    %v1114 = vpop.f32.mrb[0].mxu0
    %v1115 = vadd.f32 0.0, %v1114
    %1116 = vdwg.mxu0
    %1117 = vmatprep.subr.mxu0 %v188
    %1118 = vmatpush1.msra.mxu0 %v187
    %1119 = vmatprep.subr.mxu0 %v252
    %1120 = vmatpush1.msra.mxu0 %v251
    %1121 = vmatprep.subr.mxu0 %v316
    %1122 = vmatpush1.msra.mxu0 %v315
    %1123 = vmatprep.subr.mxu0 %v380
    %1124 = vmatpush1.msra.mxu0 %v379
    %1125 = vmatprep.subr.mxu0 %v444
    %1126 = vmatpush1.msra.mxu0 %v443
    %1127 = vmatprep.subr.mxu0 %v508
    %1128 = vmatpush1.msra.mxu0 %v507
    %1129 = vmatprep.subr.mxu0 %v572
    %1130 = vmatpush1.msra.mxu0 %v571
    %1131 = vmatprep.subr.mxu0 %v636
    %1132 = vmatpush1.msra.mxu0 %v635
    %1133 = vmatprep.subr.mxu0 0.0
    %1134 = vmatpush1.msra.mxu0 0.0
    %1135 = vmatprep.subr.mxu0 0.0
    %1136 = vmatpush1.msra.mxu0 0.0
    %1137 = vmatprep.subr.mxu0 0.0
    %1138 = vmatpush1.msra.mxu0 0.0
    %1139 = vmatprep.subr.mxu0 0.0
    %1140 = vmatpush1.msra.mxu0 0.0
    %1141 = vmatprep.subr.mxu0 0.0
    %1142 = vmatpush1.msra.mxu0 0.0
    %1143 = vmatprep.subr.mxu0 0.0
    %1144 = vmatpush1.msra.mxu0 0.0
    %1145 = vmatprep.subr.mxu0 0.0
    %1146 = vmatpush1.msra.mxu0 0.0
    %1147 = vmatprep.subr.mxu0 0.0
    %1148 = vmatpush1.msra.mxu0 0.0
    %1149 = vmatprep.subr.mxu0 0.0
    %1150 = vmatpush1.msra.mxu0 0.0
    %1151 = vmatprep.subr.mxu0 0.0
    %1152 = vmatpush1.msra.mxu0 0.0
    %1153 = vmatprep.subr.mxu0 0.0
    %1154 = vmatpush1.msra.mxu0 0.0
    %1155 = vmatprep.subr.mxu0 0.0
    %1156 = vmatpush1.msra.mxu0 0.0
    %1157 = vmatprep.subr.mxu0 0.0
    %1158 = vmatpush1.msra.mxu0 0.0
    %1159 = vmatprep.subr.mxu0 0.0
    %1160 = vmatpush1.msra.mxu0 0.0
    %1161 = vmatprep.subr.mxu0 0.0
    %1162 = vmatpush1.msra.mxu0 0.0
    %1163 = vmatprep.subr.mxu0 0.0
    %1164 = vmatpush1.msra.mxu0 0.0
    %1165 = vmatprep.subr.mxu0 0.0
    %1166 = vmatpush1.msra.mxu0 0.0
    %1167 = vmatprep.subr.mxu0 0.0
    %1168 = vmatpush1.msra.mxu0 0.0
    %1169 = vmatprep.subr.mxu0 0.0
    %1170 = vmatpush1.msra.mxu0 0.0
    %1171 = vmatprep.subr.mxu0 0.0
    %1172 = vmatpush1.msra.mxu0 0.0
    %1173 = vmatprep.subr.mxu0 0.0
    %1174 = vmatpush1.msra.mxu0 0.0
    %1175 = vmatprep.subr.mxu0 0.0
    %1176 = vmatpush1.msra.mxu0 0.0
    %1177 = vmatprep.subr.mxu0 0.0
    %1178 = vmatpush1.msra.mxu0 0.0
    %1179 = vmatprep.subr.mxu0 0.0
    %1180 = vmatpush1.msra.mxu0 0.0
    %1181 = vmatprep.mubr.f32.mxu0 0.0
    %1182 = vmatmul.mubr.f32.gmra.mrb[0].mxu0 %v689
    %v1183 = vpop.f32.mrb[0].mxu0
    %v1184 = vadd.f32 0.0, %v1183
    %v1185 = vpop.f32.mrb[0].mxu0
    %v1186 = vadd.f32 0.0, %v1185
    %1187 = vdwg.mxu0
    %1188 = vmatprep.subr.mxu0 %v190
    %1189 = vmatpush1.msra.mxu0 %v189
    %1190 = vmatprep.subr.mxu0 %v254
    %1191 = vmatpush1.msra.mxu0 %v253
    %1192 = vmatprep.subr.mxu0 %v318
    %1193 = vmatpush1.msra.mxu0 %v317
    %1194 = vmatprep.subr.mxu0 %v382
    %1195 = vmatpush1.msra.mxu0 %v381
    %1196 = vmatprep.subr.mxu0 %v446
    %1197 = vmatpush1.msra.mxu0 %v445
    %1198 = vmatprep.subr.mxu0 %v510
    %1199 = vmatpush1.msra.mxu0 %v509
    %1200 = vmatprep.subr.mxu0 %v574
    %1201 = vmatpush1.msra.mxu0 %v573
    %1202 = vmatprep.subr.mxu0 %v638
    %1203 = vmatpush1.msra.mxu0 %v637
    %1204 = vmatprep.subr.mxu0 0.0
    %1205 = vmatpush1.msra.mxu0 0.0
    %1206 = vmatprep.subr.mxu0 0.0
    %1207 = vmatpush1.msra.mxu0 0.0
    %1208 = vmatprep.subr.mxu0 0.0
    %1209 = vmatpush1.msra.mxu0 0.0
    %1210 = vmatprep.subr.mxu0 0.0
    %1211 = vmatpush1.msra.mxu0 0.0
    %1212 = vmatprep.subr.mxu0 0.0
    %1213 = vmatpush1.msra.mxu0 0.0
    %1214 = vmatprep.subr.mxu0 0.0
    %1215 = vmatpush1.msra.mxu0 0.0
    %1216 = vmatprep.subr.mxu0 0.0
    %1217 = vmatpush1.msra.mxu0 0.0
    %1218 = vmatprep.subr.mxu0 0.0
    %1219 = vmatpush1.msra.mxu0 0.0
    %1220 = vmatprep.subr.mxu0 0.0
    %1221 = vmatpush1.msra.mxu0 0.0
    %1222 = vmatprep.subr.mxu0 0.0
    %1223 = vmatpush1.msra.mxu0 0.0
    %1224 = vmatprep.subr.mxu0 0.0
    %1225 = vmatpush1.msra.mxu0 0.0
    %1226 = vmatprep.subr.mxu0 0.0
    %1227 = vmatpush1.msra.mxu0 0.0
    %1228 = vmatprep.subr.mxu0 0.0
    %1229 = vmatpush1.msra.mxu0 0.0
    %1230 = vmatprep.subr.mxu0 0.0
    %1231 = vmatpush1.msra.mxu0 0.0
    %1232 = vmatprep.subr.mxu0 0.0
    %1233 = vmatpush1.msra.mxu0 0.0
    %1234 = vmatprep.subr.mxu0 0.0
    %1235 = vmatpush1.msra.mxu0 0.0
    %1236 = vmatprep.subr.mxu0 0.0
    %1237 = vmatpush1.msra.mxu0 0.0
    %1238 = vmatprep.subr.mxu0 0.0
    %1239 = vmatpush1.msra.mxu0 0.0
    %1240 = vmatprep.subr.mxu0 0.0
    %1241 = vmatpush1.msra.mxu0 0.0
    %1242 = vmatprep.subr.mxu0 0.0
    %1243 = vmatpush1.msra.mxu0 0.0
    %1244 = vmatprep.subr.mxu0 0.0
    %1245 = vmatpush1.msra.mxu0 0.0
    %1246 = vmatprep.subr.mxu0 0.0
    %1247 = vmatpush1.msra.mxu0 0.0
    %1248 = vmatprep.subr.mxu0 0.0
    %1249 = vmatpush1.msra.mxu0 0.0
    %1250 = vmatprep.subr.mxu0 0.0
    %1251 = vmatpush1.msra.mxu0 0.0
    %1252 = vmatprep.mubr.f32.mxu0 0.0
    %1253 = vmatmul.mubr.f32.gmra.mrb[0].mxu0 %v689
    %v1254 = vpop.f32.mrb[0].mxu0
    %v1255 = vadd.f32 0.0, %v1254
    %v1256 = vpop.f32.mrb[0].mxu0
    %v1257 = vadd.f32 0.0, %v1256
    %1258 = vdwg.mxu0
    %1259 = vmatprep.subr.mxu0 %v192
    %1260 = vmatpush1.msra.mxu0 %v191
    %1261 = vmatprep.subr.mxu0 %v256
    %1262 = vmatpush1.msra.mxu0 %v255
    %1263 = vmatprep.subr.mxu0 %v320
    %1264 = vmatpush1.msra.mxu0 %v319
    %1265 = vmatprep.subr.mxu0 %v384
    %1266 = vmatpush1.msra.mxu0 %v383
    %1267 = vmatprep.subr.mxu0 %v448
    %1268 = vmatpush1.msra.mxu0 %v447
    %1269 = vmatprep.subr.mxu0 %v512
    %1270 = vmatpush1.msra.mxu0 %v511
    %1271 = vmatprep.subr.mxu0 %v576
    %1272 = vmatpush1.msra.mxu0 %v575
    %1273 = vmatprep.subr.mxu0 %v640
    %1274 = vmatpush1.msra.mxu0 %v639
    %1275 = vmatprep.subr.mxu0 0.0
    %1276 = vmatpush1.msra.mxu0 0.0
    %1277 = vmatprep.subr.mxu0 0.0
    %1278 = vmatpush1.msra.mxu0 0.0
    %1279 = vmatprep.subr.mxu0 0.0
    %1280 = vmatpush1.msra.mxu0 0.0
    %1281 = vmatprep.subr.mxu0 0.0
    %1282 = vmatpush1.msra.mxu0 0.0
    %1283 = vmatprep.subr.mxu0 0.0
    %1284 = vmatpush1.msra.mxu0 0.0
    %1285 = vmatprep.subr.mxu0 0.0
    %1286 = vmatpush1.msra.mxu0 0.0
    %1287 = vmatprep.subr.mxu0 0.0
    %1288 = vmatpush1.msra.mxu0 0.0
    %1289 = vmatprep.subr.mxu0 0.0
    %1290 = vmatpush1.msra.mxu0 0.0
    %1291 = vmatprep.subr.mxu0 0.0
    %1292 = vmatpush1.msra.mxu0 0.0
    %1293 = vmatprep.subr.mxu0 0.0
    %1294 = vmatpush1.msra.mxu0 0.0
    %1295 = vmatprep.subr.mxu0 0.0
    %1296 = vmatpush1.msra.mxu0 0.0
    %1297 = vmatprep.subr.mxu0 0.0
    %1298 = vmatpush1.msra.mxu0 0.0
    %1299 = vmatprep.subr.mxu0 0.0
    %1300 = vmatpush1.msra.mxu0 0.0
    %1301 = vmatprep.subr.mxu0 0.0
    %1302 = vmatpush1.msra.mxu0 0.0
    %1303 = vmatprep.subr.mxu0 0.0
    %1304 = vmatpush1.msra.mxu0 0.0
    %1305 = vmatprep.subr.mxu0 0.0
    %1306 = vmatpush1.msra.mxu0 0.0
    %1307 = vmatprep.subr.mxu0 0.0
    %1308 = vmatpush1.msra.mxu0 0.0
    %1309 = vmatprep.subr.mxu0 0.0
    %1310 = vmatpush1.msra.mxu0 0.0
    %1311 = vmatprep.subr.mxu0 0.0
    %1312 = vmatpush1.msra.mxu0 0.0
    %1313 = vmatprep.subr.mxu0 0.0
    %1314 = vmatpush1.msra.mxu0 0.0
    %1315 = vmatprep.subr.mxu0 0.0
    %1316 = vmatpush1.msra.mxu0 0.0
    %1317 = vmatprep.subr.mxu0 0.0
    %1318 = vmatpush1.msra.mxu0 0.0
    %1319 = vmatprep.subr.mxu0 0.0
    %1320 = vmatpush1.msra.mxu0 0.0
    %1321 = vmatprep.subr.mxu0 0.0
    %1322 = vmatpush1.msra.mxu0 0.0
    %1323 = vmatprep.mubr.f32.mxu0 0.0
    %1324 = vmatmul.mubr.f32.gmra.mrb[0].mxu0 %v689
    %v1325 = vpop.f32.mrb[0].mxu0
    %v1326 = vadd.f32 0.0, %v1325
    %v1327 = vpop.f32.mrb[0].mxu0
    %v1328 = vadd.f32 0.0, %v1327
    %1329 = vdwg.mxu0
    %1330 = vmatprep.subr.mxu0 %v194
    %1331 = vmatpush1.msra.mxu0 %v193
    %1332 = vmatprep.subr.mxu0 %v258
    %1333 = vmatpush1.msra.mxu0 %v257
    %1334 = vmatprep.subr.mxu0 %v322
    %1335 = vmatpush1.msra.mxu0 %v321
    %1336 = vmatprep.subr.mxu0 %v386
    %1337 = vmatpush1.msra.mxu0 %v385
    %1338 = vmatprep.subr.mxu0 %v450
    %1339 = vmatpush1.msra.mxu0 %v449
    %1340 = vmatprep.subr.mxu0 %v514
    %1341 = vmatpush1.msra.mxu0 %v513
    %1342 = vmatprep.subr.mxu0 %v578
    %1343 = vmatpush1.msra.mxu0 %v577
    %1344 = vmatprep.subr.mxu0 %v642
    %1345 = vmatpush1.msra.mxu0 %v641
    %1346 = vmatprep.subr.mxu0 0.0
    %1347 = vmatpush1.msra.mxu0 0.0
    %1348 = vmatprep.subr.mxu0 0.0
    %1349 = vmatpush1.msra.mxu0 0.0
    %1350 = vmatprep.subr.mxu0 0.0
    %1351 = vmatpush1.msra.mxu0 0.0
    %1352 = vmatprep.subr.mxu0 0.0
    %1353 = vmatpush1.msra.mxu0 0.0
    %1354 = vmatprep.subr.mxu0 0.0
    %1355 = vmatpush1.msra.mxu0 0.0
    %1356 = vmatprep.subr.mxu0 0.0
    %1357 = vmatpush1.msra.mxu0 0.0
    %1358 = vmatprep.subr.mxu0 0.0
    %1359 = vmatpush1.msra.mxu0 0.0
    %1360 = vmatprep.subr.mxu0 0.0
    %1361 = vmatpush1.msra.mxu0 0.0
    %1362 = vmatprep.subr.mxu0 0.0
    %1363 = vmatpush1.msra.mxu0 0.0
    %1364 = vmatprep.subr.mxu0 0.0
    %1365 = vmatpush1.msra.mxu0 0.0
    %1366 = vmatprep.subr.mxu0 0.0
    %1367 = vmatpush1.msra.mxu0 0.0
    %1368 = vmatprep.subr.mxu0 0.0
    %1369 = vmatpush1.msra.mxu0 0.0
    %1370 = vmatprep.subr.mxu0 0.0
    %1371 = vmatpush1.msra.mxu0 0.0
    %1372 = vmatprep.subr.mxu0 0.0
    %1373 = vmatpush1.msra.mxu0 0.0
    %1374 = vmatprep.subr.mxu0 0.0
    %1375 = vmatpush1.msra.mxu0 0.0
    %1376 = vmatprep.subr.mxu0 0.0
    %1377 = vmatpush1.msra.mxu0 0.0
    %1378 = vmatprep.subr.mxu0 0.0
    %1379 = vmatpush1.msra.mxu0 0.0
    %1380 = vmatprep.subr.mxu0 0.0
    %1381 = vmatpush1.msra.mxu0 0.0
    %1382 = vmatprep.subr.mxu0 0.0
    %1383 = vmatpush1.msra.mxu0 0.0
    %1384 = vmatprep.subr.mxu0 0.0
    %1385 = vmatpush1.msra.mxu0 0.0
    %1386 = vmatprep.subr.mxu0 0.0
    %1387 = vmatpush1.msra.mxu0 0.0
    %1388 = vmatprep.subr.mxu0 0.0
    %1389 = vmatpush1.msra.mxu0 0.0
    %1390 = vmatprep.subr.mxu0 0.0
    %1391 = vmatpush1.msra.mxu0 0.0
    %1392 = vmatprep.subr.mxu0 0.0
    %1393 = vmatpush1.msra.mxu0 0.0
    %1394 = vmatprep.mubr.f32.mxu0 0.0
    %1395 = vmatmul.mubr.f32.gmra.mrb[0].mxu0 %v689
    %v1396 = vpop.f32.mrb[0].mxu0
    %v1397 = vadd.f32 0.0, %v1396
    %v1398 = vpop.f32.mrb[0].mxu0
    %v1399 = vadd.f32 0.0, %v1398
    %1400 = vdwg.mxu0
    %1401 = vmatprep.subr.mxu0 %v196
    %1402 = vmatpush1.msra.mxu0 %v195
    %1403 = vmatprep.subr.mxu0 %v260
    %1404 = vmatpush1.msra.mxu0 %v259
    %1405 = vmatprep.subr.mxu0 %v324
    %1406 = vmatpush1.msra.mxu0 %v323
    %1407 = vmatprep.subr.mxu0 %v388
    %1408 = vmatpush1.msra.mxu0 %v387
    %1409 = vmatprep.subr.mxu0 %v452
    %1410 = vmatpush1.msra.mxu0 %v451
    %1411 = vmatprep.subr.mxu0 %v516
    %1412 = vmatpush1.msra.mxu0 %v515
    %1413 = vmatprep.subr.mxu0 %v580
    %1414 = vmatpush1.msra.mxu0 %v579
    %1415 = vmatprep.subr.mxu0 %v644
    %1416 = vmatpush1.msra.mxu0 %v643
    %1417 = vmatprep.subr.mxu0 0.0
    %1418 = vmatpush1.msra.mxu0 0.0
    %1419 = vmatprep.subr.mxu0 0.0
    %1420 = vmatpush1.msra.mxu0 0.0
    %1421 = vmatprep.subr.mxu0 0.0
    %1422 = vmatpush1.msra.mxu0 0.0
    %1423 = vmatprep.subr.mxu0 0.0
    %1424 = vmatpush1.msra.mxu0 0.0
    %1425 = vmatprep.subr.mxu0 0.0
    %1426 = vmatpush1.msra.mxu0 0.0
    %1427 = vmatprep.subr.mxu0 0.0
    %1428 = vmatpush1.msra.mxu0 0.0
    %1429 = vmatprep.subr.mxu0 0.0
    %1430 = vmatpush1.msra.mxu0 0.0
    %1431 = vmatprep.subr.mxu0 0.0
    %1432 = vmatpush1.msra.mxu0 0.0
    %1433 = vmatprep.subr.mxu0 0.0
    %1434 = vmatpush1.msra.mxu0 0.0
    %1435 = vmatprep.subr.mxu0 0.0
    %1436 = vmatpush1.msra.mxu0 0.0
    %1437 = vmatprep.subr.mxu0 0.0
    %1438 = vmatpush1.msra.mxu0 0.0
    %1439 = vmatprep.subr.mxu0 0.0
    %1440 = vmatpush1.msra.mxu0 0.0
    %1441 = vmatprep.subr.mxu0 0.0
    %1442 = vmatpush1.msra.mxu0 0.0
    %1443 = vmatprep.subr.mxu0 0.0
    %1444 = vmatpush1.msra.mxu0 0.0
    %1445 = vmatprep.subr.mxu0 0.0
    %1446 = vmatpush1.msra.mxu0 0.0
    %1447 = vmatprep.subr.mxu0 0.0
    %1448 = vmatpush1.msra.mxu0 0.0
    %1449 = vmatprep.subr.mxu0 0.0
    %1450 = vmatpush1.msra.mxu0 0.0
    %1451 = vmatprep.subr.mxu0 0.0
    %1452 = vmatpush1.msra.mxu0 0.0
    %1453 = vmatprep.subr.mxu0 0.0
    %1454 = vmatpush1.msra.mxu0 0.0
    %1455 = vmatprep.subr.mxu0 0.0
    %1456 = vmatpush1.msra.mxu0 0.0
    %1457 = vmatprep.subr.mxu0 0.0
    %1458 = vmatpush1.msra.mxu0 0.0
    %1459 = vmatprep.subr.mxu0 0.0
    %1460 = vmatpush1.msra.mxu0 0.0
    %1461 = vmatprep.subr.mxu0 0.0
    %1462 = vmatpush1.msra.mxu0 0.0
    %1463 = vmatprep.subr.mxu0 0.0
    %1464 = vmatpush1.msra.mxu0 0.0
    %1465 = vmatprep.mubr.f32.mxu0 0.0
    %1466 = vmatmul.mubr.f32.gmra.mrb[0].mxu0 %v689
    %v1467 = vpop.f32.mrb[0].mxu0
    %v1468 = vadd.f32 0.0, %v1467
    %v1469 = vpop.f32.mrb[0].mxu0
    %v1470 = vadd.f32 0.0, %v1469
    %1471 = vdwg.mxu0
    %1472 = vmatprep.subr.mxu0 %v198
    %1473 = vmatpush1.msra.mxu0 %v197
    %1474 = vmatprep.subr.mxu0 %v262
    %1475 = vmatpush1.msra.mxu0 %v261
    %1476 = vmatprep.subr.mxu0 %v326
    %1477 = vmatpush1.msra.mxu0 %v325
    %1478 = vmatprep.subr.mxu0 %v390
    %1479 = vmatpush1.msra.mxu0 %v389
    %1480 = vmatprep.subr.mxu0 %v454
    %1481 = vmatpush1.msra.mxu0 %v453
    %1482 = vmatprep.subr.mxu0 %v518
    %1483 = vmatpush1.msra.mxu0 %v517
    %1484 = vmatprep.subr.mxu0 %v582
    %1485 = vmatpush1.msra.mxu0 %v581
    %1486 = vmatprep.subr.mxu0 %v646
    %1487 = vmatpush1.msra.mxu0 %v645
    %1488 = vmatprep.subr.mxu0 0.0
    %1489 = vmatpush1.msra.mxu0 0.0
    %1490 = vmatprep.subr.mxu0 0.0
    %1491 = vmatpush1.msra.mxu0 0.0
    %1492 = vmatprep.subr.mxu0 0.0
    %1493 = vmatpush1.msra.mxu0 0.0
    %1494 = vmatprep.subr.mxu0 0.0
    %1495 = vmatpush1.msra.mxu0 0.0
    %1496 = vmatprep.subr.mxu0 0.0
    %1497 = vmatpush1.msra.mxu0 0.0
    %1498 = vmatprep.subr.mxu0 0.0
    %1499 = vmatpush1.msra.mxu0 0.0
    %1500 = vmatprep.subr.mxu0 0.0
    %1501 = vmatpush1.msra.mxu0 0.0
    %1502 = vmatprep.subr.mxu0 0.0
    %1503 = vmatpush1.msra.mxu0 0.0
    %1504 = vmatprep.subr.mxu0 0.0
    %1505 = vmatpush1.msra.mxu0 0.0
    %1506 = vmatprep.subr.mxu0 0.0
    %1507 = vmatpush1.msra.mxu0 0.0
    %1508 = vmatprep.subr.mxu0 0.0
    %1509 = vmatpush1.msra.mxu0 0.0
    %1510 = vmatprep.subr.mxu0 0.0
    %1511 = vmatpush1.msra.mxu0 0.0
    %1512 = vmatprep.subr.mxu0 0.0
    %1513 = vmatpush1.msra.mxu0 0.0
    %1514 = vmatprep.subr.mxu0 0.0
    %1515 = vmatpush1.msra.mxu0 0.0
    %1516 = vmatprep.subr.mxu0 0.0
    %1517 = vmatpush1.msra.mxu0 0.0
    %1518 = vmatprep.subr.mxu0 0.0
    %1519 = vmatpush1.msra.mxu0 0.0
    %1520 = vmatprep.subr.mxu0 0.0
    %1521 = vmatpush1.msra.mxu0 0.0
    %1522 = vmatprep.subr.mxu0 0.0
    %1523 = vmatpush1.msra.mxu0 0.0
    %1524 = vmatprep.subr.mxu0 0.0
    %1525 = vmatpush1.msra.mxu0 0.0
    %1526 = vmatprep.subr.mxu0 0.0
    %1527 = vmatpush1.msra.mxu0 0.0
    %1528 = vmatprep.subr.mxu0 0.0
    %1529 = vmatpush1.msra.mxu0 0.0
    %1530 = vmatprep.subr.mxu0 0.0
    %1531 = vmatpush1.msra.mxu0 0.0
    %1532 = vmatprep.subr.mxu0 0.0
    %1533 = vmatpush1.msra.mxu0 0.0
    %1534 = vmatprep.subr.mxu0 0.0
    %1535 = vmatpush1.msra.mxu0 0.0
    %1536 = vmatprep.mubr.f32.mxu0 0.0
    %1537 = vmatmul.mubr.f32.gmra.mrb[0].mxu0 %v689
    %v1538 = vpop.f32.mrb[0].mxu0
    %v1539 = vadd.f32 0.0, %v1538
    %v1540 = vpop.f32.mrb[0].mxu0
    %v1541 = vadd.f32 0.0, %v1540
    %1542 = vdwg.mxu0
    %1543 = vmatprep.subr.mxu0 %v200
    %1544 = vmatpush1.msra.mxu0 %v199
    %1545 = vmatprep.subr.mxu0 %v264
    %1546 = vmatpush1.msra.mxu0 %v263
    %1547 = vmatprep.subr.mxu0 %v328
    %1548 = vmatpush1.msra.mxu0 %v327
    %1549 = vmatprep.subr.mxu0 %v392
    %1550 = vmatpush1.msra.mxu0 %v391
    %1551 = vmatprep.subr.mxu0 %v456
    %1552 = vmatpush1.msra.mxu0 %v455
    %1553 = vmatprep.subr.mxu0 %v520
    %1554 = vmatpush1.msra.mxu0 %v519
    %1555 = vmatprep.subr.mxu0 %v584
    %1556 = vmatpush1.msra.mxu0 %v583
    %1557 = vmatprep.subr.mxu0 %v648
    %1558 = vmatpush1.msra.mxu0 %v647
    %1559 = vmatprep.subr.mxu0 0.0
    %1560 = vmatpush1.msra.mxu0 0.0
    %1561 = vmatprep.subr.mxu0 0.0
    %1562 = vmatpush1.msra.mxu0 0.0
    %1563 = vmatprep.subr.mxu0 0.0
    %1564 = vmatpush1.msra.mxu0 0.0
    %1565 = vmatprep.subr.mxu0 0.0
    %1566 = vmatpush1.msra.mxu0 0.0
    %1567 = vmatprep.subr.mxu0 0.0
    %1568 = vmatpush1.msra.mxu0 0.0
    %1569 = vmatprep.subr.mxu0 0.0
    %1570 = vmatpush1.msra.mxu0 0.0
    %1571 = vmatprep.subr.mxu0 0.0
    %1572 = vmatpush1.msra.mxu0 0.0
    %1573 = vmatprep.subr.mxu0 0.0
    %1574 = vmatpush1.msra.mxu0 0.0
    %1575 = vmatprep.subr.mxu0 0.0
    %1576 = vmatpush1.msra.mxu0 0.0
    %1577 = vmatprep.subr.mxu0 0.0
    %1578 = vmatpush1.msra.mxu0 0.0
    %1579 = vmatprep.subr.mxu0 0.0
    %1580 = vmatpush1.msra.mxu0 0.0
    %1581 = vmatprep.subr.mxu0 0.0
    %1582 = vmatpush1.msra.mxu0 0.0
    %1583 = vmatprep.subr.mxu0 0.0
    %1584 = vmatpush1.msra.mxu0 0.0
    %1585 = vmatprep.subr.mxu0 0.0
    %1586 = vmatpush1.msra.mxu0 0.0
    %1587 = vmatprep.subr.mxu0 0.0
    %1588 = vmatpush1.msra.mxu0 0.0
    %1589 = vmatprep.subr.mxu0 0.0
    %1590 = vmatpush1.msra.mxu0 0.0
    %1591 = vmatprep.subr.mxu0 0.0
    %1592 = vmatpush1.msra.mxu0 0.0
    %1593 = vmatprep.subr.mxu0 0.0
    %1594 = vmatpush1.msra.mxu0 0.0
    %1595 = vmatprep.subr.mxu0 0.0
    %1596 = vmatpush1.msra.mxu0 0.0
    %1597 = vmatprep.subr.mxu0 0.0
    %1598 = vmatpush1.msra.mxu0 0.0
    %1599 = vmatprep.subr.mxu0 0.0
    %1600 = vmatpush1.msra.mxu0 0.0
    %1601 = vmatprep.subr.mxu0 0.0
    %1602 = vmatpush1.msra.mxu0 0.0
    %1603 = vmatprep.subr.mxu0 0.0
    %1604 = vmatpush1.msra.mxu0 0.0
    %1605 = vmatprep.subr.mxu0 0.0
    %1606 = vmatpush1.msra.mxu0 0.0
    %1607 = vmatprep.mubr.f32.mxu0 0.0
    %1608 = vmatmul.mubr.f32.gmra.mrb[0].mxu0 %v689
    %v1609 = vpop.f32.mrb[0].mxu0
    %v1610 = vadd.f32 0.0, %v1609
    %v1611 = vpop.f32.mrb[0].mxu0
    %v1612 = vadd.f32 0.0, %v1611
    %1613 = vdwg.mxu0
    %1614 = vmatprep.subr.mxu0 %v202
    %1615 = vmatpush1.msra.mxu0 %v201
    %1616 = vmatprep.subr.mxu0 %v266
    %1617 = vmatpush1.msra.mxu0 %v265
    %1618 = vmatprep.subr.mxu0 %v330
    %1619 = vmatpush1.msra.mxu0 %v329
    %1620 = vmatprep.subr.mxu0 %v394
    %1621 = vmatpush1.msra.mxu0 %v393
    %1622 = vmatprep.subr.mxu0 %v458
    %1623 = vmatpush1.msra.mxu0 %v457
    %1624 = vmatprep.subr.mxu0 %v522
    %1625 = vmatpush1.msra.mxu0 %v521
    %1626 = vmatprep.subr.mxu0 %v586
    %1627 = vmatpush1.msra.mxu0 %v585
    %1628 = vmatprep.subr.mxu0 %v650
    %1629 = vmatpush1.msra.mxu0 %v649
    %1630 = vmatprep.subr.mxu0 0.0
    %1631 = vmatpush1.msra.mxu0 0.0
    %1632 = vmatprep.subr.mxu0 0.0
    %1633 = vmatpush1.msra.mxu0 0.0
    %1634 = vmatprep.subr.mxu0 0.0
    %1635 = vmatpush1.msra.mxu0 0.0
    %1636 = vmatprep.subr.mxu0 0.0
    %1637 = vmatpush1.msra.mxu0 0.0
    %1638 = vmatprep.subr.mxu0 0.0
    %1639 = vmatpush1.msra.mxu0 0.0
    %1640 = vmatprep.subr.mxu0 0.0
    %1641 = vmatpush1.msra.mxu0 0.0
    %1642 = vmatprep.subr.mxu0 0.0
    %1643 = vmatpush1.msra.mxu0 0.0
    %1644 = vmatprep.subr.mxu0 0.0
    %1645 = vmatpush1.msra.mxu0 0.0
    %1646 = vmatprep.subr.mxu0 0.0
    %1647 = vmatpush1.msra.mxu0 0.0
    %1648 = vmatprep.subr.mxu0 0.0
    %1649 = vmatpush1.msra.mxu0 0.0
    %1650 = vmatprep.subr.mxu0 0.0
    %1651 = vmatpush1.msra.mxu0 0.0
    %1652 = vmatprep.subr.mxu0 0.0
    %1653 = vmatpush1.msra.mxu0 0.0
    %1654 = vmatprep.subr.mxu0 0.0
    %1655 = vmatpush1.msra.mxu0 0.0
    %1656 = vmatprep.subr.mxu0 0.0
    %1657 = vmatpush1.msra.mxu0 0.0
    %1658 = vmatprep.subr.mxu0 0.0
    %1659 = vmatpush1.msra.mxu0 0.0
    %1660 = vmatprep.subr.mxu0 0.0
    %1661 = vmatpush1.msra.mxu0 0.0
    %1662 = vmatprep.subr.mxu0 0.0
    %1663 = vmatpush1.msra.mxu0 0.0
    %1664 = vmatprep.subr.mxu0 0.0
    %1665 = vmatpush1.msra.mxu0 0.0
    %1666 = vmatprep.subr.mxu0 0.0
    %1667 = vmatpush1.msra.mxu0 0.0
    %1668 = vmatprep.subr.mxu0 0.0
    %1669 = vmatpush1.msra.mxu0 0.0
    %1670 = vmatprep.subr.mxu0 0.0
    %1671 = vmatpush1.msra.mxu0 0.0
    %1672 = vmatprep.subr.mxu0 0.0
    %1673 = vmatpush1.msra.mxu0 0.0
    %1674 = vmatprep.subr.mxu0 0.0
    %1675 = vmatpush1.msra.mxu0 0.0
    %1676 = vmatprep.subr.mxu0 0.0
    %1677 = vmatpush1.msra.mxu0 0.0
    %1678 = vmatprep.mubr.f32.mxu0 0.0
    %1679 = vmatmul.mubr.f32.gmra.mrb[0].mxu0 %v689
    %v1680 = vpop.f32.mrb[0].mxu0
    %v1681 = vadd.f32 0.0, %v1680
    %v1682 = vpop.f32.mrb[0].mxu0
    %v1683 = vadd.f32 0.0, %v1682
    %1684 = vdwg.mxu0
    %1685 = vmatprep.subr.mxu0 %v204
    %1686 = vmatpush1.msra.mxu0 %v203
    %1687 = vmatprep.subr.mxu0 %v268
    %1688 = vmatpush1.msra.mxu0 %v267
    %1689 = vmatprep.subr.mxu0 %v332
    %1690 = vmatpush1.msra.mxu0 %v331
    %1691 = vmatprep.subr.mxu0 %v396
    %1692 = vmatpush1.msra.mxu0 %v395
    %1693 = vmatprep.subr.mxu0 %v460
    %1694 = vmatpush1.msra.mxu0 %v459
    %1695 = vmatprep.subr.mxu0 %v524
    %1696 = vmatpush1.msra.mxu0 %v523
    %1697 = vmatprep.subr.mxu0 %v588
    %1698 = vmatpush1.msra.mxu0 %v587
    %1699 = vmatprep.subr.mxu0 %v652
    %1700 = vmatpush1.msra.mxu0 %v651
    %1701 = vmatprep.subr.mxu0 0.0
    %1702 = vmatpush1.msra.mxu0 0.0
    %1703 = vmatprep.subr.mxu0 0.0
    %1704 = vmatpush1.msra.mxu0 0.0
    %1705 = vmatprep.subr.mxu0 0.0
    %1706 = vmatpush1.msra.mxu0 0.0
    %1707 = vmatprep.subr.mxu0 0.0
    %1708 = vmatpush1.msra.mxu0 0.0
    %1709 = vmatprep.subr.mxu0 0.0
    %1710 = vmatpush1.msra.mxu0 0.0
    %1711 = vmatprep.subr.mxu0 0.0
    %1712 = vmatpush1.msra.mxu0 0.0
    %1713 = vmatprep.subr.mxu0 0.0
    %1714 = vmatpush1.msra.mxu0 0.0
    %1715 = vmatprep.subr.mxu0 0.0
    %1716 = vmatpush1.msra.mxu0 0.0
    %1717 = vmatprep.subr.mxu0 0.0
    %1718 = vmatpush1.msra.mxu0 0.0
    %1719 = vmatprep.subr.mxu0 0.0
    %1720 = vmatpush1.msra.mxu0 0.0
    %1721 = vmatprep.subr.mxu0 0.0
    %1722 = vmatpush1.msra.mxu0 0.0
    %1723 = vmatprep.subr.mxu0 0.0
    %1724 = vmatpush1.msra.mxu0 0.0
    %1725 = vmatprep.subr.mxu0 0.0
    %1726 = vmatpush1.msra.mxu0 0.0
    %1727 = vmatprep.subr.mxu0 0.0
    %1728 = vmatpush1.msra.mxu0 0.0
    %1729 = vmatprep.subr.mxu0 0.0
    %1730 = vmatpush1.msra.mxu0 0.0
    %1731 = vmatprep.subr.mxu0 0.0
    %1732 = vmatpush1.msra.mxu0 0.0
    %1733 = vmatprep.subr.mxu0 0.0
    %1734 = vmatpush1.msra.mxu0 0.0
    %1735 = vmatprep.subr.mxu0 0.0
    %1736 = vmatpush1.msra.mxu0 0.0
    %1737 = vmatprep.subr.mxu0 0.0
    %1738 = vmatpush1.msra.mxu0 0.0
    %1739 = vmatprep.subr.mxu0 0.0
    %1740 = vmatpush1.msra.mxu0 0.0
    %1741 = vmatprep.subr.mxu0 0.0
    %1742 = vmatpush1.msra.mxu0 0.0
    %1743 = vmatprep.subr.mxu0 0.0
    %1744 = vmatpush1.msra.mxu0 0.0
    %1745 = vmatprep.subr.mxu0 0.0
    %1746 = vmatpush1.msra.mxu0 0.0
    %1747 = vmatprep.subr.mxu0 0.0
    %1748 = vmatpush1.msra.mxu0 0.0
    %1749 = vmatprep.mubr.f32.mxu0 0.0
    %1750 = vmatmul.mubr.f32.gmra.mrb[0].mxu0 %v689
    %v1751 = vpop.f32.mrb[0].mxu0
    %v1752 = vadd.f32 0.0, %v1751
    %v1753 = vpop.f32.mrb[0].mxu0
    %v1754 = vadd.f32 0.0, %v1753
    %1755 = vdwg.mxu0
    %1756 = vmatprep.subr.mxu0 %v206
    %1757 = vmatpush1.msra.mxu0 %v205
    %1758 = vmatprep.subr.mxu0 %v270
    %1759 = vmatpush1.msra.mxu0 %v269
    %1760 = vmatprep.subr.mxu0 %v334
    %1761 = vmatpush1.msra.mxu0 %v333
    %1762 = vmatprep.subr.mxu0 %v398
    %1763 = vmatpush1.msra.mxu0 %v397
    %1764 = vmatprep.subr.mxu0 %v462
    %1765 = vmatpush1.msra.mxu0 %v461
    %1766 = vmatprep.subr.mxu0 %v526
    %1767 = vmatpush1.msra.mxu0 %v525
    %1768 = vmatprep.subr.mxu0 %v590
    %1769 = vmatpush1.msra.mxu0 %v589
    %1770 = vmatprep.subr.mxu0 %v654
    %1771 = vmatpush1.msra.mxu0 %v653
    %1772 = vmatprep.subr.mxu0 0.0
    %1773 = vmatpush1.msra.mxu0 0.0
    %1774 = vmatprep.subr.mxu0 0.0
    %1775 = vmatpush1.msra.mxu0 0.0
    %1776 = vmatprep.subr.mxu0 0.0
    %1777 = vmatpush1.msra.mxu0 0.0
    %1778 = vmatprep.subr.mxu0 0.0
    %1779 = vmatpush1.msra.mxu0 0.0
    %1780 = vmatprep.subr.mxu0 0.0
    %1781 = vmatpush1.msra.mxu0 0.0
    %1782 = vmatprep.subr.mxu0 0.0
    %1783 = vmatpush1.msra.mxu0 0.0
    %1784 = vmatprep.subr.mxu0 0.0
    %1785 = vmatpush1.msra.mxu0 0.0
    %1786 = vmatprep.subr.mxu0 0.0
    %1787 = vmatpush1.msra.mxu0 0.0
    %1788 = vmatprep.subr.mxu0 0.0
    %1789 = vmatpush1.msra.mxu0 0.0
    %1790 = vmatprep.subr.mxu0 0.0
    %1791 = vmatpush1.msra.mxu0 0.0
    %1792 = vmatprep.subr.mxu0 0.0
    %1793 = vmatpush1.msra.mxu0 0.0
    %1794 = vmatprep.subr.mxu0 0.0
    %1795 = vmatpush1.msra.mxu0 0.0
    %1796 = vmatprep.subr.mxu0 0.0
    %1797 = vmatpush1.msra.mxu0 0.0
    %1798 = vmatprep.subr.mxu0 0.0
    %1799 = vmatpush1.msra.mxu0 0.0
    %1800 = vmatprep.subr.mxu0 0.0
    %1801 = vmatpush1.msra.mxu0 0.0
    %1802 = vmatprep.subr.mxu0 0.0
    %1803 = vmatpush1.msra.mxu0 0.0
    %1804 = vmatprep.subr.mxu0 0.0
    %1805 = vmatpush1.msra.mxu0 0.0
    %1806 = vmatprep.subr.mxu0 0.0
    %1807 = vmatpush1.msra.mxu0 0.0
    %1808 = vmatprep.subr.mxu0 0.0
    %1809 = vmatpush1.msra.mxu0 0.0
    %1810 = vmatprep.subr.mxu0 0.0
    %1811 = vmatpush1.msra.mxu0 0.0
    %1812 = vmatprep.subr.mxu0 0.0
    %1813 = vmatpush1.msra.mxu0 0.0
    %1814 = vmatprep.subr.mxu0 0.0
    %1815 = vmatpush1.msra.mxu0 0.0
    %1816 = vmatprep.subr.mxu0 0.0
    %1817 = vmatpush1.msra.mxu0 0.0
    %1818 = vmatprep.subr.mxu0 0.0
    %1819 = vmatpush1.msra.mxu0 0.0
    %1820 = vmatprep.mubr.f32.mxu0 0.0
    %1821 = vmatmul.mubr.f32.gmra.mrb[0].mxu0 %v689
    %v1822 = vpop.f32.mrb[0].mxu0
    %v1823 = vadd.f32 0.0, %v1822
    %v1824 = vpop.f32.mrb[0].mxu0
    %v1825 = vadd.f32 0.0, %v1824
    %1826 = vdwg.mxu0
    %1827 = vmatprep.subr.mxu0 %v208
    %1828 = vmatpush1.msra.mxu0 %v207
    %1829 = vmatprep.subr.mxu0 %v272
    %1830 = vmatpush1.msra.mxu0 %v271
    %1831 = vmatprep.subr.mxu0 %v336
    %1832 = vmatpush1.msra.mxu0 %v335
    %1833 = vmatprep.subr.mxu0 %v400
    %1834 = vmatpush1.msra.mxu0 %v399
    %1835 = vmatprep.subr.mxu0 %v464
    %1836 = vmatpush1.msra.mxu0 %v463
    %1837 = vmatprep.subr.mxu0 %v528
    %1838 = vmatpush1.msra.mxu0 %v527
    %1839 = vmatprep.subr.mxu0 %v592
    %1840 = vmatpush1.msra.mxu0 %v591
    %1841 = vmatprep.subr.mxu0 %v656
    %1842 = vmatpush1.msra.mxu0 %v655
    %1843 = vmatprep.subr.mxu0 0.0
    %1844 = vmatpush1.msra.mxu0 0.0
    %1845 = vmatprep.subr.mxu0 0.0
    %1846 = vmatpush1.msra.mxu0 0.0
    %1847 = vmatprep.subr.mxu0 0.0
    %1848 = vmatpush1.msra.mxu0 0.0
    %1849 = vmatprep.subr.mxu0 0.0
    %1850 = vmatpush1.msra.mxu0 0.0
    %1851 = vmatprep.subr.mxu0 0.0
    %1852 = vmatpush1.msra.mxu0 0.0
    %1853 = vmatprep.subr.mxu0 0.0
    %1854 = vmatpush1.msra.mxu0 0.0
    %1855 = vmatprep.subr.mxu0 0.0
    %1856 = vmatpush1.msra.mxu0 0.0
    %1857 = vmatprep.subr.mxu0 0.0
    %1858 = vmatpush1.msra.mxu0 0.0
    %1859 = vmatprep.subr.mxu0 0.0
    %1860 = vmatpush1.msra.mxu0 0.0
    %1861 = vmatprep.subr.mxu0 0.0
    %1862 = vmatpush1.msra.mxu0 0.0
    %1863 = vmatprep.subr.mxu0 0.0
    %1864 = vmatpush1.msra.mxu0 0.0
    %1865 = vmatprep.subr.mxu0 0.0
    %1866 = vmatpush1.msra.mxu0 0.0
    %1867 = vmatprep.subr.mxu0 0.0
    %1868 = vmatpush1.msra.mxu0 0.0
    %1869 = vmatprep.subr.mxu0 0.0
    %1870 = vmatpush1.msra.mxu0 0.0
    %1871 = vmatprep.subr.mxu0 0.0
    %1872 = vmatpush1.msra.mxu0 0.0
    %1873 = vmatprep.subr.mxu0 0.0
    %1874 = vmatpush1.msra.mxu0 0.0
    %1875 = vmatprep.subr.mxu0 0.0
    %1876 = vmatpush1.msra.mxu0 0.0
    %1877 = vmatprep.subr.mxu0 0.0
    %1878 = vmatpush1.msra.mxu0 0.0
    %1879 = vmatprep.subr.mxu0 0.0
    %1880 = vmatpush1.msra.mxu0 0.0
    %1881 = vmatprep.subr.mxu0 0.0
    %1882 = vmatpush1.msra.mxu0 0.0
    %1883 = vmatprep.subr.mxu0 0.0
    %1884 = vmatpush1.msra.mxu0 0.0
    %1885 = vmatprep.subr.mxu0 0.0
    %1886 = vmatpush1.msra.mxu0 0.0
    %1887 = vmatprep.subr.mxu0 0.0
    %1888 = vmatpush1.msra.mxu0 0.0
    %1889 = vmatprep.subr.mxu0 0.0
    %1890 = vmatpush1.msra.mxu0 0.0
    %1891 = vmatprep.mubr.f32.mxu0 0.0
    %1892 = vmatmul.mubr.f32.gmra.mrb[0].mxu0 %v689
    %v1893 = vpop.f32.mrb[0].mxu0
    %v1894 = vadd.f32 0.0, %v1893
    %v1895 = vpop.f32.mrb[0].mxu0
    %v1896 = vadd.f32 0.0, %v1895
    %1897 = vdwg.mxu0
    %1898 = vmatprep.subr.mxu0 %v210
    %1899 = vmatpush1.msra.mxu0 %v209
    %1900 = vmatprep.subr.mxu0 %v274
    %1901 = vmatpush1.msra.mxu0 %v273
    %1902 = vmatprep.subr.mxu0 %v338
    %1903 = vmatpush1.msra.mxu0 %v337
    %1904 = vmatprep.subr.mxu0 %v402
    %1905 = vmatpush1.msra.mxu0 %v401
    %1906 = vmatprep.subr.mxu0 %v466
    %1907 = vmatpush1.msra.mxu0 %v465
    %1908 = vmatprep.subr.mxu0 %v530
    %1909 = vmatpush1.msra.mxu0 %v529
    %1910 = vmatprep.subr.mxu0 %v594
    %1911 = vmatpush1.msra.mxu0 %v593
    %1912 = vmatprep.subr.mxu0 %v658
    %1913 = vmatpush1.msra.mxu0 %v657
    %1914 = vmatprep.subr.mxu0 0.0
    %1915 = vmatpush1.msra.mxu0 0.0
    %1916 = vmatprep.subr.mxu0 0.0
    %1917 = vmatpush1.msra.mxu0 0.0
    %1918 = vmatprep.subr.mxu0 0.0
    %1919 = vmatpush1.msra.mxu0 0.0
    %1920 = vmatprep.subr.mxu0 0.0
    %1921 = vmatpush1.msra.mxu0 0.0
    %1922 = vmatprep.subr.mxu0 0.0
    %1923 = vmatpush1.msra.mxu0 0.0
    %1924 = vmatprep.subr.mxu0 0.0
    %1925 = vmatpush1.msra.mxu0 0.0
    %1926 = vmatprep.subr.mxu0 0.0
    %1927 = vmatpush1.msra.mxu0 0.0
    %1928 = vmatprep.subr.mxu0 0.0
    %1929 = vmatpush1.msra.mxu0 0.0
    %1930 = vmatprep.subr.mxu0 0.0
    %1931 = vmatpush1.msra.mxu0 0.0
    %1932 = vmatprep.subr.mxu0 0.0
    %1933 = vmatpush1.msra.mxu0 0.0
    %1934 = vmatprep.subr.mxu0 0.0
    %1935 = vmatpush1.msra.mxu0 0.0
    %1936 = vmatprep.subr.mxu0 0.0
    %1937 = vmatpush1.msra.mxu0 0.0
    %1938 = vmatprep.subr.mxu0 0.0
    %1939 = vmatpush1.msra.mxu0 0.0
    %1940 = vmatprep.subr.mxu0 0.0
    %1941 = vmatpush1.msra.mxu0 0.0
    %1942 = vmatprep.subr.mxu0 0.0
    %1943 = vmatpush1.msra.mxu0 0.0
    %1944 = vmatprep.subr.mxu0 0.0
    %1945 = vmatpush1.msra.mxu0 0.0
    %1946 = vmatprep.subr.mxu0 0.0
    %1947 = vmatpush1.msra.mxu0 0.0
    %1948 = vmatprep.subr.mxu0 0.0
    %1949 = vmatpush1.msra.mxu0 0.0
    %1950 = vmatprep.subr.mxu0 0.0
    %1951 = vmatpush1.msra.mxu0 0.0
    %1952 = vmatprep.subr.mxu0 0.0
    %1953 = vmatpush1.msra.mxu0 0.0
    %1954 = vmatprep.subr.mxu0 0.0
    %1955 = vmatpush1.msra.mxu0 0.0
    %1956 = vmatprep.subr.mxu0 0.0
    %1957 = vmatpush1.msra.mxu0 0.0
    %1958 = vmatprep.subr.mxu0 0.0
    %1959 = vmatpush1.msra.mxu0 0.0
    %1960 = vmatprep.subr.mxu0 0.0
    %1961 = vmatpush1.msra.mxu0 0.0
    %1962 = vmatprep.mubr.f32.mxu0 0.0
    %1963 = vmatmul.mubr.f32.gmra.mrb[0].mxu0 %v689
    %v1964 = vpop.f32.mrb[0].mxu0
    %v1965 = vadd.f32 0.0, %v1964
    %v1966 = vpop.f32.mrb[0].mxu0
    %v1967 = vadd.f32 0.0, %v1966
    %1968 = vdwg.mxu0
    %1969 = vmatprep.subr.mxu0 %v212
    %1970 = vmatpush1.msra.mxu0 %v211
    %1971 = vmatprep.subr.mxu0 %v276
    %1972 = vmatpush1.msra.mxu0 %v275
    %1973 = vmatprep.subr.mxu0 %v340
    %1974 = vmatpush1.msra.mxu0 %v339
    %1975 = vmatprep.subr.mxu0 %v404
    %1976 = vmatpush1.msra.mxu0 %v403
    %1977 = vmatprep.subr.mxu0 %v468
    %1978 = vmatpush1.msra.mxu0 %v467
    %1979 = vmatprep.subr.mxu0 %v532
    %1980 = vmatpush1.msra.mxu0 %v531
    %1981 = vmatprep.subr.mxu0 %v596
    %1982 = vmatpush1.msra.mxu0 %v595
    %1983 = vmatprep.subr.mxu0 %v660
    %1984 = vmatpush1.msra.mxu0 %v659
    %1985 = vmatprep.subr.mxu0 0.0
    %1986 = vmatpush1.msra.mxu0 0.0
    %1987 = vmatprep.subr.mxu0 0.0
    %1988 = vmatpush1.msra.mxu0 0.0
    %1989 = vmatprep.subr.mxu0 0.0
    %1990 = vmatpush1.msra.mxu0 0.0
    %1991 = vmatprep.subr.mxu0 0.0
    %1992 = vmatpush1.msra.mxu0 0.0
    %1993 = vmatprep.subr.mxu0 0.0
    %1994 = vmatpush1.msra.mxu0 0.0
    %1995 = vmatprep.subr.mxu0 0.0
    %1996 = vmatpush1.msra.mxu0 0.0
    %1997 = vmatprep.subr.mxu0 0.0
    %1998 = vmatpush1.msra.mxu0 0.0
    %1999 = vmatprep.subr.mxu0 0.0
    %2000 = vmatpush1.msra.mxu0 0.0
    %2001 = vmatprep.subr.mxu0 0.0
    %2002 = vmatpush1.msra.mxu0 0.0
    %2003 = vmatprep.subr.mxu0 0.0
    %2004 = vmatpush1.msra.mxu0 0.0
    %2005 = vmatprep.subr.mxu0 0.0
    %2006 = vmatpush1.msra.mxu0 0.0
    %2007 = vmatprep.subr.mxu0 0.0
    %2008 = vmatpush1.msra.mxu0 0.0
    %2009 = vmatprep.subr.mxu0 0.0
    %2010 = vmatpush1.msra.mxu0 0.0
    %2011 = vmatprep.subr.mxu0 0.0
    %2012 = vmatpush1.msra.mxu0 0.0
    %2013 = vmatprep.subr.mxu0 0.0
    %2014 = vmatpush1.msra.mxu0 0.0
    %2015 = vmatprep.subr.mxu0 0.0
    %2016 = vmatpush1.msra.mxu0 0.0
    %2017 = vmatprep.subr.mxu0 0.0
    %2018 = vmatpush1.msra.mxu0 0.0
    %2019 = vmatprep.subr.mxu0 0.0
    %2020 = vmatpush1.msra.mxu0 0.0
    %2021 = vmatprep.subr.mxu0 0.0
    %2022 = vmatpush1.msra.mxu0 0.0
    %2023 = vmatprep.subr.mxu0 0.0
    %2024 = vmatpush1.msra.mxu0 0.0
    %2025 = vmatprep.subr.mxu0 0.0
    %2026 = vmatpush1.msra.mxu0 0.0
    %2027 = vmatprep.subr.mxu0 0.0
    %2028 = vmatpush1.msra.mxu0 0.0
    %2029 = vmatprep.subr.mxu0 0.0
    %2030 = vmatpush1.msra.mxu0 0.0
    %2031 = vmatprep.subr.mxu0 0.0
    %2032 = vmatpush1.msra.mxu0 0.0
    %2033 = vmatprep.mubr.f32.mxu0 0.0
    %2034 = vmatmul.mubr.f32.gmra.mrb[0].mxu0 %v689
    %v2035 = vpop.f32.mrb[0].mxu0
    %v2036 = vadd.f32 0.0, %v2035
    %v2037 = vpop.f32.mrb[0].mxu0
    %v2038 = vadd.f32 0.0, %v2037
    %2039 = vdwg.mxu0
    %2040 = vmatprep.subr.mxu0 %v214
    %2041 = vmatpush1.msra.mxu0 %v213
    %2042 = vmatprep.subr.mxu0 %v278
    %2043 = vmatpush1.msra.mxu0 %v277
    %2044 = vmatprep.subr.mxu0 %v342
    %2045 = vmatpush1.msra.mxu0 %v341
    %2046 = vmatprep.subr.mxu0 %v406
    %2047 = vmatpush1.msra.mxu0 %v405
    %2048 = vmatprep.subr.mxu0 %v470
    %2049 = vmatpush1.msra.mxu0 %v469
    %2050 = vmatprep.subr.mxu0 %v534
    %2051 = vmatpush1.msra.mxu0 %v533
    %2052 = vmatprep.subr.mxu0 %v598
    %2053 = vmatpush1.msra.mxu0 %v597
    %2054 = vmatprep.subr.mxu0 %v662
    %2055 = vmatpush1.msra.mxu0 %v661
    %2056 = vmatprep.subr.mxu0 0.0
    %2057 = vmatpush1.msra.mxu0 0.0
    %2058 = vmatprep.subr.mxu0 0.0
    %2059 = vmatpush1.msra.mxu0 0.0
    %2060 = vmatprep.subr.mxu0 0.0
    %2061 = vmatpush1.msra.mxu0 0.0
    %2062 = vmatprep.subr.mxu0 0.0
    %2063 = vmatpush1.msra.mxu0 0.0
    %2064 = vmatprep.subr.mxu0 0.0
    %2065 = vmatpush1.msra.mxu0 0.0
    %2066 = vmatprep.subr.mxu0 0.0
    %2067 = vmatpush1.msra.mxu0 0.0
    %2068 = vmatprep.subr.mxu0 0.0
    %2069 = vmatpush1.msra.mxu0 0.0
    %2070 = vmatprep.subr.mxu0 0.0
    %2071 = vmatpush1.msra.mxu0 0.0
    %2072 = vmatprep.subr.mxu0 0.0
    %2073 = vmatpush1.msra.mxu0 0.0
    %2074 = vmatprep.subr.mxu0 0.0
    %2075 = vmatpush1.msra.mxu0 0.0
    %2076 = vmatprep.subr.mxu0 0.0
    %2077 = vmatpush1.msra.mxu0 0.0
    %2078 = vmatprep.subr.mxu0 0.0
    %2079 = vmatpush1.msra.mxu0 0.0
    %2080 = vmatprep.subr.mxu0 0.0
    %2081 = vmatpush1.msra.mxu0 0.0
    %2082 = vmatprep.subr.mxu0 0.0
    %2083 = vmatpush1.msra.mxu0 0.0
    %2084 = vmatprep.subr.mxu0 0.0
    %2085 = vmatpush1.msra.mxu0 0.0
    %2086 = vmatprep.subr.mxu0 0.0
    %2087 = vmatpush1.msra.mxu0 0.0
    %2088 = vmatprep.subr.mxu0 0.0
    %2089 = vmatpush1.msra.mxu0 0.0
    %2090 = vmatprep.subr.mxu0 0.0
    %2091 = vmatpush1.msra.mxu0 0.0
    %2092 = vmatprep.subr.mxu0 0.0
    %2093 = vmatpush1.msra.mxu0 0.0
    %2094 = vmatprep.subr.mxu0 0.0
    %2095 = vmatpush1.msra.mxu0 0.0
    %2096 = vmatprep.subr.mxu0 0.0
    %2097 = vmatpush1.msra.mxu0 0.0
    %2098 = vmatprep.subr.mxu0 0.0
    %2099 = vmatpush1.msra.mxu0 0.0
    %2100 = vmatprep.subr.mxu0 0.0
    %2101 = vmatpush1.msra.mxu0 0.0
    %2102 = vmatprep.subr.mxu0 0.0
    %2103 = vmatpush1.msra.mxu0 0.0
    %2104 = vmatprep.mubr.f32.mxu0 0.0
    %2105 = vmatmul.mubr.f32.gmra.mrb[0].mxu0 %v689
    %v2106 = vpop.f32.mrb[0].mxu0
    %v2107 = vadd.f32 0.0, %v2106
    %v2108 = vpop.f32.mrb[0].mxu0
    %v2109 = vadd.f32 0.0, %v2108
    %2110 = vdwg.mxu0
    %2111 = vmatprep.subr.mxu0 %v216
    %2112 = vmatpush1.msra.mxu0 %v215
    %2113 = vmatprep.subr.mxu0 %v280
    %2114 = vmatpush1.msra.mxu0 %v279
    %2115 = vmatprep.subr.mxu0 %v344
    %2116 = vmatpush1.msra.mxu0 %v343
    %2117 = vmatprep.subr.mxu0 %v408
    %2118 = vmatpush1.msra.mxu0 %v407
    %2119 = vmatprep.subr.mxu0 %v472
    %2120 = vmatpush1.msra.mxu0 %v471
    %2121 = vmatprep.subr.mxu0 %v536
    %2122 = vmatpush1.msra.mxu0 %v535
    %2123 = vmatprep.subr.mxu0 %v600
    %2124 = vmatpush1.msra.mxu0 %v599
    %2125 = vmatprep.subr.mxu0 %v664
    %2126 = vmatpush1.msra.mxu0 %v663
    %2127 = vmatprep.subr.mxu0 0.0
    %2128 = vmatpush1.msra.mxu0 0.0
    %2129 = vmatprep.subr.mxu0 0.0
    %2130 = vmatpush1.msra.mxu0 0.0
    %2131 = vmatprep.subr.mxu0 0.0
    %2132 = vmatpush1.msra.mxu0 0.0
    %2133 = vmatprep.subr.mxu0 0.0
    %2134 = vmatpush1.msra.mxu0 0.0
    %2135 = vmatprep.subr.mxu0 0.0
    %2136 = vmatpush1.msra.mxu0 0.0
    %2137 = vmatprep.subr.mxu0 0.0
    %2138 = vmatpush1.msra.mxu0 0.0
    %2139 = vmatprep.subr.mxu0 0.0
    %2140 = vmatpush1.msra.mxu0 0.0
    %2141 = vmatprep.subr.mxu0 0.0
    %2142 = vmatpush1.msra.mxu0 0.0
    %2143 = vmatprep.subr.mxu0 0.0
    %2144 = vmatpush1.msra.mxu0 0.0
    %2145 = vmatprep.subr.mxu0 0.0
    %2146 = vmatpush1.msra.mxu0 0.0
    %2147 = vmatprep.subr.mxu0 0.0
    %2148 = vmatpush1.msra.mxu0 0.0
    %2149 = vmatprep.subr.mxu0 0.0
    %2150 = vmatpush1.msra.mxu0 0.0
    %2151 = vmatprep.subr.mxu0 0.0
    %2152 = vmatpush1.msra.mxu0 0.0
    %2153 = vmatprep.subr.mxu0 0.0
    %2154 = vmatpush1.msra.mxu0 0.0
    %2155 = vmatprep.subr.mxu0 0.0
    %2156 = vmatpush1.msra.mxu0 0.0
    %2157 = vmatprep.subr.mxu0 0.0
    %2158 = vmatpush1.msra.mxu0 0.0
    %2159 = vmatprep.subr.mxu0 0.0
    %2160 = vmatpush1.msra.mxu0 0.0
    %2161 = vmatprep.subr.mxu0 0.0
    %2162 = vmatpush1.msra.mxu0 0.0
    %2163 = vmatprep.subr.mxu0 0.0
    %2164 = vmatpush1.msra.mxu0 0.0
    %2165 = vmatprep.subr.mxu0 0.0
    %2166 = vmatpush1.msra.mxu0 0.0
    %2167 = vmatprep.subr.mxu0 0.0
    %2168 = vmatpush1.msra.mxu0 0.0
    %2169 = vmatprep.subr.mxu0 0.0
    %2170 = vmatpush1.msra.mxu0 0.0
    %2171 = vmatprep.subr.mxu0 0.0
    %2172 = vmatpush1.msra.mxu0 0.0
    %2173 = vmatprep.subr.mxu0 0.0
    %2174 = vmatpush1.msra.mxu0 0.0
    %2175 = vmatprep.mubr.f32.mxu0 0.0
    %2176 = vmatmul.mubr.f32.gmra.mrb[0].mxu0 %v689
    %v2177 = vpop.f32.mrb[0].mxu0
    %v2178 = vadd.f32 0.0, %v2177
    %v2179 = vpop.f32.mrb[0].mxu0
    %v2180 = vadd.f32 0.0, %v2179
    %2181 = vdwg.mxu0
    %2182 = vmatprep.subr.mxu0 %v218
    %2183 = vmatpush1.msra.mxu0 %v217
    %2184 = vmatprep.subr.mxu0 %v282
    %2185 = vmatpush1.msra.mxu0 %v281
    %2186 = vmatprep.subr.mxu0 %v346
    %2187 = vmatpush1.msra.mxu0 %v345
    %2188 = vmatprep.subr.mxu0 %v410
    %2189 = vmatpush1.msra.mxu0 %v409
    %2190 = vmatprep.subr.mxu0 %v474
    %2191 = vmatpush1.msra.mxu0 %v473
    %2192 = vmatprep.subr.mxu0 %v538
    %2193 = vmatpush1.msra.mxu0 %v537
    %2194 = vmatprep.subr.mxu0 %v602
    %2195 = vmatpush1.msra.mxu0 %v601
    %2196 = vmatprep.subr.mxu0 %v666
    %2197 = vmatpush1.msra.mxu0 %v665
    %2198 = vmatprep.subr.mxu0 0.0
    %2199 = vmatpush1.msra.mxu0 0.0
    %2200 = vmatprep.subr.mxu0 0.0
    %2201 = vmatpush1.msra.mxu0 0.0
    %2202 = vmatprep.subr.mxu0 0.0
    %2203 = vmatpush1.msra.mxu0 0.0
    %2204 = vmatprep.subr.mxu0 0.0
    %2205 = vmatpush1.msra.mxu0 0.0
    %2206 = vmatprep.subr.mxu0 0.0
    %2207 = vmatpush1.msra.mxu0 0.0
    %2208 = vmatprep.subr.mxu0 0.0
    %2209 = vmatpush1.msra.mxu0 0.0
    %2210 = vmatprep.subr.mxu0 0.0
    %2211 = vmatpush1.msra.mxu0 0.0
    %2212 = vmatprep.subr.mxu0 0.0
    %2213 = vmatpush1.msra.mxu0 0.0
    %2214 = vmatprep.subr.mxu0 0.0
    %2215 = vmatpush1.msra.mxu0 0.0
    %2216 = vmatprep.subr.mxu0 0.0
    %2217 = vmatpush1.msra.mxu0 0.0
    %2218 = vmatprep.subr.mxu0 0.0
    %2219 = vmatpush1.msra.mxu0 0.0
    %2220 = vmatprep.subr.mxu0 0.0
    %2221 = vmatpush1.msra.mxu0 0.0
    %2222 = vmatprep.subr.mxu0 0.0
    %2223 = vmatpush1.msra.mxu0 0.0
    %2224 = vmatprep.subr.mxu0 0.0
    %2225 = vmatpush1.msra.mxu0 0.0
    %2226 = vmatprep.subr.mxu0 0.0
    %2227 = vmatpush1.msra.mxu0 0.0
    %2228 = vmatprep.subr.mxu0 0.0
    %2229 = vmatpush1.msra.mxu0 0.0
    %2230 = vmatprep.subr.mxu0 0.0
    %2231 = vmatpush1.msra.mxu0 0.0
    %2232 = vmatprep.subr.mxu0 0.0
    %2233 = vmatpush1.msra.mxu0 0.0
    %2234 = vmatprep.subr.mxu0 0.0
    %2235 = vmatpush1.msra.mxu0 0.0
    %2236 = vmatprep.subr.mxu0 0.0
    %2237 = vmatpush1.msra.mxu0 0.0
    %2238 = vmatprep.subr.mxu0 0.0
    %2239 = vmatpush1.msra.mxu0 0.0
    %2240 = vmatprep.subr.mxu0 0.0
    %2241 = vmatpush1.msra.mxu0 0.0
    %2242 = vmatprep.subr.mxu0 0.0
    %2243 = vmatpush1.msra.mxu0 0.0
    %2244 = vmatprep.subr.mxu0 0.0
    %2245 = vmatpush1.msra.mxu0 0.0
    %2246 = vmatprep.mubr.f32.mxu0 0.0
    %2247 = vmatmul.mubr.f32.gmra.mrb[0].mxu0 %v689
    %v2248 = vpop.f32.mrb[0].mxu0
    %v2249 = vadd.f32 0.0, %v2248
    %v2250 = vpop.f32.mrb[0].mxu0
    %v2251 = vadd.f32 0.0, %v2250
    %2252 = vdwg.mxu0
    %2253 = vmatprep.subr.mxu0 %v220
    %2254 = vmatpush1.msra.mxu0 %v219
    %2255 = vmatprep.subr.mxu0 %v284
    %2256 = vmatpush1.msra.mxu0 %v283
    %2257 = vmatprep.subr.mxu0 %v348
    %2258 = vmatpush1.msra.mxu0 %v347
    %2259 = vmatprep.subr.mxu0 %v412
    %2260 = vmatpush1.msra.mxu0 %v411
    %2261 = vmatprep.subr.mxu0 %v476
    %2262 = vmatpush1.msra.mxu0 %v475
    %2263 = vmatprep.subr.mxu0 %v540
    %2264 = vmatpush1.msra.mxu0 %v539
    %2265 = vmatprep.subr.mxu0 %v604
    %2266 = vmatpush1.msra.mxu0 %v603
    %2267 = vmatprep.subr.mxu0 %v668
    %2268 = vmatpush1.msra.mxu0 %v667
    %2269 = vmatprep.subr.mxu0 0.0
    %2270 = vmatpush1.msra.mxu0 0.0
    %2271 = vmatprep.subr.mxu0 0.0
    %2272 = vmatpush1.msra.mxu0 0.0
    %2273 = vmatprep.subr.mxu0 0.0
    %2274 = vmatpush1.msra.mxu0 0.0
    %2275 = vmatprep.subr.mxu0 0.0
    %2276 = vmatpush1.msra.mxu0 0.0
    %2277 = vmatprep.subr.mxu0 0.0
    %2278 = vmatpush1.msra.mxu0 0.0
    %2279 = vmatprep.subr.mxu0 0.0
    %2280 = vmatpush1.msra.mxu0 0.0
    %2281 = vmatprep.subr.mxu0 0.0
    %2282 = vmatpush1.msra.mxu0 0.0
    %2283 = vmatprep.subr.mxu0 0.0
    %2284 = vmatpush1.msra.mxu0 0.0
    %2285 = vmatprep.subr.mxu0 0.0
    %2286 = vmatpush1.msra.mxu0 0.0
    %2287 = vmatprep.subr.mxu0 0.0
    %2288 = vmatpush1.msra.mxu0 0.0
    %2289 = vmatprep.subr.mxu0 0.0
    %2290 = vmatpush1.msra.mxu0 0.0
    %2291 = vmatprep.subr.mxu0 0.0
    %2292 = vmatpush1.msra.mxu0 0.0
    %2293 = vmatprep.subr.mxu0 0.0
    %2294 = vmatpush1.msra.mxu0 0.0
    %2295 = vmatprep.subr.mxu0 0.0
    %2296 = vmatpush1.msra.mxu0 0.0
    %2297 = vmatprep.subr.mxu0 0.0
    %2298 = vmatpush1.msra.mxu0 0.0
    %2299 = vmatprep.subr.mxu0 0.0
    %2300 = vmatpush1.msra.mxu0 0.0
    %2301 = vmatprep.subr.mxu0 0.0
    %2302 = vmatpush1.msra.mxu0 0.0
    %2303 = vmatprep.subr.mxu0 0.0
    %2304 = vmatpush1.msra.mxu0 0.0
    %2305 = vmatprep.subr.mxu0 0.0
    %2306 = vmatpush1.msra.mxu0 0.0
    %2307 = vmatprep.subr.mxu0 0.0
    %2308 = vmatpush1.msra.mxu0 0.0
    %2309 = vmatprep.subr.mxu0 0.0
    %2310 = vmatpush1.msra.mxu0 0.0
    %2311 = vmatprep.subr.mxu0 0.0
    %2312 = vmatpush1.msra.mxu0 0.0
    %2313 = vmatprep.subr.mxu0 0.0
    %2314 = vmatpush1.msra.mxu0 0.0
    %2315 = vmatprep.subr.mxu0 0.0
    %2316 = vmatpush1.msra.mxu0 0.0
    %2317 = vmatprep.mubr.f32.mxu0 0.0
    %2318 = vmatmul.mubr.f32.gmra.mrb[0].mxu0 %v689
    %v2319 = vpop.f32.mrb[0].mxu0
    %v2320 = vadd.f32 0.0, %v2319
    %v2321 = vpop.f32.mrb[0].mxu0
    %v2322 = vadd.f32 0.0, %v2321
    %2323 = vdwg.mxu0
    %2324 = vmatprep.subr.mxu0 %v222
    %2325 = vmatpush1.msra.mxu0 %v221
    %2326 = vmatprep.subr.mxu0 %v286
    %2327 = vmatpush1.msra.mxu0 %v285
    %2328 = vmatprep.subr.mxu0 %v350
    %2329 = vmatpush1.msra.mxu0 %v349
    %2330 = vmatprep.subr.mxu0 %v414
    %2331 = vmatpush1.msra.mxu0 %v413
    %2332 = vmatprep.subr.mxu0 %v478
    %2333 = vmatpush1.msra.mxu0 %v477
    %2334 = vmatprep.subr.mxu0 %v542
    %2335 = vmatpush1.msra.mxu0 %v541
    %2336 = vmatprep.subr.mxu0 %v606
    %2337 = vmatpush1.msra.mxu0 %v605
    %2338 = vmatprep.subr.mxu0 %v670
    %2339 = vmatpush1.msra.mxu0 %v669
    %2340 = vmatprep.subr.mxu0 0.0
    %2341 = vmatpush1.msra.mxu0 0.0
    %2342 = vmatprep.subr.mxu0 0.0
    %2343 = vmatpush1.msra.mxu0 0.0
    %2344 = vmatprep.subr.mxu0 0.0
    %2345 = vmatpush1.msra.mxu0 0.0
    %2346 = vmatprep.subr.mxu0 0.0
    %2347 = vmatpush1.msra.mxu0 0.0
    %2348 = vmatprep.subr.mxu0 0.0
    %2349 = vmatpush1.msra.mxu0 0.0
    %2350 = vmatprep.subr.mxu0 0.0
    %2351 = vmatpush1.msra.mxu0 0.0
    %2352 = vmatprep.subr.mxu0 0.0
    %2353 = vmatpush1.msra.mxu0 0.0
    %2354 = vmatprep.subr.mxu0 0.0
    %2355 = vmatpush1.msra.mxu0 0.0
    %2356 = vmatprep.subr.mxu0 0.0
    %2357 = vmatpush1.msra.mxu0 0.0
    %2358 = vmatprep.subr.mxu0 0.0
    %2359 = vmatpush1.msra.mxu0 0.0
    %2360 = vmatprep.subr.mxu0 0.0
    %2361 = vmatpush1.msra.mxu0 0.0
    %2362 = vmatprep.subr.mxu0 0.0
    %2363 = vmatpush1.msra.mxu0 0.0
    %2364 = vmatprep.subr.mxu0 0.0
    %2365 = vmatpush1.msra.mxu0 0.0
    %2366 = vmatprep.subr.mxu0 0.0
    %2367 = vmatpush1.msra.mxu0 0.0
    %2368 = vmatprep.subr.mxu0 0.0
    %2369 = vmatpush1.msra.mxu0 0.0
    %2370 = vmatprep.subr.mxu0 0.0
    %2371 = vmatpush1.msra.mxu0 0.0
    %2372 = vmatprep.subr.mxu0 0.0
    %2373 = vmatpush1.msra.mxu0 0.0
    %2374 = vmatprep.subr.mxu0 0.0
    %2375 = vmatpush1.msra.mxu0 0.0
    %2376 = vmatprep.subr.mxu0 0.0
    %2377 = vmatpush1.msra.mxu0 0.0
    %2378 = vmatprep.subr.mxu0 0.0
    %2379 = vmatpush1.msra.mxu0 0.0
    %2380 = vmatprep.subr.mxu0 0.0
    %2381 = vmatpush1.msra.mxu0 0.0
    %2382 = vmatprep.subr.mxu0 0.0
    %2383 = vmatpush1.msra.mxu0 0.0
    %2384 = vmatprep.subr.mxu0 0.0
    %2385 = vmatpush1.msra.mxu0 0.0
    %2386 = vmatprep.subr.mxu0 0.0
    %2387 = vmatpush1.msra.mxu0 0.0
    %2388 = vmatprep.mubr.f32.mxu0 0.0
    %2389 = vmatmul.mubr.f32.gmra.mrb[0].mxu0 %v689
    %v2390 = vpop.f32.mrb[0].mxu0
    %v2391 = vadd.f32 0.0, %v2390
    %v2392 = vpop.f32.mrb[0].mxu0
    %v2393 = vadd.f32 0.0, %v2392
    %2394 = vdwg.mxu0
    %2395 = vmatprep.subr.mxu0 %v224
    %2396 = vmatpush1.msra.mxu0 %v223
    %2397 = vmatprep.subr.mxu0 %v288
    %2398 = vmatpush1.msra.mxu0 %v287
    %2399 = vmatprep.subr.mxu0 %v352
    %2400 = vmatpush1.msra.mxu0 %v351
    %2401 = vmatprep.subr.mxu0 %v416
    %2402 = vmatpush1.msra.mxu0 %v415
    %2403 = vmatprep.subr.mxu0 %v480
    %2404 = vmatpush1.msra.mxu0 %v479
    %2405 = vmatprep.subr.mxu0 %v544
    %2406 = vmatpush1.msra.mxu0 %v543
    %2407 = vmatprep.subr.mxu0 %v608
    %2408 = vmatpush1.msra.mxu0 %v607
    %2409 = vmatprep.subr.mxu0 %v672
    %2410 = vmatpush1.msra.mxu0 %v671
    %2411 = vmatprep.subr.mxu0 0.0
    %2412 = vmatpush1.msra.mxu0 0.0
    %2413 = vmatprep.subr.mxu0 0.0
    %2414 = vmatpush1.msra.mxu0 0.0
    %2415 = vmatprep.subr.mxu0 0.0
    %2416 = vmatpush1.msra.mxu0 0.0
    %2417 = vmatprep.subr.mxu0 0.0
    %2418 = vmatpush1.msra.mxu0 0.0
    %2419 = vmatprep.subr.mxu0 0.0
    %2420 = vmatpush1.msra.mxu0 0.0
    %2421 = vmatprep.subr.mxu0 0.0
    %2422 = vmatpush1.msra.mxu0 0.0
    %2423 = vmatprep.subr.mxu0 0.0
    %2424 = vmatpush1.msra.mxu0 0.0
    %2425 = vmatprep.subr.mxu0 0.0
    %2426 = vmatpush1.msra.mxu0 0.0
    %2427 = vmatprep.subr.mxu0 0.0
    %2428 = vmatpush1.msra.mxu0 0.0
    %2429 = vmatprep.subr.mxu0 0.0
    %2430 = vmatpush1.msra.mxu0 0.0
    %2431 = vmatprep.subr.mxu0 0.0
    %2432 = vmatpush1.msra.mxu0 0.0
    %2433 = vmatprep.subr.mxu0 0.0
    %2434 = vmatpush1.msra.mxu0 0.0
    %2435 = vmatprep.subr.mxu0 0.0
    %2436 = vmatpush1.msra.mxu0 0.0
    %2437 = vmatprep.subr.mxu0 0.0
    %2438 = vmatpush1.msra.mxu0 0.0
    %2439 = vmatprep.subr.mxu0 0.0
    %2440 = vmatpush1.msra.mxu0 0.0
    %2441 = vmatprep.subr.mxu0 0.0
    %2442 = vmatpush1.msra.mxu0 0.0
    %2443 = vmatprep.subr.mxu0 0.0
    %2444 = vmatpush1.msra.mxu0 0.0
    %2445 = vmatprep.subr.mxu0 0.0
    %2446 = vmatpush1.msra.mxu0 0.0
    %2447 = vmatprep.subr.mxu0 0.0
    %2448 = vmatpush1.msra.mxu0 0.0
    %2449 = vmatprep.subr.mxu0 0.0
    %2450 = vmatpush1.msra.mxu0 0.0
    %2451 = vmatprep.subr.mxu0 0.0
    %2452 = vmatpush1.msra.mxu0 0.0
    %2453 = vmatprep.subr.mxu0 0.0
    %2454 = vmatpush1.msra.mxu0 0.0
    %2455 = vmatprep.subr.mxu0 0.0
    %2456 = vmatpush1.msra.mxu0 0.0
    %2457 = vmatprep.subr.mxu0 0.0
    %2458 = vmatpush1.msra.mxu0 0.0
    %2459 = vmatprep.mubr.f32.mxu0 0.0
    %2460 = vmatmul.mubr.f32.gmra.mrb[0].mxu0 %v689
    %v2461 = vpop.f32.mrb[0].mxu0
    %v2462 = vadd.f32 0.0, %v2461
    %v2463 = vpop.f32.mrb[0].mxu0
    %v2464 = vadd.f32 0.0, %v2463
    %2465 = vdwg.mxu0
    %2466 = vmatprep.subr.mxu0 %v226
    %2467 = vmatpush1.msra.mxu0 %v225
    %2468 = vmatprep.subr.mxu0 %v290
    %2469 = vmatpush1.msra.mxu0 %v289
    %2470 = vmatprep.subr.mxu0 %v354
    %2471 = vmatpush1.msra.mxu0 %v353
    %2472 = vmatprep.subr.mxu0 %v418
    %2473 = vmatpush1.msra.mxu0 %v417
    %2474 = vmatprep.subr.mxu0 %v482
    %2475 = vmatpush1.msra.mxu0 %v481
    %2476 = vmatprep.subr.mxu0 %v546
    %2477 = vmatpush1.msra.mxu0 %v545
    %2478 = vmatprep.subr.mxu0 %v610
    %2479 = vmatpush1.msra.mxu0 %v609
    %2480 = vmatprep.subr.mxu0 %v674
    %2481 = vmatpush1.msra.mxu0 %v673
    %2482 = vmatprep.subr.mxu0 0.0
    %2483 = vmatpush1.msra.mxu0 0.0
    %2484 = vmatprep.subr.mxu0 0.0
    %2485 = vmatpush1.msra.mxu0 0.0
    %2486 = vmatprep.subr.mxu0 0.0
    %2487 = vmatpush1.msra.mxu0 0.0
    %2488 = vmatprep.subr.mxu0 0.0
    %2489 = vmatpush1.msra.mxu0 0.0
    %2490 = vmatprep.subr.mxu0 0.0
    %2491 = vmatpush1.msra.mxu0 0.0
    %2492 = vmatprep.subr.mxu0 0.0
    %2493 = vmatpush1.msra.mxu0 0.0
    %2494 = vmatprep.subr.mxu0 0.0
    %2495 = vmatpush1.msra.mxu0 0.0
    %2496 = vmatprep.subr.mxu0 0.0
    %2497 = vmatpush1.msra.mxu0 0.0
    %2498 = vmatprep.subr.mxu0 0.0
    %2499 = vmatpush1.msra.mxu0 0.0
    %2500 = vmatprep.subr.mxu0 0.0
    %2501 = vmatpush1.msra.mxu0 0.0
    %2502 = vmatprep.subr.mxu0 0.0
    %2503 = vmatpush1.msra.mxu0 0.0
    %2504 = vmatprep.subr.mxu0 0.0
    %2505 = vmatpush1.msra.mxu0 0.0
    %2506 = vmatprep.subr.mxu0 0.0
    %2507 = vmatpush1.msra.mxu0 0.0
    %2508 = vmatprep.subr.mxu0 0.0
    %2509 = vmatpush1.msra.mxu0 0.0
    %2510 = vmatprep.subr.mxu0 0.0
    %2511 = vmatpush1.msra.mxu0 0.0
    %2512 = vmatprep.subr.mxu0 0.0
    %2513 = vmatpush1.msra.mxu0 0.0
    %2514 = vmatprep.subr.mxu0 0.0
    %2515 = vmatpush1.msra.mxu0 0.0
    %2516 = vmatprep.subr.mxu0 0.0
    %2517 = vmatpush1.msra.mxu0 0.0
    %2518 = vmatprep.subr.mxu0 0.0
    %2519 = vmatpush1.msra.mxu0 0.0
    %2520 = vmatprep.subr.mxu0 0.0
    %2521 = vmatpush1.msra.mxu0 0.0
    %2522 = vmatprep.subr.mxu0 0.0
    %2523 = vmatpush1.msra.mxu0 0.0
    %2524 = vmatprep.subr.mxu0 0.0
    %2525 = vmatpush1.msra.mxu0 0.0
    %2526 = vmatprep.subr.mxu0 0.0
    %2527 = vmatpush1.msra.mxu0 0.0
    %2528 = vmatprep.subr.mxu0 0.0
    %2529 = vmatpush1.msra.mxu0 0.0
    %2530 = vmatprep.mubr.f32.mxu0 0.0
    %2531 = vmatmul.mubr.f32.gmra.mrb[0].mxu0 %v689
    %v2532 = vpop.f32.mrb[0].mxu0
    %v2533 = vadd.f32 0.0, %v2532
    %v2534 = vpop.f32.mrb[0].mxu0
    %v2535 = vadd.f32 0.0, %v2534
    %2536 = vdwg.mxu0
    %2537 = vmatprep.subr.mxu0 %v228
    %2538 = vmatpush1.msra.mxu0 %v227
    %2539 = vmatprep.subr.mxu0 %v292
    %2540 = vmatpush1.msra.mxu0 %v291
    %2541 = vmatprep.subr.mxu0 %v356
    %2542 = vmatpush1.msra.mxu0 %v355
    %2543 = vmatprep.subr.mxu0 %v420
    %2544 = vmatpush1.msra.mxu0 %v419
    %2545 = vmatprep.subr.mxu0 %v484
    %2546 = vmatpush1.msra.mxu0 %v483
    %2547 = vmatprep.subr.mxu0 %v548
    %2548 = vmatpush1.msra.mxu0 %v547
    %2549 = vmatprep.subr.mxu0 %v612
    %2550 = vmatpush1.msra.mxu0 %v611
    %2551 = vmatprep.subr.mxu0 %v676
    %2552 = vmatpush1.msra.mxu0 %v675
    %2553 = vmatprep.subr.mxu0 0.0
    %2554 = vmatpush1.msra.mxu0 0.0
    %2555 = vmatprep.subr.mxu0 0.0
    %2556 = vmatpush1.msra.mxu0 0.0
    %2557 = vmatprep.subr.mxu0 0.0
    %2558 = vmatpush1.msra.mxu0 0.0
    %2559 = vmatprep.subr.mxu0 0.0
    %2560 = vmatpush1.msra.mxu0 0.0
    %2561 = vmatprep.subr.mxu0 0.0
    %2562 = vmatpush1.msra.mxu0 0.0
    %2563 = vmatprep.subr.mxu0 0.0
    %2564 = vmatpush1.msra.mxu0 0.0
    %2565 = vmatprep.subr.mxu0 0.0
    %2566 = vmatpush1.msra.mxu0 0.0
    %2567 = vmatprep.subr.mxu0 0.0
    %2568 = vmatpush1.msra.mxu0 0.0
    %2569 = vmatprep.subr.mxu0 0.0
    %2570 = vmatpush1.msra.mxu0 0.0
    %2571 = vmatprep.subr.mxu0 0.0
    %2572 = vmatpush1.msra.mxu0 0.0
    %2573 = vmatprep.subr.mxu0 0.0
    %2574 = vmatpush1.msra.mxu0 0.0
    %2575 = vmatprep.subr.mxu0 0.0
    %2576 = vmatpush1.msra.mxu0 0.0
    %2577 = vmatprep.subr.mxu0 0.0
    %2578 = vmatpush1.msra.mxu0 0.0
    %2579 = vmatprep.subr.mxu0 0.0
    %2580 = vmatpush1.msra.mxu0 0.0
    %2581 = vmatprep.subr.mxu0 0.0
    %2582 = vmatpush1.msra.mxu0 0.0
    %2583 = vmatprep.subr.mxu0 0.0
    %2584 = vmatpush1.msra.mxu0 0.0
    %2585 = vmatprep.subr.mxu0 0.0
    %2586 = vmatpush1.msra.mxu0 0.0
    %2587 = vmatprep.subr.mxu0 0.0
    %2588 = vmatpush1.msra.mxu0 0.0
    %2589 = vmatprep.subr.mxu0 0.0
    %2590 = vmatpush1.msra.mxu0 0.0
    %2591 = vmatprep.subr.mxu0 0.0
    %2592 = vmatpush1.msra.mxu0 0.0
    %2593 = vmatprep.subr.mxu0 0.0
    %2594 = vmatpush1.msra.mxu0 0.0
    %2595 = vmatprep.subr.mxu0 0.0
    %2596 = vmatpush1.msra.mxu0 0.0
    %2597 = vmatprep.subr.mxu0 0.0
    %2598 = vmatpush1.msra.mxu0 0.0
    %2599 = vmatprep.subr.mxu0 0.0
    %2600 = vmatpush1.msra.mxu0 0.0
    %2601 = vmatprep.mubr.f32.mxu0 0.0
    %2602 = vmatmul.mubr.f32.gmra.mrb[0].mxu0 %v689
    %v2603 = vpop.f32.mrb[0].mxu0
    %v2604 = vadd.f32 0.0, %v2603
    %v2605 = vpop.f32.mrb[0].mxu0
    %v2606 = vadd.f32 0.0, %v2605
    %2607 = vdwg.mxu0
    %2608 = vmatprep.subr.mxu0 %v230
    %2609 = vmatpush1.msra.mxu0 %v229
    %2610 = vmatprep.subr.mxu0 %v294
    %2611 = vmatpush1.msra.mxu0 %v293
    %2612 = vmatprep.subr.mxu0 %v358
    %2613 = vmatpush1.msra.mxu0 %v357
    %2614 = vmatprep.subr.mxu0 %v422
    %2615 = vmatpush1.msra.mxu0 %v421
    %2616 = vmatprep.subr.mxu0 %v486
    %2617 = vmatpush1.msra.mxu0 %v485
    %2618 = vmatprep.subr.mxu0 %v550
    %2619 = vmatpush1.msra.mxu0 %v549
    %2620 = vmatprep.subr.mxu0 %v614
    %2621 = vmatpush1.msra.mxu0 %v613
    %2622 = vmatprep.subr.mxu0 %v678
    %2623 = vmatpush1.msra.mxu0 %v677
    %2624 = vmatprep.subr.mxu0 0.0
    %2625 = vmatpush1.msra.mxu0 0.0
    %2626 = vmatprep.subr.mxu0 0.0
    %2627 = vmatpush1.msra.mxu0 0.0
    %2628 = vmatprep.subr.mxu0 0.0
    %2629 = vmatpush1.msra.mxu0 0.0
    %2630 = vmatprep.subr.mxu0 0.0
    %2631 = vmatpush1.msra.mxu0 0.0
    %2632 = vmatprep.subr.mxu0 0.0
    %2633 = vmatpush1.msra.mxu0 0.0
    %2634 = vmatprep.subr.mxu0 0.0
    %2635 = vmatpush1.msra.mxu0 0.0
    %2636 = vmatprep.subr.mxu0 0.0
    %2637 = vmatpush1.msra.mxu0 0.0
    %2638 = vmatprep.subr.mxu0 0.0
    %2639 = vmatpush1.msra.mxu0 0.0
    %2640 = vmatprep.subr.mxu0 0.0
    %2641 = vmatpush1.msra.mxu0 0.0
    %2642 = vmatprep.subr.mxu0 0.0
    %2643 = vmatpush1.msra.mxu0 0.0
    %2644 = vmatprep.subr.mxu0 0.0
    %2645 = vmatpush1.msra.mxu0 0.0
    %2646 = vmatprep.subr.mxu0 0.0
    %2647 = vmatpush1.msra.mxu0 0.0
    %2648 = vmatprep.subr.mxu0 0.0
    %2649 = vmatpush1.msra.mxu0 0.0
    %2650 = vmatprep.subr.mxu0 0.0
    %2651 = vmatpush1.msra.mxu0 0.0
    %2652 = vmatprep.subr.mxu0 0.0
    %2653 = vmatpush1.msra.mxu0 0.0
    %2654 = vmatprep.subr.mxu0 0.0
    %2655 = vmatpush1.msra.mxu0 0.0
    %2656 = vmatprep.subr.mxu0 0.0
    %2657 = vmatpush1.msra.mxu0 0.0
    %2658 = vmatprep.subr.mxu0 0.0
    %2659 = vmatpush1.msra.mxu0 0.0
    %2660 = vmatprep.subr.mxu0 0.0
    %2661 = vmatpush1.msra.mxu0 0.0
    %2662 = vmatprep.subr.mxu0 0.0
    %2663 = vmatpush1.msra.mxu0 0.0
    %2664 = vmatprep.subr.mxu0 0.0
    %2665 = vmatpush1.msra.mxu0 0.0
    %2666 = vmatprep.subr.mxu0 0.0
    %2667 = vmatpush1.msra.mxu0 0.0
    %2668 = vmatprep.subr.mxu0 0.0
    %2669 = vmatpush1.msra.mxu0 0.0
    %2670 = vmatprep.subr.mxu0 0.0
    %2671 = vmatpush1.msra.mxu0 0.0
    %2672 = vmatprep.mubr.f32.mxu0 0.0
    %2673 = vmatmul.mubr.f32.gmra.mrb[0].mxu0 %v689
    %v2674 = vpop.f32.mrb[0].mxu0
    %v2675 = vadd.f32 0.0, %v2674
    %v2676 = vpop.f32.mrb[0].mxu0
    %v2677 = vadd.f32 0.0, %v2676
    %2678 = vdwg.mxu0
    %2679 = vmatprep.subr.mxu0 %v232
    %2680 = vmatpush1.msra.mxu0 %v231
    %2681 = vmatprep.subr.mxu0 %v296
    %2682 = vmatpush1.msra.mxu0 %v295
    %2683 = vmatprep.subr.mxu0 %v360
    %2684 = vmatpush1.msra.mxu0 %v359
    %2685 = vmatprep.subr.mxu0 %v424
    %2686 = vmatpush1.msra.mxu0 %v423
    %2687 = vmatprep.subr.mxu0 %v488
    %2688 = vmatpush1.msra.mxu0 %v487
    %2689 = vmatprep.subr.mxu0 %v552
    %2690 = vmatpush1.msra.mxu0 %v551
    %2691 = vmatprep.subr.mxu0 %v616
    %2692 = vmatpush1.msra.mxu0 %v615
    %2693 = vmatprep.subr.mxu0 %v680
    %2694 = vmatpush1.msra.mxu0 %v679
    %2695 = vmatprep.subr.mxu0 0.0
    %2696 = vmatpush1.msra.mxu0 0.0
    %2697 = vmatprep.subr.mxu0 0.0
    %2698 = vmatpush1.msra.mxu0 0.0
    %2699 = vmatprep.subr.mxu0 0.0
    %2700 = vmatpush1.msra.mxu0 0.0
    %2701 = vmatprep.subr.mxu0 0.0
    %2702 = vmatpush1.msra.mxu0 0.0
    %2703 = vmatprep.subr.mxu0 0.0
    %2704 = vmatpush1.msra.mxu0 0.0
    %2705 = vmatprep.subr.mxu0 0.0
    %2706 = vmatpush1.msra.mxu0 0.0
    %2707 = vmatprep.subr.mxu0 0.0
    %2708 = vmatpush1.msra.mxu0 0.0
    %2709 = vmatprep.subr.mxu0 0.0
    %2710 = vmatpush1.msra.mxu0 0.0
    %2711 = vmatprep.subr.mxu0 0.0
    %2712 = vmatpush1.msra.mxu0 0.0
    %2713 = vmatprep.subr.mxu0 0.0
    %2714 = vmatpush1.msra.mxu0 0.0
    %2715 = vmatprep.subr.mxu0 0.0
    %2716 = vmatpush1.msra.mxu0 0.0
    %2717 = vmatprep.subr.mxu0 0.0
    %2718 = vmatpush1.msra.mxu0 0.0
    %2719 = vmatprep.subr.mxu0 0.0
    %2720 = vmatpush1.msra.mxu0 0.0
    %2721 = vmatprep.subr.mxu0 0.0
    %2722 = vmatpush1.msra.mxu0 0.0
    %2723 = vmatprep.subr.mxu0 0.0
    %2724 = vmatpush1.msra.mxu0 0.0
    %2725 = vmatprep.subr.mxu0 0.0
    %2726 = vmatpush1.msra.mxu0 0.0
    %2727 = vmatprep.subr.mxu0 0.0
    %2728 = vmatpush1.msra.mxu0 0.0
    %2729 = vmatprep.subr.mxu0 0.0
    %2730 = vmatpush1.msra.mxu0 0.0
    %2731 = vmatprep.subr.mxu0 0.0
    %2732 = vmatpush1.msra.mxu0 0.0
    %2733 = vmatprep.subr.mxu0 0.0
    %2734 = vmatpush1.msra.mxu0 0.0
    %2735 = vmatprep.subr.mxu0 0.0
    %2736 = vmatpush1.msra.mxu0 0.0
    %2737 = vmatprep.subr.mxu0 0.0
    %2738 = vmatpush1.msra.mxu0 0.0
    %2739 = vmatprep.subr.mxu0 0.0
    %2740 = vmatpush1.msra.mxu0 0.0
    %2741 = vmatprep.subr.mxu0 0.0
    %2742 = vmatpush1.msra.mxu0 0.0
    %2743 = vmatprep.mubr.f32.mxu0 0.0
    %2744 = vmatmul.mubr.f32.gmra.mrb[0].mxu0 %v689
    %v2745 = vpop.f32.mrb[0].mxu0
    %v2746 = vadd.f32 0.0, %v2745
    %v2747 = vpop.f32.mrb[0].mxu0
    %v2748 = vadd.f32 0.0, %v2747
    %2749 = vdwg.mxu0
    %2750 = vmatprep.subr.mxu0 %v234
    %2751 = vmatpush1.msra.mxu0 %v233
    %2752 = vmatprep.subr.mxu0 %v298
    %2753 = vmatpush1.msra.mxu0 %v297
    %2754 = vmatprep.subr.mxu0 %v362
    %2755 = vmatpush1.msra.mxu0 %v361
    %2756 = vmatprep.subr.mxu0 %v426
    %2757 = vmatpush1.msra.mxu0 %v425
    %2758 = vmatprep.subr.mxu0 %v490
    %2759 = vmatpush1.msra.mxu0 %v489
    %2760 = vmatprep.subr.mxu0 %v554
    %2761 = vmatpush1.msra.mxu0 %v553
    %2762 = vmatprep.subr.mxu0 %v618
    %2763 = vmatpush1.msra.mxu0 %v617
    %2764 = vmatprep.subr.mxu0 %v682
    %2765 = vmatpush1.msra.mxu0 %v681
    %2766 = vmatprep.subr.mxu0 0.0
    %2767 = vmatpush1.msra.mxu0 0.0
    %2768 = vmatprep.subr.mxu0 0.0
    %2769 = vmatpush1.msra.mxu0 0.0
    %2770 = vmatprep.subr.mxu0 0.0
    %2771 = vmatpush1.msra.mxu0 0.0
    %2772 = vmatprep.subr.mxu0 0.0
    %2773 = vmatpush1.msra.mxu0 0.0
    %2774 = vmatprep.subr.mxu0 0.0
    %2775 = vmatpush1.msra.mxu0 0.0
    %2776 = vmatprep.subr.mxu0 0.0
    %2777 = vmatpush1.msra.mxu0 0.0
    %2778 = vmatprep.subr.mxu0 0.0
    %2779 = vmatpush1.msra.mxu0 0.0
    %2780 = vmatprep.subr.mxu0 0.0
    %2781 = vmatpush1.msra.mxu0 0.0
    %2782 = vmatprep.subr.mxu0 0.0
    %2783 = vmatpush1.msra.mxu0 0.0
    %2784 = vmatprep.subr.mxu0 0.0
    %2785 = vmatpush1.msra.mxu0 0.0
    %2786 = vmatprep.subr.mxu0 0.0
    %2787 = vmatpush1.msra.mxu0 0.0
    %2788 = vmatprep.subr.mxu0 0.0
    %2789 = vmatpush1.msra.mxu0 0.0
    %2790 = vmatprep.subr.mxu0 0.0
    %2791 = vmatpush1.msra.mxu0 0.0
    %2792 = vmatprep.subr.mxu0 0.0
    %2793 = vmatpush1.msra.mxu0 0.0
    %2794 = vmatprep.subr.mxu0 0.0
    %2795 = vmatpush1.msra.mxu0 0.0
    %2796 = vmatprep.subr.mxu0 0.0
    %2797 = vmatpush1.msra.mxu0 0.0
    %2798 = vmatprep.subr.mxu0 0.0
    %2799 = vmatpush1.msra.mxu0 0.0
    %2800 = vmatprep.subr.mxu0 0.0
    %2801 = vmatpush1.msra.mxu0 0.0
    %2802 = vmatprep.subr.mxu0 0.0
    %2803 = vmatpush1.msra.mxu0 0.0
    %2804 = vmatprep.subr.mxu0 0.0
    %2805 = vmatpush1.msra.mxu0 0.0
    %2806 = vmatprep.subr.mxu0 0.0
    %2807 = vmatpush1.msra.mxu0 0.0
    %2808 = vmatprep.subr.mxu0 0.0
    %2809 = vmatpush1.msra.mxu0 0.0
    %2810 = vmatprep.subr.mxu0 0.0
    %2811 = vmatpush1.msra.mxu0 0.0
    %2812 = vmatprep.subr.mxu0 0.0
    %2813 = vmatpush1.msra.mxu0 0.0
    %2814 = vmatprep.mubr.f32.mxu0 0.0
    %2815 = vmatmul.mubr.f32.gmra.mrb[0].mxu0 %v689
    %v2816 = vpop.f32.mrb[0].mxu0
    %v2817 = vadd.f32 0.0, %v2816
    %v2818 = vpop.f32.mrb[0].mxu0
    %v2819 = vadd.f32 0.0, %v2818
    %2820 = vdwg.mxu0
    %2821 = vmatprep.subr.mxu0 %v236
    %2822 = vmatpush1.msra.mxu0 %v235
    %2823 = vmatprep.subr.mxu0 %v300
    %2824 = vmatpush1.msra.mxu0 %v299
    %2825 = vmatprep.subr.mxu0 %v364
    %2826 = vmatpush1.msra.mxu0 %v363
    %2827 = vmatprep.subr.mxu0 %v428
    %2828 = vmatpush1.msra.mxu0 %v427
    %2829 = vmatprep.subr.mxu0 %v492
    %2830 = vmatpush1.msra.mxu0 %v491
    %2831 = vmatprep.subr.mxu0 %v556
    %2832 = vmatpush1.msra.mxu0 %v555
    %2833 = vmatprep.subr.mxu0 %v620
    %2834 = vmatpush1.msra.mxu0 %v619
    %2835 = vmatprep.subr.mxu0 %v684
    %2836 = vmatpush1.msra.mxu0 %v683
    %2837 = vmatprep.subr.mxu0 0.0
    %2838 = vmatpush1.msra.mxu0 0.0
    %2839 = vmatprep.subr.mxu0 0.0
    %2840 = vmatpush1.msra.mxu0 0.0
    %2841 = vmatprep.subr.mxu0 0.0
    %2842 = vmatpush1.msra.mxu0 0.0
    %2843 = vmatprep.subr.mxu0 0.0
    %2844 = vmatpush1.msra.mxu0 0.0
    %2845 = vmatprep.subr.mxu0 0.0
    %2846 = vmatpush1.msra.mxu0 0.0
    %2847 = vmatprep.subr.mxu0 0.0
    %2848 = vmatpush1.msra.mxu0 0.0
    %2849 = vmatprep.subr.mxu0 0.0
    %2850 = vmatpush1.msra.mxu0 0.0
    %2851 = vmatprep.subr.mxu0 0.0
    %2852 = vmatpush1.msra.mxu0 0.0
    %2853 = vmatprep.subr.mxu0 0.0
    %2854 = vmatpush1.msra.mxu0 0.0
    %2855 = vmatprep.subr.mxu0 0.0
    %2856 = vmatpush1.msra.mxu0 0.0
    %2857 = vmatprep.subr.mxu0 0.0
    %2858 = vmatpush1.msra.mxu0 0.0
    %2859 = vmatprep.subr.mxu0 0.0
    %2860 = vmatpush1.msra.mxu0 0.0
    %2861 = vmatprep.subr.mxu0 0.0
    %2862 = vmatpush1.msra.mxu0 0.0
    %2863 = vmatprep.subr.mxu0 0.0
    %2864 = vmatpush1.msra.mxu0 0.0
    %2865 = vmatprep.subr.mxu0 0.0
    %2866 = vmatpush1.msra.mxu0 0.0
    %2867 = vmatprep.subr.mxu0 0.0
    %2868 = vmatpush1.msra.mxu0 0.0
    %2869 = vmatprep.subr.mxu0 0.0
    %2870 = vmatpush1.msra.mxu0 0.0
    %2871 = vmatprep.subr.mxu0 0.0
    %2872 = vmatpush1.msra.mxu0 0.0
    %2873 = vmatprep.subr.mxu0 0.0
    %2874 = vmatpush1.msra.mxu0 0.0
    %2875 = vmatprep.subr.mxu0 0.0
    %2876 = vmatpush1.msra.mxu0 0.0
    %2877 = vmatprep.subr.mxu0 0.0
    %2878 = vmatpush1.msra.mxu0 0.0
    %2879 = vmatprep.subr.mxu0 0.0
    %2880 = vmatpush1.msra.mxu0 0.0
    %2881 = vmatprep.subr.mxu0 0.0
    %2882 = vmatpush1.msra.mxu0 0.0
    %2883 = vmatprep.subr.mxu0 0.0
    %2884 = vmatpush1.msra.mxu0 0.0
    %2885 = vmatprep.mubr.f32.mxu0 0.0
    %2886 = vmatmul.mubr.f32.gmra.mrb[0].mxu0 %v689
    %v2887 = vpop.f32.mrb[0].mxu0
    %v2888 = vadd.f32 0.0, %v2887
    %v2889 = vpop.f32.mrb[0].mxu0
    %v2890 = vadd.f32 0.0, %v2889
    %2891 = vdwg.mxu0
    %2892 = vmatprep.subr.mxu0 %v238
    %2893 = vmatpush1.msra.mxu0 %v237
    %2894 = vmatprep.subr.mxu0 %v302
    %2895 = vmatpush1.msra.mxu0 %v301
    %2896 = vmatprep.subr.mxu0 %v366
    %2897 = vmatpush1.msra.mxu0 %v365
    %2898 = vmatprep.subr.mxu0 %v430
    %2899 = vmatpush1.msra.mxu0 %v429
    %2900 = vmatprep.subr.mxu0 %v494
    %2901 = vmatpush1.msra.mxu0 %v493
    %2902 = vmatprep.subr.mxu0 %v558
    %2903 = vmatpush1.msra.mxu0 %v557
    %2904 = vmatprep.subr.mxu0 %v622
    %2905 = vmatpush1.msra.mxu0 %v621
    %2906 = vmatprep.subr.mxu0 %v686
    %2907 = vmatpush1.msra.mxu0 %v685
    %2908 = vmatprep.subr.mxu0 0.0
    %2909 = vmatpush1.msra.mxu0 0.0
    %2910 = vmatprep.subr.mxu0 0.0
    %2911 = vmatpush1.msra.mxu0 0.0
    %2912 = vmatprep.subr.mxu0 0.0
    %2913 = vmatpush1.msra.mxu0 0.0
    %2914 = vmatprep.subr.mxu0 0.0
    %2915 = vmatpush1.msra.mxu0 0.0
    %2916 = vmatprep.subr.mxu0 0.0
    %2917 = vmatpush1.msra.mxu0 0.0
    %2918 = vmatprep.subr.mxu0 0.0
    %2919 = vmatpush1.msra.mxu0 0.0
    %2920 = vmatprep.subr.mxu0 0.0
    %2921 = vmatpush1.msra.mxu0 0.0
    %2922 = vmatprep.subr.mxu0 0.0
    %2923 = vmatpush1.msra.mxu0 0.0
    %2924 = vmatprep.subr.mxu0 0.0
    %2925 = vmatpush1.msra.mxu0 0.0
    %2926 = vmatprep.subr.mxu0 0.0
    %2927 = vmatpush1.msra.mxu0 0.0
    %2928 = vmatprep.subr.mxu0 0.0
    %2929 = vmatpush1.msra.mxu0 0.0
    %2930 = vmatprep.subr.mxu0 0.0
    %2931 = vmatpush1.msra.mxu0 0.0
    %2932 = vmatprep.subr.mxu0 0.0
    %2933 = vmatpush1.msra.mxu0 0.0
    %2934 = vmatprep.subr.mxu0 0.0
    %2935 = vmatpush1.msra.mxu0 0.0
    %2936 = vmatprep.subr.mxu0 0.0
    %2937 = vmatpush1.msra.mxu0 0.0
    %2938 = vmatprep.subr.mxu0 0.0
    %2939 = vmatpush1.msra.mxu0 0.0
    %2940 = vmatprep.subr.mxu0 0.0
    %2941 = vmatpush1.msra.mxu0 0.0
    %2942 = vmatprep.subr.mxu0 0.0
    %2943 = vmatpush1.msra.mxu0 0.0
    %2944 = vmatprep.subr.mxu0 0.0
    %2945 = vmatpush1.msra.mxu0 0.0
    %2946 = vmatprep.subr.mxu0 0.0
    %2947 = vmatpush1.msra.mxu0 0.0
    %2948 = vmatprep.subr.mxu0 0.0
    %2949 = vmatpush1.msra.mxu0 0.0
    %2950 = vmatprep.subr.mxu0 0.0
    %2951 = vmatpush1.msra.mxu0 0.0
    %2952 = vmatprep.subr.mxu0 0.0
    %2953 = vmatpush1.msra.mxu0 0.0
    %2954 = vmatprep.subr.mxu0 0.0
    %2955 = vmatpush1.msra.mxu0 0.0
    %2956 = vmatprep.mubr.f32.mxu0 0.0
    %2957 = vmatmul.mubr.f32.gmra.mrb[0].mxu0 %v689
    %v2958 = vpop.f32.mrb[0].mxu0
    %v2959 = vadd.f32 0.0, %v2958
    %v2960 = vpop.f32.mrb[0].mxu0
    %v2961 = vadd.f32 0.0, %v2960
    %2962 = vdwg.mxu0
    %v2963 = vld [vmem:[#allocation4] sm:$0x1]
    %v2964 = vld [vmem:[#allocation6] sm:$0x1]
    %v2966 = vlaneseq
    %v2967 = vshrl.u32 %v2966, 7
    %v2968 = vsub.s32 0, %v2967
    %v2969 = vrot.slane %v2963, %v2968
    %v2971 = vmul.f32 %v758, %v2969
    %v2973 = vlaneseq
    %v2974 = vshrl.u32 %v2973, 7
    %v2975 = vsub.s32 0, %v2974
    %v2976 = vrot.slane %v2964, %v2975
    %v2978 = vadd.f32 %v2971, %v2976
    %v2979 = vmax.f32 %v2978, 0.0
    %v2980 = vmul.f32 %v760, %v2969
    %v2981 = vadd.f32 %v2980, %v2976
    %v2982 = vmax.f32 %v2981, 0.0
    %v2983 = vadd.f32 %v2979, %v2982
    %v2984 = vmul.f32 %v829, %v2969
    %v2985 = vadd.f32 %v2984, %v2976
    %v2986 = vmax.f32 %v2985, 0.0
    %v2987 = vadd.f32 %v2983, %v2986
    %v2988 = vmul.f32 %v831, %v2969
    %v2989 = vadd.f32 %v2988, %v2976
    %v2990 = vmax.f32 %v2989, 0.0
    %v2991 = vadd.f32 %v2987, %v2990
    %v2992 = vmul.f32 %v900, %v2969
    %v2993 = vadd.f32 %v2992, %v2976
    %v2994 = vmax.f32 %v2993, 0.0
    %v2995 = vmul.f32 %v902, %v2969
    %v2996 = vadd.f32 %v2995, %v2976
    %v2997 = vmax.f32 %v2996, 0.0
    %v2998 = vadd.f32 %v2994, %v2997
    %v2999 = vmul.f32 %v971, %v2969
    %v3000 = vadd.f32 %v2999, %v2976
    %v3001 = vmax.f32 %v3000, 0.0
    %v3002 = vadd.f32 %v2998, %v3001
    %v3003 = vmul.f32 %v973, %v2969
    %v3004 = vadd.f32 %v3003, %v2976
    %v3005 = vmax.f32 %v3004, 0.0
    %v3006 = vadd.f32 %v3002, %v3005
    %v3007 = vmul.f32 %v1042, %v2969
    %v3008 = vadd.f32 %v3007, %v2976
    %v3009 = vmax.f32 %v3008, 0.0
    %v3010 = vmul.f32 %v1044, %v2969
    %v3011 = vadd.f32 %v3010, %v2976
    %v3012 = vmax.f32 %v3011, 0.0
    %v3013 = vadd.f32 %v3009, %v3012
    %v3014 = vmul.f32 %v1113, %v2969
    %v3015 = vadd.f32 %v3014, %v2976
    %v3016 = vmax.f32 %v3015, 0.0
    %v3017 = vadd.f32 %v3013, %v3016
    %v3018 = vmul.f32 %v1115, %v2969
    %v3019 = vadd.f32 %v3018, %v2976
    %v3020 = vmax.f32 %v3019, 0.0
    %v3021 = vadd.f32 %v3017, %v3020
    %v3022 = vmul.f32 %v1184, %v2969
    %v3023 = vadd.f32 %v3022, %v2976
    %v3024 = vmax.f32 %v3023, 0.0
    %v3025 = vmul.f32 %v1186, %v2969
    %v3026 = vadd.f32 %v3025, %v2976
    %v3027 = vmax.f32 %v3026, 0.0
    %v3028 = vadd.f32 %v3024, %v3027
    %v3029 = vmul.f32 %v1255, %v2969
    %v3030 = vadd.f32 %v3029, %v2976
    %v3031 = vmax.f32 %v3030, 0.0
    %v3032 = vadd.f32 %v3028, %v3031
    %v3033 = vmul.f32 %v1257, %v2969
    %v3034 = vadd.f32 %v3033, %v2976
    %v3035 = vmax.f32 %v3034, 0.0
    %v3036 = vadd.f32 %v3032, %v3035
    %v3037 = vmul.f32 %v1326, %v2969
    %v3038 = vadd.f32 %v3037, %v2976
    %v3039 = vmax.f32 %v3038, 0.0
    %v3040 = vmul.f32 %v1328, %v2969
    %v3041 = vadd.f32 %v3040, %v2976
    %v3042 = vmax.f32 %v3041, 0.0
    %v3043 = vadd.f32 %v3039, %v3042
    %v3044 = vmul.f32 %v1397, %v2969
    %v3045 = vadd.f32 %v3044, %v2976
    %v3046 = vmax.f32 %v3045, 0.0
    %v3047 = vadd.f32 %v3043, %v3046
    %v3048 = vmul.f32 %v1399, %v2969
    %v3049 = vadd.f32 %v3048, %v2976
    %v3050 = vmax.f32 %v3049, 0.0
    %v3051 = vadd.f32 %v3047, %v3050
    %v3052 = vmul.f32 %v1468, %v2969
    %v3053 = vadd.f32 %v3052, %v2976
    %v3054 = vmax.f32 %v3053, 0.0
    %v3055 = vmul.f32 %v1470, %v2969
    %v3056 = vadd.f32 %v3055, %v2976
    %v3057 = vmax.f32 %v3056, 0.0
    %v3058 = vadd.f32 %v3054, %v3057
    %v3059 = vmul.f32 %v1539, %v2969
    %v3060 = vadd.f32 %v3059, %v2976
    %v3061 = vmax.f32 %v3060, 0.0
    %v3062 = vadd.f32 %v3058, %v3061
    %v3063 = vmul.f32 %v1541, %v2969
    %v3064 = vadd.f32 %v3063, %v2976
    %v3065 = vmax.f32 %v3064, 0.0
    %v3066 = vadd.f32 %v3062, %v3065
    %v3067 = vmul.f32 %v1610, %v2969
    %v3068 = vadd.f32 %v3067, %v2976
    %v3069 = vmax.f32 %v3068, 0.0
    %v3070 = vmul.f32 %v1612, %v2969
    %v3071 = vadd.f32 %v3070, %v2976
    %v3072 = vmax.f32 %v3071, 0.0
    %v3073 = vadd.f32 %v3069, %v3072
    %v3074 = vmul.f32 %v1681, %v2969
    %v3075 = vadd.f32 %v3074, %v2976
    %v3076 = vmax.f32 %v3075, 0.0
    %v3077 = vadd.f32 %v3073, %v3076
    %v3078 = vmul.f32 %v1683, %v2969
    %v3079 = vadd.f32 %v3078, %v2976
    %v3080 = vmax.f32 %v3079, 0.0
    %v3081 = vadd.f32 %v3077, %v3080
    %v3082 = vmul.f32 %v1752, %v2969
    %v3083 = vadd.f32 %v3082, %v2976
    %v3084 = vmax.f32 %v3083, 0.0
    %v3085 = vmul.f32 %v1754, %v2969
    %v3086 = vadd.f32 %v3085, %v2976
    %v3087 = vmax.f32 %v3086, 0.0
    %v3088 = vadd.f32 %v3084, %v3087
    %v3089 = vmul.f32 %v1823, %v2969
    %v3090 = vadd.f32 %v3089, %v2976
    %v3091 = vmax.f32 %v3090, 0.0
    %v3092 = vadd.f32 %v3088, %v3091
    %v3093 = vmul.f32 %v1825, %v2969
    %v3094 = vadd.f32 %v3093, %v2976
    %v3095 = vmax.f32 %v3094, 0.0
    %v3096 = vadd.f32 %v3092, %v3095
    %v3097 = vmul.f32 %v1894, %v2969
    %v3098 = vadd.f32 %v3097, %v2976
    %v3099 = vmax.f32 %v3098, 0.0
    %v3100 = vmul.f32 %v1896, %v2969
    %v3101 = vadd.f32 %v3100, %v2976
    %v3102 = vmax.f32 %v3101, 0.0
    %v3103 = vadd.f32 %v3099, %v3102
    %v3104 = vmul.f32 %v1965, %v2969
    %v3105 = vadd.f32 %v3104, %v2976
    %v3106 = vmax.f32 %v3105, 0.0
    %v3107 = vadd.f32 %v3103, %v3106
    %v3108 = vmul.f32 %v1967, %v2969
    %v3109 = vadd.f32 %v3108, %v2976
    %v3110 = vmax.f32 %v3109, 0.0
    %v3111 = vadd.f32 %v3107, %v3110
    %v3112 = vmul.f32 %v2036, %v2969
    %v3113 = vadd.f32 %v3112, %v2976
    %v3114 = vmax.f32 %v3113, 0.0
    %v3115 = vmul.f32 %v2038, %v2969
    %v3116 = vadd.f32 %v3115, %v2976
    %v3117 = vmax.f32 %v3116, 0.0
    %v3118 = vadd.f32 %v3114, %v3117
    %v3119 = vmul.f32 %v2107, %v2969
    %v3120 = vadd.f32 %v3119, %v2976
    %v3121 = vmax.f32 %v3120, 0.0
    %v3122 = vadd.f32 %v3118, %v3121
    %v3123 = vmul.f32 %v2109, %v2969
    %v3124 = vadd.f32 %v3123, %v2976
    %v3125 = vmax.f32 %v3124, 0.0
    %v3126 = vadd.f32 %v3122, %v3125
    %v3127 = vmul.f32 %v2178, %v2969
    %v3128 = vadd.f32 %v3127, %v2976
    %v3129 = vmax.f32 %v3128, 0.0
    %v3130 = vmul.f32 %v2180, %v2969
    %v3131 = vadd.f32 %v3130, %v2976
    %v3132 = vmax.f32 %v3131, 0.0
    %v3133 = vadd.f32 %v3129, %v3132
    %v3134 = vmul.f32 %v2249, %v2969
    %v3135 = vadd.f32 %v3134, %v2976
    %v3136 = vmax.f32 %v3135, 0.0
    %v3137 = vadd.f32 %v3133, %v3136
    %v3138 = vmul.f32 %v2251, %v2969
    %v3139 = vadd.f32 %v3138, %v2976
    %v3140 = vmax.f32 %v3139, 0.0
    %v3141 = vadd.f32 %v3137, %v3140
    %v3142 = vmul.f32 %v2320, %v2969
    %v3143 = vadd.f32 %v3142, %v2976
    %v3144 = vmax.f32 %v3143, 0.0
    %v3145 = vmul.f32 %v2322, %v2969
    %v3146 = vadd.f32 %v3145, %v2976
    %v3147 = vmax.f32 %v3146, 0.0
    %v3148 = vadd.f32 %v3144, %v3147
    %v3149 = vmul.f32 %v2391, %v2969
    %v3150 = vadd.f32 %v3149, %v2976
    %v3151 = vmax.f32 %v3150, 0.0
    %v3152 = vadd.f32 %v3148, %v3151
    %v3153 = vmul.f32 %v2393, %v2969
    %v3154 = vadd.f32 %v3153, %v2976
    %v3155 = vmax.f32 %v3154, 0.0
    %v3156 = vadd.f32 %v3152, %v3155
    %v3157 = vmul.f32 %v2462, %v2969
    %v3158 = vadd.f32 %v3157, %v2976
    %v3159 = vmax.f32 %v3158, 0.0
    %v3160 = vmul.f32 %v2464, %v2969
    %v3161 = vadd.f32 %v3160, %v2976
    %v3162 = vmax.f32 %v3161, 0.0
    %v3163 = vadd.f32 %v3159, %v3162
    %v3164 = vmul.f32 %v2533, %v2969
    %v3165 = vadd.f32 %v3164, %v2976
    %v3166 = vmax.f32 %v3165, 0.0
    %v3167 = vadd.f32 %v3163, %v3166
    %v3168 = vmul.f32 %v2535, %v2969
    %v3169 = vadd.f32 %v3168, %v2976
    %v3170 = vmax.f32 %v3169, 0.0
    %v3171 = vadd.f32 %v3167, %v3170
    %v3172 = vmul.f32 %v2604, %v2969
    %v3173 = vadd.f32 %v3172, %v2976
    %v3174 = vmax.f32 %v3173, 0.0
    %v3175 = vmul.f32 %v2606, %v2969
    %v3176 = vadd.f32 %v3175, %v2976
    %v3177 = vmax.f32 %v3176, 0.0
    %v3178 = vadd.f32 %v3174, %v3177
    %v3179 = vmul.f32 %v2675, %v2969
    %v3180 = vadd.f32 %v3179, %v2976
    %v3181 = vmax.f32 %v3180, 0.0
    %v3182 = vadd.f32 %v3178, %v3181
    %v3183 = vmul.f32 %v2677, %v2969
    %v3184 = vadd.f32 %v3183, %v2976
    %v3185 = vmax.f32 %v3184, 0.0
    %v3186 = vadd.f32 %v3182, %v3185
    %v3187 = vmul.f32 %v2746, %v2969
    %v3188 = vadd.f32 %v3187, %v2976
    %v3189 = vmax.f32 %v3188, 0.0
    %v3190 = vmul.f32 %v2748, %v2969
    %v3191 = vadd.f32 %v3190, %v2976
    %v3192 = vmax.f32 %v3191, 0.0
    %v3193 = vadd.f32 %v3189, %v3192
    %v3194 = vmul.f32 %v2817, %v2969
    %v3195 = vadd.f32 %v3194, %v2976
    %v3196 = vmax.f32 %v3195, 0.0
    %v3197 = vadd.f32 %v3193, %v3196
    %v3198 = vmul.f32 %v2819, %v2969
    %v3199 = vadd.f32 %v3198, %v2976
    %v3200 = vmax.f32 %v3199, 0.0
    %v3201 = vadd.f32 %v3197, %v3200
    %v3202 = vmul.f32 %v2888, %v2969
    %v3203 = vadd.f32 %v3202, %v2976
    %v3204 = vmax.f32 %v3203, 0.0
    %v3205 = vmul.f32 %v2890, %v2969
    %v3206 = vadd.f32 %v3205, %v2976
    %v3207 = vmax.f32 %v3206, 0.0
    %v3208 = vadd.f32 %v3204, %v3207
    %v3209 = vmul.f32 %v2959, %v2969
    %v3210 = vadd.f32 %v3209, %v2976
    %v3211 = vmax.f32 %v3210, 0.0
    %v3212 = vadd.f32 %v3208, %v3211
    %v3213 = vmul.f32 %v2961, %v2969
    %v3214 = vadd.f32 %v3213, %v2976
    %v3215 = vmax.f32 %v3214, 0.0
    %v3216 = vadd.f32 %v3212, %v3215
    %v3217 = vld [vmem:[#allocation7] sm:$0xff]
    %v3218 = vld [vmem:[#allocation7 + $0x8] sm:$0xff]
    %v3219 = vld [vmem:[#allocation7 + $0x10] sm:$0xff]
    %v3220 = vld [vmem:[#allocation7 + $0x18] sm:$0xff]
    %v3221 = vld [vmem:[#allocation7 + $0x20] sm:$0xff]
    %v3222 = vld [vmem:[#allocation7 + $0x28] sm:$0xff]
    %v3223 = vld [vmem:[#allocation7 + $0x30] sm:$0xff]
    %v3224 = vld [vmem:[#allocation7 + $0x38] sm:$0xff]
    %v3225 = vld [vmem:[#allocation7 + $0x40] sm:$0xff]
    %v3226 = vld [vmem:[#allocation7 + $0x48] sm:$0xff]
    %v3227 = vld [vmem:[#allocation7 + $0x50] sm:$0xff]
    %v3228 = vld [vmem:[#allocation7 + $0x58] sm:$0xff]
    %v3229 = vld [vmem:[#allocation7 + $0x60] sm:$0xff]
    %v3230 = vld [vmem:[#allocation7 + $0x68] sm:$0xff]
    %v3231 = vld [vmem:[#allocation7 + $0x70] sm:$0xff]
    %v3232 = vld [vmem:[#allocation7 + $0x78] sm:$0xff]
    %v3233 = vld [vmem:[#allocation7 + $0x80] sm:$0xff]
    %v3234 = vld [vmem:[#allocation7 + $0x88] sm:$0xff]
    %v3235 = vld [vmem:[#allocation7 + $0x90] sm:$0xff]
    %v3236 = vld [vmem:[#allocation7 + $0x98] sm:$0xff]
    %v3237 = vld [vmem:[#allocation7 + $0xa0] sm:$0xff]
    %v3238 = vld [vmem:[#allocation7 + $0xa8] sm:$0xff]
    %v3239 = vld [vmem:[#allocation7 + $0xb0] sm:$0xff]
    %v3240 = vld [vmem:[#allocation7 + $0xb8] sm:$0xff]
    %v3241 = vld [vmem:[#allocation7 + $0xc0] sm:$0xff]
    %v3242 = vld [vmem:[#allocation7 + $0xc8] sm:$0xff]
    %v3243 = vld [vmem:[#allocation7 + $0xd0] sm:$0xff]
    %v3244 = vld [vmem:[#allocation7 + $0xd8] sm:$0xff]
    %v3245 = vld [vmem:[#allocation7 + $0xe0] sm:$0xff]
    %v3246 = vld [vmem:[#allocation7 + $0xe8] sm:$0xff]
    %v3247 = vld [vmem:[#allocation7 + $0xf0] sm:$0xff]
    %v3248 = vld [vmem:[#allocation7 + $0xf8] sm:$0xff]
    %3249 = vmatprep.subr.mxu0 0.0
    %3250 = vmatpush1.msra.mxu0 %v3233
    %3251 = vmatprep.subr.mxu0 0.0
    %3252 = vmatpush1.msra.mxu0 %v3234
    %3253 = vmatprep.subr.mxu0 0.0
    %3254 = vmatpush1.msra.mxu0 %v3235
    %3255 = vmatprep.subr.mxu0 0.0
    %3256 = vmatpush1.msra.mxu0 %v3236
    %3257 = vmatprep.subr.mxu0 0.0
    %3258 = vmatpush1.msra.mxu0 %v3237
    %3259 = vmatprep.subr.mxu0 0.0
    %3260 = vmatpush1.msra.mxu0 %v3238
    %3261 = vmatprep.subr.mxu0 0.0
    %3262 = vmatpush1.msra.mxu0 %v3239
    %3263 = vmatprep.subr.mxu0 0.0
    %3264 = vmatpush1.msra.mxu0 %v3240
    %3265 = vmatprep.subr.mxu0 0.0
    %3266 = vmatpush1.msra.mxu0 %v3241
    %3267 = vmatprep.subr.mxu0 0.0
    %3268 = vmatpush1.msra.mxu0 %v3242
    %3269 = vmatprep.subr.mxu0 0.0
    %3270 = vmatpush1.msra.mxu0 %v3243
    %3271 = vmatprep.subr.mxu0 0.0
    %3272 = vmatpush1.msra.mxu0 %v3244
    %3273 = vmatprep.subr.mxu0 0.0
    %3274 = vmatpush1.msra.mxu0 %v3245
    %3275 = vmatprep.subr.mxu0 0.0
    %3276 = vmatpush1.msra.mxu0 %v3246
    %3277 = vmatprep.subr.mxu0 0.0
    %3278 = vmatpush1.msra.mxu0 %v3247
    %3279 = vmatprep.subr.mxu0 0.0
    %3280 = vmatpush1.msra.mxu0 %v3248
    %3281 = vmatprep.subr.mxu0 0.0
    %3282 = vmatpush1.msra.mxu0 0.0
    %3283 = vmatprep.subr.mxu0 0.0
    %3284 = vmatpush1.msra.mxu0 0.0
    %3285 = vmatprep.subr.mxu0 0.0
    %3286 = vmatpush1.msra.mxu0 0.0
    %3287 = vmatprep.subr.mxu0 0.0
    %3288 = vmatpush1.msra.mxu0 0.0
    %3289 = vmatprep.subr.mxu0 0.0
    %3290 = vmatpush1.msra.mxu0 0.0
    %3291 = vmatprep.subr.mxu0 0.0
    %3292 = vmatpush1.msra.mxu0 0.0
    %3293 = vmatprep.subr.mxu0 0.0
    %3294 = vmatpush1.msra.mxu0 0.0
    %3295 = vmatprep.subr.mxu0 0.0
    %3296 = vmatpush1.msra.mxu0 0.0
    %3297 = vmatprep.subr.mxu0 0.0
    %3298 = vmatpush1.msra.mxu0 0.0
    %3299 = vmatprep.subr.mxu0 0.0
    %3300 = vmatpush1.msra.mxu0 0.0
    %3301 = vmatprep.subr.mxu0 0.0
    %3302 = vmatpush1.msra.mxu0 0.0
    %3303 = vmatprep.subr.mxu0 0.0
    %3304 = vmatpush1.msra.mxu0 0.0
    %3305 = vmatprep.subr.mxu0 0.0
    %3306 = vmatpush1.msra.mxu0 0.0
    %3307 = vmatprep.subr.mxu0 0.0
    %3308 = vmatpush1.msra.mxu0 0.0
    %3309 = vmatprep.subr.mxu0 0.0
    %3310 = vmatpush1.msra.mxu0 0.0
    %3311 = vmatprep.subr.mxu0 0.0
    %3312 = vmatpush1.msra.mxu0 0.0
    %3313 = vmatprep.mubr.f32.mxu0 0.0
    %3314 = vmatmul.mubr.f32.gmra.mrb[0].mxu0 %v2991
    %v3315 = vpop.f32.mrb[0].mxu0
    %v3316 = vadd.f32 0.0, %v3315
    %v3317 = vpop.f32.mrb[0].mxu0
    %3318 = vmatprep.mubr.f32.mxu0 0.0
    %3319 = vmatmul.mubr.f32.gmra.mrb[0].mxu0 %v3006
    %v3320 = vpop.f32.mrb[0].mxu0
    %v3321 = vadd.f32 0.0, %v3320
    %v3322 = vpop.f32.mrb[0].mxu0
    %3323 = vmatprep.mubr.f32.mxu0 0.0
    %3324 = vmatmul.mubr.f32.gmra.mrb[0].mxu0 %v3021
    %v3325 = vpop.f32.mrb[0].mxu0
    %v3326 = vadd.f32 0.0, %v3325
    %v3327 = vpop.f32.mrb[0].mxu0
    %3328 = vmatprep.mubr.f32.mxu0 0.0
    %3329 = vmatmul.mubr.f32.gmra.mrb[0].mxu0 %v3036
    %v3330 = vpop.f32.mrb[0].mxu0
    %v3331 = vadd.f32 0.0, %v3330
    %v3332 = vpop.f32.mrb[0].mxu0
    %3333 = vmatprep.mubr.f32.mxu0 0.0
    %3334 = vmatmul.mubr.f32.gmra.mrb[0].mxu0 %v3051
    %v3335 = vpop.f32.mrb[0].mxu0
    %v3336 = vadd.f32 0.0, %v3335
    %v3337 = vpop.f32.mrb[0].mxu0
    %3338 = vmatprep.mubr.f32.mxu0 0.0
    %3339 = vmatmul.mubr.f32.gmra.mrb[0].mxu0 %v3066
    %v3340 = vpop.f32.mrb[0].mxu0
    %v3341 = vadd.f32 0.0, %v3340
    %v3342 = vpop.f32.mrb[0].mxu0
    %3343 = vmatprep.mubr.f32.mxu0 0.0
    %3344 = vmatmul.mubr.f32.gmra.mrb[0].mxu0 %v3081
    %v3345 = vpop.f32.mrb[0].mxu0
    %v3346 = vadd.f32 0.0, %v3345
    %v3347 = vpop.f32.mrb[0].mxu0
    %3348 = vmatprep.mubr.f32.mxu0 0.0
    %3349 = vmatmul.mubr.f32.gmra.mrb[0].mxu0 %v3096
    %v3350 = vpop.f32.mrb[0].mxu0
    %v3351 = vadd.f32 0.0, %v3350
    %v3352 = vpop.f32.mrb[0].mxu0
    %3353 = vmatprep.mubr.f32.mxu0 0.0
    %3354 = vmatmul.mubr.f32.gmra.mrb[0].mxu0 %v3111
    %v3355 = vpop.f32.mrb[0].mxu0
    %v3356 = vadd.f32 0.0, %v3355
    %v3357 = vpop.f32.mrb[0].mxu0
    %3358 = vmatprep.mubr.f32.mxu0 0.0
    %3359 = vmatmul.mubr.f32.gmra.mrb[0].mxu0 %v3126
    %v3360 = vpop.f32.mrb[0].mxu0
    %v3361 = vadd.f32 0.0, %v3360
    %v3362 = vpop.f32.mrb[0].mxu0
    %3363 = vmatprep.mubr.f32.mxu0 0.0
    %3364 = vmatmul.mubr.f32.gmra.mrb[0].mxu0 %v3141
    %v3365 = vpop.f32.mrb[0].mxu0
    %v3366 = vadd.f32 0.0, %v3365
    %v3367 = vpop.f32.mrb[0].mxu0
    %3368 = vmatprep.mubr.f32.mxu0 0.0
    %3369 = vmatmul.mubr.f32.gmra.mrb[0].mxu0 %v3156
    %v3370 = vpop.f32.mrb[0].mxu0
    %v3371 = vadd.f32 0.0, %v3370
    %v3372 = vpop.f32.mrb[0].mxu0
    %3373 = vmatprep.mubr.f32.mxu0 0.0
    %3374 = vmatmul.mubr.f32.gmra.mrb[0].mxu0 %v3171
    %v3375 = vpop.f32.mrb[0].mxu0
    %v3376 = vadd.f32 0.0, %v3375
    %v3377 = vpop.f32.mrb[0].mxu0
    %3378 = vmatprep.mubr.f32.mxu0 0.0
    %3379 = vmatmul.mubr.f32.gmra.mrb[0].mxu0 %v3186
    %v3380 = vpop.f32.mrb[0].mxu0
    %v3381 = vadd.f32 0.0, %v3380
    %v3382 = vpop.f32.mrb[0].mxu0
    %3383 = vmatprep.mubr.f32.mxu0 0.0
    %3384 = vmatmul.mubr.f32.gmra.mrb[0].mxu0 %v3201
    %v3385 = vpop.f32.mrb[0].mxu0
    %v3386 = vadd.f32 0.0, %v3385
    %v3387 = vpop.f32.mrb[0].mxu0
    %3388 = vmatprep.mubr.f32.mxu0 0.0
    %3389 = vmatmul.mubr.f32.gmra.mrb[0].mxu0 %v3216
    %v3390 = vpop.f32.mrb[0].mxu0
    %v3391 = vadd.f32 0.0, %v3390
    %v3392 = vpop.f32.mrb[0].mxu0
    %3393 = vdwg.mxu0
    %3394 = vmatprep.subr.mxu0 0.0
    %3395 = vmatpush1.msra.mxu0 %v3217
    %3396 = vmatprep.subr.mxu0 0.0
    %3397 = vmatpush1.msra.mxu0 %v3218
    %3398 = vmatprep.subr.mxu0 0.0
    %3399 = vmatpush1.msra.mxu0 %v3219
    %3400 = vmatprep.subr.mxu0 0.0
    %3401 = vmatpush1.msra.mxu0 %v3220
    %3402 = vmatprep.subr.mxu0 0.0
    %3403 = vmatpush1.msra.mxu0 %v3221
    %3404 = vmatprep.subr.mxu0 0.0
    %3405 = vmatpush1.msra.mxu0 %v3222
    %3406 = vmatprep.subr.mxu0 0.0
    %3407 = vmatpush1.msra.mxu0 %v3223
    %3408 = vmatprep.subr.mxu0 0.0
    %3409 = vmatpush1.msra.mxu0 %v3224
    %3410 = vmatprep.subr.mxu0 0.0
    %3411 = vmatpush1.msra.mxu0 %v3225
    %3412 = vmatprep.subr.mxu0 0.0
    %3413 = vmatpush1.msra.mxu0 %v3226
    %3414 = vmatprep.subr.mxu0 0.0
    %3415 = vmatpush1.msra.mxu0 %v3227
    %3416 = vmatprep.subr.mxu0 0.0
    %3417 = vmatpush1.msra.mxu0 %v3228
    %3418 = vmatprep.subr.mxu0 0.0
    %3419 = vmatpush1.msra.mxu0 %v3229
    %3420 = vmatprep.subr.mxu0 0.0
    %3421 = vmatpush1.msra.mxu0 %v3230
    %3422 = vmatprep.subr.mxu0 0.0
    %3423 = vmatpush1.msra.mxu0 %v3231
    %3424 = vmatprep.subr.mxu0 0.0
    %3425 = vmatpush1.msra.mxu0 %v3232
    %3426 = vmatprep.subr.mxu0 0.0
    %3427 = vmatpush1.msra.mxu0 0.0
    %3428 = vmatprep.subr.mxu0 0.0
    %3429 = vmatpush1.msra.mxu0 0.0
    %3430 = vmatprep.subr.mxu0 0.0
    %3431 = vmatpush1.msra.mxu0 0.0
    %3432 = vmatprep.subr.mxu0 0.0
    %3433 = vmatpush1.msra.mxu0 0.0
    %3434 = vmatprep.subr.mxu0 0.0
    %3435 = vmatpush1.msra.mxu0 0.0
    %3436 = vmatprep.subr.mxu0 0.0
    %3437 = vmatpush1.msra.mxu0 0.0
    %3438 = vmatprep.subr.mxu0 0.0
    %3439 = vmatpush1.msra.mxu0 0.0
    %3440 = vmatprep.subr.mxu0 0.0
    %3441 = vmatpush1.msra.mxu0 0.0
    %3442 = vmatprep.subr.mxu0 0.0
    %3443 = vmatpush1.msra.mxu0 0.0
    %3444 = vmatprep.subr.mxu0 0.0
    %3445 = vmatpush1.msra.mxu0 0.0
    %3446 = vmatprep.subr.mxu0 0.0
    %3447 = vmatpush1.msra.mxu0 0.0
    %3448 = vmatprep.subr.mxu0 0.0
    %3449 = vmatpush1.msra.mxu0 0.0
    %3450 = vmatprep.subr.mxu0 0.0
    %3451 = vmatpush1.msra.mxu0 0.0
    %3452 = vmatprep.subr.mxu0 0.0
    %3453 = vmatpush1.msra.mxu0 0.0
    %3454 = vmatprep.subr.mxu0 0.0
    %3455 = vmatpush1.msra.mxu0 0.0
    %3456 = vmatprep.subr.mxu0 0.0
    %3457 = vmatpush1.msra.mxu0 0.0
    %3458 = vmatprep.mubr.f32.mxu0 0.0
    %3459 = vmatmul.mubr.f32.gmra.mrb[0].mxu0 0.0
    %v3460 = vpop.f32.mrb[0].mxu0
    %v3461 = vadd.f32 %v3316, %v3460
    %v3462 = vpop.f32.mrb[0].mxu0
    %3463 = vmatprep.mubr.f32.mxu0 0.0
    %3464 = vmatmul.mubr.f32.gmra.mrb[0].mxu0 %v2991
    %v3465 = vpop.f32.mrb[0].mxu0
    %v3466 = vadd.f32 %v3321, %v3465
    %v3467 = vpop.f32.mrb[0].mxu0
    %3468 = vmatprep.mubr.f32.mxu0 0.0
    %3469 = vmatmul.mubr.f32.gmra.mrb[0].mxu0 %v3006
    %v3470 = vpop.f32.mrb[0].mxu0
    %v3471 = vadd.f32 %v3326, %v3470
    %v3472 = vpop.f32.mrb[0].mxu0
    %3473 = vmatprep.mubr.f32.mxu0 0.0
    %3474 = vmatmul.mubr.f32.gmra.mrb[0].mxu0 %v3021
    %v3475 = vpop.f32.mrb[0].mxu0
    %v3476 = vadd.f32 %v3331, %v3475
    %v3477 = vpop.f32.mrb[0].mxu0
    %3478 = vmatprep.mubr.f32.mxu0 0.0
    %3479 = vmatmul.mubr.f32.gmra.mrb[0].mxu0 %v3036
    %v3480 = vpop.f32.mrb[0].mxu0
    %v3481 = vadd.f32 %v3336, %v3480
    %v3482 = vpop.f32.mrb[0].mxu0
    %3483 = vmatprep.mubr.f32.mxu0 0.0
    %3484 = vmatmul.mubr.f32.gmra.mrb[0].mxu0 %v3051
    %v3485 = vpop.f32.mrb[0].mxu0
    %v3486 = vadd.f32 %v3341, %v3485
    %v3487 = vpop.f32.mrb[0].mxu0
    %3488 = vmatprep.mubr.f32.mxu0 0.0
    %3489 = vmatmul.mubr.f32.gmra.mrb[0].mxu0 %v3066
    %v3490 = vpop.f32.mrb[0].mxu0
    %v3491 = vadd.f32 %v3346, %v3490
    %v3492 = vpop.f32.mrb[0].mxu0
    %3493 = vmatprep.mubr.f32.mxu0 0.0
    %3494 = vmatmul.mubr.f32.gmra.mrb[0].mxu0 %v3081
    %v3495 = vpop.f32.mrb[0].mxu0
    %v3496 = vadd.f32 %v3351, %v3495
    %v3497 = vpop.f32.mrb[0].mxu0
    %3498 = vmatprep.mubr.f32.mxu0 0.0
    %3499 = vmatmul.mubr.f32.gmra.mrb[0].mxu0 %v3096
    %v3500 = vpop.f32.mrb[0].mxu0
    %v3501 = vadd.f32 %v3356, %v3500
    %v3502 = vpop.f32.mrb[0].mxu0
    %3503 = vmatprep.mubr.f32.mxu0 0.0
    %3504 = vmatmul.mubr.f32.gmra.mrb[0].mxu0 %v3111
    %v3505 = vpop.f32.mrb[0].mxu0
    %v3506 = vadd.f32 %v3361, %v3505
    %v3507 = vpop.f32.mrb[0].mxu0
    %3508 = vmatprep.mubr.f32.mxu0 0.0
    %3509 = vmatmul.mubr.f32.gmra.mrb[0].mxu0 %v3126
    %v3510 = vpop.f32.mrb[0].mxu0
    %v3511 = vadd.f32 %v3366, %v3510
    %v3512 = vpop.f32.mrb[0].mxu0
    %3513 = vmatprep.mubr.f32.mxu0 0.0
    %3514 = vmatmul.mubr.f32.gmra.mrb[0].mxu0 %v3141
    %v3515 = vpop.f32.mrb[0].mxu0
    %v3516 = vadd.f32 %v3371, %v3515
    %v3517 = vpop.f32.mrb[0].mxu0
    %3518 = vmatprep.mubr.f32.mxu0 0.0
    %3519 = vmatmul.mubr.f32.gmra.mrb[0].mxu0 %v3156
    %v3520 = vpop.f32.mrb[0].mxu0
    %v3521 = vadd.f32 %v3376, %v3520
    %v3522 = vpop.f32.mrb[0].mxu0
    %3523 = vmatprep.mubr.f32.mxu0 0.0
    %3524 = vmatmul.mubr.f32.gmra.mrb[0].mxu0 %v3171
    %v3525 = vpop.f32.mrb[0].mxu0
    %v3526 = vadd.f32 %v3381, %v3525
    %v3527 = vpop.f32.mrb[0].mxu0
    %3528 = vmatprep.mubr.f32.mxu0 0.0
    %3529 = vmatmul.mubr.f32.gmra.mrb[0].mxu0 %v3186
    %v3530 = vpop.f32.mrb[0].mxu0
    %v3531 = vadd.f32 %v3386, %v3530
    %v3532 = vpop.f32.mrb[0].mxu0
    %3533 = vmatprep.mubr.f32.mxu0 0.0
    %3534 = vmatmul.mubr.f32.gmra.mrb[0].mxu0 %v3201
    %v3535 = vpop.f32.mrb[0].mxu0
    %v3536 = vadd.f32 %v3391, %v3535
    %v3537 = vpop.f32.mrb[0].mxu0
    %3538 = vdwg.mxu0
    %v3539 = vld [vmem:[#allocation7 + $0x100] sm:$0xff]
    %v3540 = vld [vmem:[#allocation7 + $0x108] sm:$0xff]
    %v3541 = vld [vmem:[#allocation7 + $0x110] sm:$0xff]
    %v3542 = vld [vmem:[#allocation7 + $0x118] sm:$0xff]
    %v3543 = vld [vmem:[#allocation7 + $0x120] sm:$0xff]
    %v3544 = vld [vmem:[#allocation7 + $0x128] sm:$0xff]
    %v3545 = vld [vmem:[#allocation7 + $0x130] sm:$0xff]
    %v3546 = vld [vmem:[#allocation7 + $0x138] sm:$0xff]
    %v3547 = vld [vmem:[#allocation7 + $0x140] sm:$0xff]
    %v3548 = vld [vmem:[#allocation7 + $0x148] sm:$0xff]
    %v3549 = vld [vmem:[#allocation7 + $0x150] sm:$0xff]
    %v3550 = vld [vmem:[#allocation7 + $0x158] sm:$0xff]
    %v3551 = vld [vmem:[#allocation7 + $0x160] sm:$0xff]
    %v3552 = vld [vmem:[#allocation7 + $0x168] sm:$0xff]
    %v3553 = vld [vmem:[#allocation7 + $0x170] sm:$0xff]
    %v3554 = vld [vmem:[#allocation7 + $0x178] sm:$0xff]
    %3555 = vmatprep.subr.mxu0 0.0
    %3556 = vmatpush1.msra.mxu0 %v3539
    %3557 = vmatprep.subr.mxu0 0.0
    %3558 = vmatpush1.msra.mxu0 %v3540
    %3559 = vmatprep.subr.mxu0 0.0
    %3560 = vmatpush1.msra.mxu0 %v3541
    %3561 = vmatprep.subr.mxu0 0.0
    %3562 = vmatpush1.msra.mxu0 %v3542
    %3563 = vmatprep.subr.mxu0 0.0
    %3564 = vmatpush1.msra.mxu0 %v3543
    %3565 = vmatprep.subr.mxu0 0.0
    %3566 = vmatpush1.msra.mxu0 %v3544
    %3567 = vmatprep.subr.mxu0 0.0
    %3568 = vmatpush1.msra.mxu0 %v3545
    %3569 = vmatprep.subr.mxu0 0.0
    %3570 = vmatpush1.msra.mxu0 %v3546
    %3571 = vmatprep.subr.mxu0 0.0
    %3572 = vmatpush1.msra.mxu0 %v3547
    %3573 = vmatprep.subr.mxu0 0.0
    %3574 = vmatpush1.msra.mxu0 %v3548
    %3575 = vmatprep.subr.mxu0 0.0
    %3576 = vmatpush1.msra.mxu0 %v3549
    %3577 = vmatprep.subr.mxu0 0.0
    %3578 = vmatpush1.msra.mxu0 %v3550
    %3579 = vmatprep.subr.mxu0 0.0
    %3580 = vmatpush1.msra.mxu0 %v3551
    %3581 = vmatprep.subr.mxu0 0.0
    %3582 = vmatpush1.msra.mxu0 %v3552
    %3583 = vmatprep.subr.mxu0 0.0
    %3584 = vmatpush1.msra.mxu0 %v3553
    %3585 = vmatprep.subr.mxu0 0.0
    %3586 = vmatpush1.msra.mxu0 %v3554
    %3587 = vmatprep.subr.mxu0 0.0
    %3588 = vmatpush1.msra.mxu0 0.0
    %3589 = vmatprep.subr.mxu0 0.0
    %3590 = vmatpush1.msra.mxu0 0.0
    %3591 = vmatprep.subr.mxu0 0.0
    %3592 = vmatpush1.msra.mxu0 0.0
    %3593 = vmatprep.subr.mxu0 0.0
    %3594 = vmatpush1.msra.mxu0 0.0
    %3595 = vmatprep.subr.mxu0 0.0
    %3596 = vmatpush1.msra.mxu0 0.0
    %3597 = vmatprep.subr.mxu0 0.0
    %3598 = vmatpush1.msra.mxu0 0.0
    %3599 = vmatprep.subr.mxu0 0.0
    %3600 = vmatpush1.msra.mxu0 0.0
    %3601 = vmatprep.subr.mxu0 0.0
    %3602 = vmatpush1.msra.mxu0 0.0
    %3603 = vmatprep.subr.mxu0 0.0
    %3604 = vmatpush1.msra.mxu0 0.0
    %3605 = vmatprep.subr.mxu0 0.0
    %3606 = vmatpush1.msra.mxu0 0.0
    %3607 = vmatprep.subr.mxu0 0.0
    %3608 = vmatpush1.msra.mxu0 0.0
    %3609 = vmatprep.subr.mxu0 0.0
    %3610 = vmatpush1.msra.mxu0 0.0
    %3611 = vmatprep.subr.mxu0 0.0
    %3612 = vmatpush1.msra.mxu0 0.0
    %3613 = vmatprep.subr.mxu0 0.0
    %3614 = vmatpush1.msra.mxu0 0.0
    %3615 = vmatprep.subr.mxu0 0.0
    %3616 = vmatpush1.msra.mxu0 0.0
    %3617 = vmatprep.subr.mxu0 0.0
    %3618 = vmatpush1.msra.mxu0 0.0
    %3619 = vmatprep.mubr.f32.mxu0 0.0
    %3620 = vmatmul.mubr.f32.gmra.mrb[0].mxu0 %v3006
    %v3621 = vpop.f32.mrb[0].mxu0
    %v3622 = vadd.f32 0.0, %v3621
    %v3623 = vpop.f32.mrb[0].mxu0
    %3624 = vmatprep.mubr.f32.mxu0 0.0
    %3625 = vmatmul.mubr.f32.gmra.mrb[0].mxu0 %v3021
    %v3626 = vpop.f32.mrb[0].mxu0
    %v3627 = vadd.f32 0.0, %v3626
    %v3628 = vpop.f32.mrb[0].mxu0
    %3629 = vmatprep.mubr.f32.mxu0 0.0
    %3630 = vmatmul.mubr.f32.gmra.mrb[0].mxu0 %v3036
    %v3631 = vpop.f32.mrb[0].mxu0
    %v3632 = vadd.f32 0.0, %v3631
    %v3633 = vpop.f32.mrb[0].mxu0
    %3634 = vmatprep.mubr.f32.mxu0 0.0
    %3635 = vmatmul.mubr.f32.gmra.mrb[0].mxu0 %v3051
    %v3636 = vpop.f32.mrb[0].mxu0
    %v3637 = vadd.f32 0.0, %v3636
    %v3638 = vpop.f32.mrb[0].mxu0
    %3639 = vmatprep.mubr.f32.mxu0 0.0
    %3640 = vmatmul.mubr.f32.gmra.mrb[0].mxu0 %v3066
    %v3641 = vpop.f32.mrb[0].mxu0
    %v3642 = vadd.f32 0.0, %v3641
    %v3643 = vpop.f32.mrb[0].mxu0
    %3644 = vmatprep.mubr.f32.mxu0 0.0
    %3645 = vmatmul.mubr.f32.gmra.mrb[0].mxu0 %v3081
    %v3646 = vpop.f32.mrb[0].mxu0
    %v3647 = vadd.f32 0.0, %v3646
    %v3648 = vpop.f32.mrb[0].mxu0
    %3649 = vmatprep.mubr.f32.mxu0 0.0
    %3650 = vmatmul.mubr.f32.gmra.mrb[0].mxu0 %v3096
    %v3651 = vpop.f32.mrb[0].mxu0
    %v3652 = vadd.f32 0.0, %v3651
    %v3653 = vpop.f32.mrb[0].mxu0
    %3654 = vmatprep.mubr.f32.mxu0 0.0
    %3655 = vmatmul.mubr.f32.gmra.mrb[0].mxu0 %v3111
    %v3656 = vpop.f32.mrb[0].mxu0
    %v3657 = vadd.f32 0.0, %v3656
    %v3658 = vpop.f32.mrb[0].mxu0
    %3659 = vmatprep.mubr.f32.mxu0 0.0
    %3660 = vmatmul.mubr.f32.gmra.mrb[0].mxu0 %v3126
    %v3661 = vpop.f32.mrb[0].mxu0
    %v3662 = vadd.f32 0.0, %v3661
    %v3663 = vpop.f32.mrb[0].mxu0
    %3664 = vmatprep.mubr.f32.mxu0 0.0
    %3665 = vmatmul.mubr.f32.gmra.mrb[0].mxu0 %v3141
    %v3666 = vpop.f32.mrb[0].mxu0
    %v3667 = vadd.f32 0.0, %v3666
    %v3668 = vpop.f32.mrb[0].mxu0
    %3669 = vmatprep.mubr.f32.mxu0 0.0
    %3670 = vmatmul.mubr.f32.gmra.mrb[0].mxu0 %v3156
    %v3671 = vpop.f32.mrb[0].mxu0
    %v3672 = vadd.f32 0.0, %v3671
    %v3673 = vpop.f32.mrb[0].mxu0
    %3674 = vmatprep.mubr.f32.mxu0 0.0
    %3675 = vmatmul.mubr.f32.gmra.mrb[0].mxu0 %v3171
    %v3676 = vpop.f32.mrb[0].mxu0
    %v3677 = vadd.f32 0.0, %v3676
    %v3678 = vpop.f32.mrb[0].mxu0
    %3679 = vmatprep.mubr.f32.mxu0 0.0
    %3680 = vmatmul.mubr.f32.gmra.mrb[0].mxu0 %v3186
    %v3681 = vpop.f32.mrb[0].mxu0
    %v3682 = vadd.f32 0.0, %v3681
    %v3683 = vpop.f32.mrb[0].mxu0
    %3684 = vmatprep.mubr.f32.mxu0 0.0
    %3685 = vmatmul.mubr.f32.gmra.mrb[0].mxu0 %v3201
    %v3686 = vpop.f32.mrb[0].mxu0
    %v3687 = vadd.f32 0.0, %v3686
    %v3688 = vpop.f32.mrb[0].mxu0
    %3689 = vmatprep.mubr.f32.mxu0 0.0
    %3690 = vmatmul.mubr.f32.gmra.mrb[0].mxu0 %v3216
    %v3691 = vpop.f32.mrb[0].mxu0
    %v3692 = vadd.f32 0.0, %v3691
    %v3693 = vpop.f32.mrb[0].mxu0
    %3694 = vmatprep.mubr.f32.mxu0 0.0
    %3695 = vmatmul.mubr.f32.gmra.mrb[0].mxu0 0.0
    %v3696 = vpop.f32.mrb[0].mxu0
    %v3697 = vadd.f32 0.0, %v3696
    %v3698 = vpop.f32.mrb[0].mxu0
    %3699 = vdwg.mxu0
    %v3700 = vadd.f32 %v3461, %v3622
    %v3701 = vadd.f32 %v3466, %v3627
    %v3702 = vadd.f32 %v3471, %v3632
    %v3703 = vadd.f32 %v3476, %v3637
    %v3704 = vadd.f32 %v3481, %v3642
    %v3705 = vadd.f32 %v3486, %v3647
    %v3706 = vadd.f32 %v3491, %v3652
    %v3707 = vadd.f32 %v3496, %v3657
    %v3708 = vadd.f32 %v3501, %v3662
    %v3709 = vadd.f32 %v3506, %v3667
    %v3710 = vadd.f32 %v3511, %v3672
    %v3711 = vadd.f32 %v3516, %v3677
    %v3712 = vadd.f32 %v3521, %v3682
    %v3713 = vadd.f32 %v3526, %v3687
    %v3714 = vadd.f32 %v3531, %v3692
    %v3715 = vadd.f32 %v3536, %v3697
    %v3716 = vld [vmem:[#allocation9] sm:$0x1]
    %v3718 = vlaneseq
    %v3719 = vshrl.u32 %v3718, 7
    %v3720 = vsub.s32 0, %v3719
    %v3721 = vrot.slane %v3716, %v3720
    %v3723 = vmul.f32 %v3700, %v3721
    %v3724 = vmul.f32 %v3701, %v3721
    %v3725 = vmul.f32 %v3702, %v3721
    %v3726 = vmul.f32 %v3703, %v3721
    %v3727 = vmul.f32 %v3704, %v3721
    %v3728 = vmul.f32 %v3705, %v3721
    %v3729 = vmul.f32 %v3706, %v3721
    %v3730 = vmul.f32 %v3707, %v3721
    %v3731 = vmul.f32 %v3708, %v3721
    %v3732 = vmul.f32 %v3709, %v3721
    %v3733 = vmul.f32 %v3710, %v3721
    %v3734 = vmul.f32 %v3711, %v3721
    %v3735 = vmul.f32 %v3712, %v3721
    %v3736 = vmul.f32 %v3713, %v3721
    %v3737 = vmul.f32 %v3714, %v3721
    %v3738 = vmul.f32 %v3715, %v3721
    %v3739 = vld [vmem:[#allocation10] sm:$0x1]
    %v3741 = vlaneseq
    %v3742 = vshrl.u32 %v3741, 7
    %v3743 = vsub.s32 0, %v3742
    %v3744 = vrot.slane %v3739, %v3743
    %v3746 = vadd.f32 %v3723, %v3744
    %v3747 = vadd.f32 %v3724, %v3744
    %v3748 = vadd.f32 %v3725, %v3744
    %v3749 = vadd.f32 %v3726, %v3744
    %v3750 = vadd.f32 %v3727, %v3744
    %v3751 = vadd.f32 %v3728, %v3744
    %v3752 = vadd.f32 %v3729, %v3744
    %v3753 = vadd.f32 %v3730, %v3744
    %v3754 = vadd.f32 %v3731, %v3744
    %v3755 = vadd.f32 %v3732, %v3744
    %v3756 = vadd.f32 %v3733, %v3744
    %v3757 = vadd.f32 %v3734, %v3744
    %v3758 = vadd.f32 %v3735, %v3744
    %v3759 = vadd.f32 %v3736, %v3744
    %v3760 = vadd.f32 %v3737, %v3744
    %v3761 = vadd.f32 %v3738, %v3744
    %v3762 = vmax.f32 %v3746, 0.0
    %v3763 = vmax.f32 %v3747, 0.0
    %v3764 = vmax.f32 %v3748, 0.0
    %v3765 = vmax.f32 %v3749, 0.0
    %v3766 = vmax.f32 %v3750, 0.0
    %v3767 = vmax.f32 %v3751, 0.0
    %v3768 = vmax.f32 %v3752, 0.0
    %v3769 = vmax.f32 %v3753, 0.0
    %v3770 = vmax.f32 %v3754, 0.0
    %v3771 = vmax.f32 %v3755, 0.0
    %v3772 = vmax.f32 %v3756, 0.0
    %v3773 = vmax.f32 %v3757, 0.0
    %v3774 = vmax.f32 %v3758, 0.0
    %v3775 = vmax.f32 %v3759, 0.0
    %v3776 = vmax.f32 %v3760, 0.0
    %v3777 = vmax.f32 %v3761, 0.0
    %v3778 = vadd.f32 %v3762, %v3763
    %v3779 = vadd.f32 %v3778, %v3764
    %v3780 = vadd.f32 %v3779, %v3765
    %v3781 = vadd.f32 %v3766, %v3767
    %v3782 = vadd.f32 %v3781, %v3768
    %v3783 = vadd.f32 %v3782, %v3769
    %v3784 = vadd.f32 %v3770, %v3771
    %v3785 = vadd.f32 %v3784, %v3772
    %v3786 = vadd.f32 %v3785, %v3773
    %v3787 = vadd.f32 %v3774, %v3775
    %v3788 = vadd.f32 %v3787, %v3776
    %v3789 = vadd.f32 %v3788, %v3777
    %v3790 = vld [vmem:[#allocation12] sm:$0xff]
    %v3791 = vld [vmem:[#allocation12 + $0x8] sm:$0xff]
    %v3792 = vld [vmem:[#allocation12 + $0x10] sm:$0xff]
    %v3793 = vld [vmem:[#allocation12 + $0x18] sm:$0xff]
    %v3794 = vld [vmem:[#allocation12 + $0x20] sm:$0xff]
    %v3795 = vld [vmem:[#allocation12 + $0x28] sm:$0xff]
    %v3796 = vld [vmem:[#allocation12 + $0x30] sm:$0xff]
    %v3797 = vld [vmem:[#allocation12 + $0x38] sm:$0xff]
    %v3798 = vld [vmem:[#allocation12 + $0x40] sm:$0xff]
    %v3799 = vld [vmem:[#allocation12 + $0x48] sm:$0xff]
    %v3800 = vld [vmem:[#allocation12 + $0x50] sm:$0xff]
    %v3801 = vld [vmem:[#allocation12 + $0x58] sm:$0xff]
    %v3802 = vld [vmem:[#allocation12 + $0x60] sm:$0xff]
    %v3803 = vld [vmem:[#allocation12 + $0x68] sm:$0xff]
    %v3804 = vld [vmem:[#allocation12 + $0x70] sm:$0xff]
    %v3805 = vld [vmem:[#allocation12 + $0x78] sm:$0xff]
    %v3806 = vld [vmem:[#allocation12 + $0x80] sm:$0xff]
    %v3807 = vld [vmem:[#allocation12 + $0x88] sm:$0xff]
    %v3808 = vld [vmem:[#allocation12 + $0x90] sm:$0xff]
    %v3809 = vld [vmem:[#allocation12 + $0x98] sm:$0xff]
    %v3810 = vld [vmem:[#allocation12 + $0xa0] sm:$0xff]
    %v3811 = vld [vmem:[#allocation12 + $0xa8] sm:$0xff]
    %v3812 = vld [vmem:[#allocation12 + $0xb0] sm:$0xff]
    %v3813 = vld [vmem:[#allocation12 + $0xb8] sm:$0xff]
    %v3814 = vld [vmem:[#allocation12 + $0xc0] sm:$0xff]
    %v3815 = vld [vmem:[#allocation12 + $0xc8] sm:$0xff]
    %v3816 = vld [vmem:[#allocation12 + $0xd0] sm:$0xff]
    %v3817 = vld [vmem:[#allocation12 + $0xd8] sm:$0xff]
    %v3818 = vld [vmem:[#allocation12 + $0xe0] sm:$0xff]
    %v3819 = vld [vmem:[#allocation12 + $0xe8] sm:$0xff]
    %v3820 = vld [vmem:[#allocation12 + $0xf0] sm:$0xff]
    %v3821 = vld [vmem:[#allocation12 + $0xf8] sm:$0xff]
    %3822 = vmatprep.subr.mxu0 0.0
    %3823 = vmatpush1.msra.mxu0 %v3806
    %3824 = vmatprep.subr.mxu0 0.0
    %3825 = vmatpush1.msra.mxu0 %v3807
    %3826 = vmatprep.subr.mxu0 0.0
    %3827 = vmatpush1.msra.mxu0 %v3808
    %3828 = vmatprep.subr.mxu0 0.0
    %3829 = vmatpush1.msra.mxu0 %v3809
    %3830 = vmatprep.subr.mxu0 0.0
    %3831 = vmatpush1.msra.mxu0 %v3810
    %3832 = vmatprep.subr.mxu0 0.0
    %3833 = vmatpush1.msra.mxu0 %v3811
    %3834 = vmatprep.subr.mxu0 0.0
    %3835 = vmatpush1.msra.mxu0 %v3812
    %3836 = vmatprep.subr.mxu0 0.0
    %3837 = vmatpush1.msra.mxu0 %v3813
    %3838 = vmatprep.subr.mxu0 0.0
    %3839 = vmatpush1.msra.mxu0 %v3814
    %3840 = vmatprep.subr.mxu0 0.0
    %3841 = vmatpush1.msra.mxu0 %v3815
    %3842 = vmatprep.subr.mxu0 0.0
    %3843 = vmatpush1.msra.mxu0 %v3816
    %3844 = vmatprep.subr.mxu0 0.0
    %3845 = vmatpush1.msra.mxu0 %v3817
    %3846 = vmatprep.subr.mxu0 0.0
    %3847 = vmatpush1.msra.mxu0 %v3818
    %3848 = vmatprep.subr.mxu0 0.0
    %3849 = vmatpush1.msra.mxu0 %v3819
    %3850 = vmatprep.subr.mxu0 0.0
    %3851 = vmatpush1.msra.mxu0 %v3820
    %3852 = vmatprep.subr.mxu0 0.0
    %3853 = vmatpush1.msra.mxu0 %v3821
    %3854 = vmatprep.subr.mxu0 0.0
    %3855 = vmatpush1.msra.mxu0 0.0
    %3856 = vmatprep.subr.mxu0 0.0
    %3857 = vmatpush1.msra.mxu0 0.0
    %3858 = vmatprep.subr.mxu0 0.0
    %3859 = vmatpush1.msra.mxu0 0.0
    %3860 = vmatprep.subr.mxu0 0.0
    %3861 = vmatpush1.msra.mxu0 0.0
    %3862 = vmatprep.subr.mxu0 0.0
    %3863 = vmatpush1.msra.mxu0 0.0
    %3864 = vmatprep.subr.mxu0 0.0
    %3865 = vmatpush1.msra.mxu0 0.0
    %3866 = vmatprep.subr.mxu0 0.0
    %3867 = vmatpush1.msra.mxu0 0.0
    %3868 = vmatprep.subr.mxu0 0.0
    %3869 = vmatpush1.msra.mxu0 0.0
    %3870 = vmatprep.subr.mxu0 0.0
    %3871 = vmatpush1.msra.mxu0 0.0
    %3872 = vmatprep.subr.mxu0 0.0
    %3873 = vmatpush1.msra.mxu0 0.0
    %3874 = vmatprep.subr.mxu0 0.0
    %3875 = vmatpush1.msra.mxu0 0.0
    %3876 = vmatprep.subr.mxu0 0.0
    %3877 = vmatpush1.msra.mxu0 0.0
    %3878 = vmatprep.subr.mxu0 0.0
    %3879 = vmatpush1.msra.mxu0 0.0
    %3880 = vmatprep.subr.mxu0 0.0
    %3881 = vmatpush1.msra.mxu0 0.0
    %3882 = vmatprep.subr.mxu0 0.0
    %3883 = vmatpush1.msra.mxu0 0.0
    %3884 = vmatprep.subr.mxu0 0.0
    %3885 = vmatpush1.msra.mxu0 0.0
    %3886 = vmatprep.mubr.f32.mxu0 0.0
    %3887 = vmatmul.mubr.f32.gmra.mrb[0].mxu0 %v3780
    %v3888 = vpop.f32.mrb[0].mxu0
    %v3889 = vadd.f32 0.0, %v3888
    %v3890 = vpop.f32.mrb[0].mxu0
    %3891 = vmatprep.mubr.f32.mxu0 0.0
    %3892 = vmatmul.mubr.f32.gmra.mrb[0].mxu0 %v3783
    %v3893 = vpop.f32.mrb[0].mxu0
    %v3894 = vadd.f32 0.0, %v3893
    %v3895 = vpop.f32.mrb[0].mxu0
    %3896 = vmatprep.mubr.f32.mxu0 0.0
    %3897 = vmatmul.mubr.f32.gmra.mrb[0].mxu0 %v3786
    %v3898 = vpop.f32.mrb[0].mxu0
    %v3899 = vadd.f32 0.0, %v3898
    %v3900 = vpop.f32.mrb[0].mxu0
    %3901 = vmatprep.mubr.f32.mxu0 0.0
    %3902 = vmatmul.mubr.f32.gmra.mrb[0].mxu0 %v3789
    %v3903 = vpop.f32.mrb[0].mxu0
    %v3904 = vadd.f32 0.0, %v3903
    %v3905 = vpop.f32.mrb[0].mxu0
    %3906 = vdwg.mxu0
    %3907 = vmatprep.subr.mxu0 0.0
    %3908 = vmatpush1.msra.mxu0 %v3790
    %3909 = vmatprep.subr.mxu0 0.0
    %3910 = vmatpush1.msra.mxu0 %v3791
    %3911 = vmatprep.subr.mxu0 0.0
    %3912 = vmatpush1.msra.mxu0 %v3792
    %3913 = vmatprep.subr.mxu0 0.0
    %3914 = vmatpush1.msra.mxu0 %v3793
    %3915 = vmatprep.subr.mxu0 0.0
    %3916 = vmatpush1.msra.mxu0 %v3794
    %3917 = vmatprep.subr.mxu0 0.0
    %3918 = vmatpush1.msra.mxu0 %v3795
    %3919 = vmatprep.subr.mxu0 0.0
    %3920 = vmatpush1.msra.mxu0 %v3796
    %3921 = vmatprep.subr.mxu0 0.0
    %3922 = vmatpush1.msra.mxu0 %v3797
    %3923 = vmatprep.subr.mxu0 0.0
    %3924 = vmatpush1.msra.mxu0 %v3798
    %3925 = vmatprep.subr.mxu0 0.0
    %3926 = vmatpush1.msra.mxu0 %v3799
    %3927 = vmatprep.subr.mxu0 0.0
    %3928 = vmatpush1.msra.mxu0 %v3800
    %3929 = vmatprep.subr.mxu0 0.0
    %3930 = vmatpush1.msra.mxu0 %v3801
    %3931 = vmatprep.subr.mxu0 0.0
    %3932 = vmatpush1.msra.mxu0 %v3802
    %3933 = vmatprep.subr.mxu0 0.0
    %3934 = vmatpush1.msra.mxu0 %v3803
    %3935 = vmatprep.subr.mxu0 0.0
    %3936 = vmatpush1.msra.mxu0 %v3804
    %3937 = vmatprep.subr.mxu0 0.0
    %3938 = vmatpush1.msra.mxu0 %v3805
    %3939 = vmatprep.subr.mxu0 0.0
    %3940 = vmatpush1.msra.mxu0 0.0
    %3941 = vmatprep.subr.mxu0 0.0
    %3942 = vmatpush1.msra.mxu0 0.0
    %3943 = vmatprep.subr.mxu0 0.0
    %3944 = vmatpush1.msra.mxu0 0.0
    %3945 = vmatprep.subr.mxu0 0.0
    %3946 = vmatpush1.msra.mxu0 0.0
    %3947 = vmatprep.subr.mxu0 0.0
    %3948 = vmatpush1.msra.mxu0 0.0
    %3949 = vmatprep.subr.mxu0 0.0
    %3950 = vmatpush1.msra.mxu0 0.0
    %3951 = vmatprep.subr.mxu0 0.0
    %3952 = vmatpush1.msra.mxu0 0.0
    %3953 = vmatprep.subr.mxu0 0.0
    %3954 = vmatpush1.msra.mxu0 0.0
    %3955 = vmatprep.subr.mxu0 0.0
    %3956 = vmatpush1.msra.mxu0 0.0
    %3957 = vmatprep.subr.mxu0 0.0
    %3958 = vmatpush1.msra.mxu0 0.0
    %3959 = vmatprep.subr.mxu0 0.0
    %3960 = vmatpush1.msra.mxu0 0.0
    %3961 = vmatprep.subr.mxu0 0.0
    %3962 = vmatpush1.msra.mxu0 0.0
    %3963 = vmatprep.subr.mxu0 0.0
    %3964 = vmatpush1.msra.mxu0 0.0
    %3965 = vmatprep.subr.mxu0 0.0
    %3966 = vmatpush1.msra.mxu0 0.0
    %3967 = vmatprep.subr.mxu0 0.0
    %3968 = vmatpush1.msra.mxu0 0.0
    %3969 = vmatprep.subr.mxu0 0.0
    %3970 = vmatpush1.msra.mxu0 0.0
    %3971 = vmatprep.mubr.f32.mxu0 0.0
    %3972 = vmatmul.mubr.f32.gmra.mrb[0].mxu0 0.0
    %v3973 = vpop.f32.mrb[0].mxu0
    %v3974 = vadd.f32 %v3889, %v3973
    %v3975 = vpop.f32.mrb[0].mxu0
    %3976 = vmatprep.mubr.f32.mxu0 0.0
    %3977 = vmatmul.mubr.f32.gmra.mrb[0].mxu0 %v3780
    %v3978 = vpop.f32.mrb[0].mxu0
    %v3979 = vadd.f32 %v3894, %v3978
    %v3980 = vpop.f32.mrb[0].mxu0
    %3981 = vmatprep.mubr.f32.mxu0 0.0
    %3982 = vmatmul.mubr.f32.gmra.mrb[0].mxu0 %v3783
    %v3983 = vpop.f32.mrb[0].mxu0
    %v3984 = vadd.f32 %v3899, %v3983
    %v3985 = vpop.f32.mrb[0].mxu0
    %3986 = vmatprep.mubr.f32.mxu0 0.0
    %3987 = vmatmul.mubr.f32.gmra.mrb[0].mxu0 %v3786
    %v3988 = vpop.f32.mrb[0].mxu0
    %v3989 = vadd.f32 %v3904, %v3988
    %v3990 = vpop.f32.mrb[0].mxu0
    %3991 = vdwg.mxu0
    %v3992 = vld [vmem:[#allocation12 + $0x100] sm:$0xff]
    %v3993 = vld [vmem:[#allocation12 + $0x108] sm:$0xff]
    %v3994 = vld [vmem:[#allocation12 + $0x110] sm:$0xff]
    %v3995 = vld [vmem:[#allocation12 + $0x118] sm:$0xff]
    %v3996 = vld [vmem:[#allocation12 + $0x120] sm:$0xff]
    %v3997 = vld [vmem:[#allocation12 + $0x128] sm:$0xff]
    %v3998 = vld [vmem:[#allocation12 + $0x130] sm:$0xff]
    %v3999 = vld [vmem:[#allocation12 + $0x138] sm:$0xff]
    %v4000 = vld [vmem:[#allocation12 + $0x140] sm:$0xff]
    %v4001 = vld [vmem:[#allocation12 + $0x148] sm:$0xff]
    %v4002 = vld [vmem:[#allocation12 + $0x150] sm:$0xff]
    %v4003 = vld [vmem:[#allocation12 + $0x158] sm:$0xff]
    %v4004 = vld [vmem:[#allocation12 + $0x160] sm:$0xff]
    %v4005 = vld [vmem:[#allocation12 + $0x168] sm:$0xff]
    %v4006 = vld [vmem:[#allocation12 + $0x170] sm:$0xff]
    %v4007 = vld [vmem:[#allocation12 + $0x178] sm:$0xff]
    %4008 = vmatprep.subr.mxu0 0.0
    %4009 = vmatpush1.msra.mxu0 %v3992
    %4010 = vmatprep.subr.mxu0 0.0
    %4011 = vmatpush1.msra.mxu0 %v3993
    %4012 = vmatprep.subr.mxu0 0.0
    %4013 = vmatpush1.msra.mxu0 %v3994
    %4014 = vmatprep.subr.mxu0 0.0
    %4015 = vmatpush1.msra.mxu0 %v3995
    %4016 = vmatprep.subr.mxu0 0.0
    %4017 = vmatpush1.msra.mxu0 %v3996
    %4018 = vmatprep.subr.mxu0 0.0
    %4019 = vmatpush1.msra.mxu0 %v3997
    %4020 = vmatprep.subr.mxu0 0.0
    %4021 = vmatpush1.msra.mxu0 %v3998
    %4022 = vmatprep.subr.mxu0 0.0
    %4023 = vmatpush1.msra.mxu0 %v3999
    %4024 = vmatprep.subr.mxu0 0.0
    %4025 = vmatpush1.msra.mxu0 %v4000
    %4026 = vmatprep.subr.mxu0 0.0
    %4027 = vmatpush1.msra.mxu0 %v4001
    %4028 = vmatprep.subr.mxu0 0.0
    %4029 = vmatpush1.msra.mxu0 %v4002
    %4030 = vmatprep.subr.mxu0 0.0
    %4031 = vmatpush1.msra.mxu0 %v4003
    %4032 = vmatprep.subr.mxu0 0.0
    %4033 = vmatpush1.msra.mxu0 %v4004
    %4034 = vmatprep.subr.mxu0 0.0
    %4035 = vmatpush1.msra.mxu0 %v4005
    %4036 = vmatprep.subr.mxu0 0.0
    %4037 = vmatpush1.msra.mxu0 %v4006
    %4038 = vmatprep.subr.mxu0 0.0
    %4039 = vmatpush1.msra.mxu0 %v4007
    %4040 = vmatprep.subr.mxu0 0.0
    %4041 = vmatpush1.msra.mxu0 0.0
    %4042 = vmatprep.subr.mxu0 0.0
    %4043 = vmatpush1.msra.mxu0 0.0
    %4044 = vmatprep.subr.mxu0 0.0
    %4045 = vmatpush1.msra.mxu0 0.0
    %4046 = vmatprep.subr.mxu0 0.0
    %4047 = vmatpush1.msra.mxu0 0.0
    %4048 = vmatprep.subr.mxu0 0.0
    %4049 = vmatpush1.msra.mxu0 0.0
    %4050 = vmatprep.subr.mxu0 0.0
    %4051 = vmatpush1.msra.mxu0 0.0
    %4052 = vmatprep.subr.mxu0 0.0
    %4053 = vmatpush1.msra.mxu0 0.0
    %4054 = vmatprep.subr.mxu0 0.0
    %4055 = vmatpush1.msra.mxu0 0.0
    %4056 = vmatprep.subr.mxu0 0.0
    %4057 = vmatpush1.msra.mxu0 0.0
    %4058 = vmatprep.subr.mxu0 0.0
    %4059 = vmatpush1.msra.mxu0 0.0
    %4060 = vmatprep.subr.mxu0 0.0
    %4061 = vmatpush1.msra.mxu0 0.0
    %4062 = vmatprep.subr.mxu0 0.0
    %4063 = vmatpush1.msra.mxu0 0.0
    %4064 = vmatprep.subr.mxu0 0.0
    %4065 = vmatpush1.msra.mxu0 0.0
    %4066 = vmatprep.subr.mxu0 0.0
    %4067 = vmatpush1.msra.mxu0 0.0
    %4068 = vmatprep.subr.mxu0 0.0
    %4069 = vmatpush1.msra.mxu0 0.0
    %4070 = vmatprep.subr.mxu0 0.0
    %4071 = vmatpush1.msra.mxu0 0.0
    %4072 = vmatprep.mubr.f32.mxu0 0.0
    %4073 = vmatmul.mubr.f32.gmra.mrb[0].mxu0 %v3783
    %v4074 = vpop.f32.mrb[0].mxu0
    %v4075 = vadd.f32 0.0, %v4074
    %v4076 = vpop.f32.mrb[0].mxu0
    %4077 = vmatprep.mubr.f32.mxu0 0.0
    %4078 = vmatmul.mubr.f32.gmra.mrb[0].mxu0 %v3786
    %v4079 = vpop.f32.mrb[0].mxu0
    %v4080 = vadd.f32 0.0, %v4079
    %v4081 = vpop.f32.mrb[0].mxu0
    %4082 = vmatprep.mubr.f32.mxu0 0.0
    %4083 = vmatmul.mubr.f32.gmra.mrb[0].mxu0 %v3789
    %v4084 = vpop.f32.mrb[0].mxu0
    %v4085 = vadd.f32 0.0, %v4084
    %v4086 = vpop.f32.mrb[0].mxu0
    %4087 = vmatprep.mubr.f32.mxu0 0.0
    %4088 = vmatmul.mubr.f32.gmra.mrb[0].mxu0 0.0
    %v4089 = vpop.f32.mrb[0].mxu0
    %v4090 = vadd.f32 0.0, %v4089
    %v4091 = vpop.f32.mrb[0].mxu0
    %4092 = vdwg.mxu0
    %v4093 = vadd.f32 %v3974, %v4075
    %v4094 = vadd.f32 %v3979, %v4080
    %v4095 = vadd.f32 %v3984, %v4085
    %v4096 = vadd.f32 %v3989, %v4090
    %v4097 = vld [vmem:[#allocation13] sm:$0x1]
    %v4099 = vlaneseq
    %v4100 = vshrl.u32 %v4099, 7
    %v4101 = vsub.s32 0, %v4100
    %v4102 = vrot.slane %v4097, %v4101
    %v4104 = vmul.f32 %v4093, %v4102
    %v4105 = vmul.f32 %v4094, %v4102
    %v4106 = vmul.f32 %v4095, %v4102
    %v4107 = vmul.f32 %v4096, %v4102
    %v4108 = vld [vmem:[#allocation15] sm:$0x1]
    %v4110 = vlaneseq
    %v4111 = vshrl.u32 %v4110, 7
    %v4112 = vsub.s32 0, %v4111
    %v4113 = vrot.slane %v4108, %v4112
    %v4115 = vadd.f32 %v4104, %v4113
    %v4116 = vadd.f32 %v4105, %v4113
    %v4117 = vadd.f32 %v4106, %v4113
    %v4118 = vadd.f32 %v4107, %v4113
    %v4119 = vmax.f32 %v4115, 0.0
    %v4120 = vmax.f32 %v4116, 0.0
    %v4121 = vmax.f32 %v4117, 0.0
    %v4122 = vmax.f32 %v4118, 0.0
    %v4123 = vadd.f32 %v4119, %v4120
    %v4124 = vadd.f32 %v4123, %v4121
    %v4125 = vadd.f32 %v4124, %v4122
    %v4126 = vld [vmem:[#allocation16] sm:$0x1]
    %v4127 = vlaneseq
    %v4128 = vshrl.u32 %v4127, 7
    %v4129 = vsub.s32 0, %v4128
    %v4130 = vrot.slane %v4126, %v4129
    %v4131 = vmul.f32 %v4125, %v4130
    %4132 = vadd.xlane.f32.xlu0 %v4131
    %v4133 = vpop.xlane.xlu0 %4132
    %v4134 = vld [vmem:[#allocation16 + $0x1] sm:$0x1]
    %v4135 = vlaneseq
    %v4136 = vshrl.u32 %v4135, 7
    %v4137 = vsub.s32 0, %v4136
    %v4138 = vrot.slane %v4134, %v4137
    %v4139 = vmul.f32 %v4125, %v4138
    %4140 = vadd.xlane.f32.xlu0 %v4139
    %v4141 = vpop.xlane.xlu0 %4140
    %vm4142 = vcmask 7168
    %v4143 = vsel %vm4142, %v4133, %v4141
    %v4144 = vld [vmem:[#allocation18] sm:$0x1]
    %v4146 = vlaneseq
    %v4147 = vshrl.u32 %v4146, 7
    %v4148 = vsub.s32 0, %v4147
    %v4149 = vrot.slane %v4144, %v4148
    %v4151 = vadd.f32 %v4143, %v4149
    %vm4152 = vcmask 15360
    %v4153 = vsel %vm4152, %v4151, -inf
    %4154 = vmax.xlane.f32.xlu0 %v4153
    %v4155 = vpop.xlane.xlu0 %4154
    %v4156 = vsub.f32 %v4151, %v4155
    %v4157 = vmul.f32 %v4156, 1.442695
    %v4158 = vpow.pop %v4157
    %v4159 = vsel %vm4152, %v4158, 0.0
    %4160 = vadd.xlane.f32.xlu0 %v4159
    %v4161 = vpop.xlane.xlu0 %4160
    %v4162 = vrcp.pop %v4161
    %v4163 = vmul.f32 %v4158, %v4162
    %4164 = vst.msk [vmem:[%s12] sm:$0xff] %vm4152, %v4163
    // Predicated region
    $region94: #{net_forward.1} parent=1 // pred_check
      _
    $region95: #{net_forward.1} parent=1 // pred_check_branch
      %4166 = sbr.rel (0) target = $region97
    $region96: #{net_forward.1} parent=1 // pred_region
      _
    $region97: #{net_forward.1} parent=1 // pred_fallthru
      _
    // Predicated region
    $region98: #{net_forward.1} parent=1 // pred_check
      _
    $region99: #{net_forward.1} parent=1 // pred_check_branch
      %4168 = sbr.rel (0) target = $region101
    $region100: #{net_forward.1} parent=1 // pred_region
      _
    $region101: #{net_forward.1} parent=1 // pred_fallthru
      _
    %4169 = vsyncpa [#allocation3], 1
    %4170 = vsyncpa [#allocation5], 1
    %4171 = vsyncpa [#allocation8], 1
    %4172 = vsyncpa [#allocation11], 1
    %4173 = vsyncpa [#allocation14], 1
    %4174 = vsyncpa [#allocation17], 1

</llo_original>
